<compile_context>
chip_gen: v7x
topology: tpu7x:2x2x1
jax: 0.10.0
libtpu: 0.0.40
codegen_flags: <defaults>
</compile_context>

<pallas_src>
import jax
import jax.numpy as jnp
from jax.experimental import pallas as pl
from jax.experimental.pallas import tpu as pltpu

LANE = 128


def _round_up(x, m):
    return (x + m - 1) // m * m


def _pad2d(a, rows, cols):
    return jnp.pad(a, ((0, rows - a.shape[0]), (0, cols - a.shape[1])))


def _vmem_budget_bytes():
    """~3/4 of per-core VMEM: ~48 MiB on v7x (64 MiB/TC), ~96 MiB on v5e/v6e."""
    cap = 64 * 1024 * 1024  # conservative default = v7x per-TensorCore capacity
    try:
        info = pltpu.get_tpu_info()
        cap = int(getattr(info, "vmem_capacity_bytes", cap) or cap)
    except Exception:
        pass
    return cap * 3 // 4


def _row_norm(a_bf16):
    """rsqrt(max(rowsum(A), 1)) as an (rows, 1) f32 column.

    Row-sum runs on the MXU via a ones-dot (exact for 0/1 A with f32
    accumulation); avoids an f32 copy of the (rows, N) slab and keeps VPU/XLU
    slots free while the kernel is DMA-bound.
    """
    ones = jnp.ones((a_bf16.shape[1], 1), dtype=jnp.bfloat16)
    deg = jnp.dot(a_bf16, ones, preferred_element_type=jnp.float32)
    return jax.lax.rsqrt(jnp.maximum(deg, 1.0))


# ---------------------------------------------------------------------------
# Fused path: whole problem resident in VMEM, A read from HBM exactly once.
def fused_kernel(a_ref, x_ref, w1_ref, b1_ref, w2_ref, b2_ref, o_ref):
    a = a_ref[...].astype(jnp.bfloat16)                           # int8 -> bf16 once
    norm = _row_norm(a)                                           # (N, 1) f32
    xw = jnp.dot(x_ref[...].astype(jnp.bfloat16), w1_ref[...],    # bf16 MXU
                 preferred_element_type=jnp.float32)              # (N, H)
    y1 = (norm * xw).astype(jnp.bfloat16)                         # col-scaled operand
    h = jnp.maximum(
        norm * jnp.dot(a, y1, preferred_element_type=jnp.float32) + b1_ref[...],
        0.0)                                                      # layer-1 + relu
    y2 = (norm * jnp.dot(h.astype(jnp.bfloat16), w2_ref[...],
                         preferred_element_type=jnp.float32)).astype(jnp.bfloat16)
    o_ref[...] = (norm * jnp.dot(a, y2, preferred_element_type=jnp.float32)
                  + b2_ref[...])


# ---------------------------------------------------------------------------
# Tiled path (graphs too large for the fused path): three row-tiled passes.
def prep_kernel(a_ref, x_ref, w1_ref, y1_ref):
    # y1_i = norm_i * (x_i @ W1)
    a = a_ref[...].astype(jnp.bfloat16)
    norm = _row_norm(a)
    xw = jnp.dot(x_ref[...].astype(jnp.bfloat16), w1_ref[...],
                 preferred_element_type=jnp.float32)
    y1_ref[...] = (norm * xw).astype(y1_ref.dtype)


def mid_kernel(a_ref, y1_ref, w2_ref, b1_ref, y2_ref):
    # h_i = relu(norm_i * (A_i @ y1) + b1);  y2_i = norm_i * (h_i @ W2)
    a = a_ref[...].astype(jnp.bfloat16)
    norm = _row_norm(a)
    agg = jnp.dot(a, y1_ref[...], preferred_element_type=jnp.float32)
    h = jnp.maximum(norm * agg + b1_ref[...], 0.0)
    y2 = jnp.dot(h.astype(jnp.bfloat16), w2_ref[...],
                 preferred_element_type=jnp.float32)
    y2_ref[...] = (norm * y2).astype(y2_ref.dtype)


def out_kernel(a_ref, y2_ref, b2_ref, o_ref):
    # out_i = norm_i * (A_i @ y2) + b2
    a = a_ref[...].astype(jnp.bfloat16)
    norm = _row_norm(a)
    agg = jnp.dot(a, y2_ref[...], preferred_element_type=jnp.float32)
    o_ref[...] = norm * agg + b2_ref[...]


# ---------------------------------------------------------------------------
# VMEM sizing helpers (conservative: count double-buffered inputs + in-kernel casts).
def _fused_bytes(n_pad, h_pad, c_pad, f_pad):
    a = 2 * n_pad * n_pad                       # int8 A block (double-buffered)
    a_cast = 2 * n_pad * n_pad                  # in-kernel bf16 copy
    x = 2 * n_pad * f_pad * 4
    acts = 10 * n_pad * max(h_pad, c_pad) * 4   # xw/agg/h/y1/y2/out, generous
    weights = 2 * (f_pad * h_pad + h_pad * c_pad)
    return a + a_cast + x + acts + weights


def _tiled_step_bytes(tm, n_pad, h_pad, c_pad, f_pad):
    a_stream = 2 * tm * n_pad                   # int8 A row slab (double-buffered)
    a_cast = 2 * tm * n_pad                     # in-kernel bf16 copy of the slab
    resident = 2 * n_pad * max(h_pad, c_pad)    # resident y1 / y2 (bf16)
    tiles = 2 * tm * (f_pad * 4 + max(h_pad, c_pad) * 4)
    weights = 2 * (f_pad * h_pad + h_pad * c_pad)
    return a_stream + a_cast + resident + tiles + weights


def _pick_tiles(n, h_pad, c_pad, f_pad, budget):
    tm = 256
    # Keep >= ~8 grid steps on small graphs so the A DMA pipelines and both
    # TensorCores get work (instead of one un-pipelined step per core).
    while tm > 32 and _round_up(n, max(tm, LANE)) // tm < 8:
        tm //= 2
    # Shrink the row tile until the per-step working set fits the VMEM budget.
    while tm > 32 and _tiled_step_bytes(tm, _round_up(n, max(tm, LANE)),
                                        h_pad, c_pad, f_pad) > budget:
        tm //= 2
    # TODO(synk): for very large N (>~30k on v7x / 64 MiB) the (tm, N) A slab plus
    # the resident y1 no longer fit even at tm=32; add a second (reduction) grid
    # axis over A columns with an f32 accumulator scratch instead of shrinking tm.
    n_pad = _round_up(n, max(tm, LANE))
    return tm, n_pad


# ---------------------------------------------------------------------------
def gcn_forward(adj, x, w1, b1, w2, b2, *, force_tiled=False):
    n = adj.shape[0]
    in_feats = x.shape[1]
    h_feats = w1.shape[1]
    num_classes = w2.shape[1]

    f_pad = _round_up(in_feats, LANE)
    h_pad = _round_up(h_feats, LANE)
    c_pad = _round_up(num_classes, LANE)
    budget = _vmem_budget_bytes()

    # Lane-dense zero padding of feature/hidden/class dims (exact: pads stay zero).
    w1p = _pad2d(w1, f_pad, h_pad).astype(jnp.bfloat16)
    b1p = _pad2d(jnp.reshape(b1, (1, -1)), 1, h_pad).astype(jnp.float32)
    w2p = _pad2d(w2, h_pad, c_pad).astype(jnp.bfloat16)
    b2p = _pad2d(jnp.reshape(b2, (1, -1)), 1, c_pad).astype(jnp.float32)

    use_fused = (not force_tiled) and (
        _fused_bytes(_round_up(n, LANE), h_pad, c_pad, f_pad) <= budget)

    if use_fused:
        n_pad = _round_up(n, LANE)
    else:
        tm, n_pad = _pick_tiles(n, h_pad, c_pad, f_pad, budget)

    # Row/column zero-padding of the graph is exact: padded rows get deg=0 -> norm=1
    # and contribute nothing to real rows (their A columns are zero); padded output
    # rows are sliced off below.  A is 0/1 -> int8 is exact and halves HBM traffic.
    a_i8 = _pad2d(adj, n_pad, n_pad).astype(jnp.int8)
    xp = _pad2d(x, n_pad, f_pad).astype(jnp.float32)

    if use_fused:
        def full(shape):
            return pl.BlockSpec(shape, lambda i: (0, 0))

        out = pl.pallas_call(
            fused_kernel,
            out_shape=jax.ShapeDtypeStruct((n_pad, c_pad), jnp.float32),
            grid=(1,),
            in_specs=[full((n_pad, n_pad)), full((n_pad, f_pad)),
                      full((f_pad, h_pad)), full((1, h_pad)),
                      full((h_pad, c_pad)), full((1, c_pad))],
            out_specs=full((n_pad, c_pad)),
            compiler_params=pltpu.CompilerParams(
                dimension_semantics=("arbitrary",),
                vmem_limit_bytes=budget),
        )(a_i8, xp, w1p, b1p, w2p, b2p)
        return out[:n, :num_classes]

    # ---- tiled fallback for graphs that don't fit VMEM ----
    grid = (n_pad // tm,)
    par = pltpu.CompilerParams(dimension_semantics=("parallel",),
                               vmem_limit_bytes=budget)

    def row_tile(cols):
        return pl.BlockSpec((tm, cols), lambda i: (i, 0))

    def full(shape):
        return pl.BlockSpec(shape, lambda i: (0, 0))

    y1 = pl.pallas_call(
        prep_kernel,
        out_shape=jax.ShapeDtypeStruct((n_pad, h_pad), jnp.bfloat16),
        grid=grid,
        in_specs=[row_tile(n_pad), row_tile(f_pad), full((f_pad, h_pad))],
        out_specs=row_tile(h_pad),
        compiler_params=par,
    )(a_i8, xp, w1p)

    y2 = pl.pallas_call(
        mid_kernel,
        out_shape=jax.ShapeDtypeStruct((n_pad, c_pad), jnp.bfloat16),
        grid=grid,
        in_specs=[row_tile(n_pad), full((n_pad, h_pad)), full((h_pad, c_pad)),
                  full((1, h_pad))],
        out_specs=row_tile(c_pad),
        compiler_params=par,
    )(a_i8, y1, w2p, b1p)

    out = pl.pallas_call(
        out_kernel,
        out_shape=jax.ShapeDtypeStruct((n_pad, c_pad), jnp.float32),
        grid=grid,
        in_specs=[row_tile(n_pad), full((n_pad, c_pad)), full((1, c_pad))],
        out_specs=row_tile(c_pad),
        compiler_params=par,
    )(a_i8, y2, b2p)

    return out[:n, :num_classes]


# ---------------------------------------------------------------------------
def glorot(key, shape):
    fan_in, fan_out = shape
    limit = jnp.sqrt(6.0 / (fan_in + fan_out))
    return jax.random.uniform(key, shape, jnp.float32, -limit, limit)


def reference(adj, x, w1, b1, w2, b2):
    deg = jnp.maximum(adj.sum(axis=1, keepdims=True), 1.0)
    norm = jax.lax.rsqrt(deg)
    a_hat = adj * norm * norm.T
    h = jnp.maximum(a_hat @ (x @ w1) + b1, 0.0)
    return a_hat @ (h @ w2) + b2


if __name__ == "__main__":
    N = 512          # graph nodes
    in_feats = 32
    h_feats = 32
    num_classes = 8

    key = jax.random.PRNGKey(0)
    k_adj, k_x, k_w1, k_b1, k_w2, k_b2 = jax.random.split(key, 6)

    # Deterministic random symmetric 0/1 adjacency with self-loops.
    a = jax.random.bernoulli(k_adj, p=0.05, shape=(N, N)).astype(jnp.float32)
    adj = jnp.clip(a + a.T + jnp.eye(N, dtype=jnp.float32), 0.0, 1.0)

    x = jax.random.normal(k_x, (N, in_feats), jnp.float32)
    w1 = glorot(k_w1, (in_feats, h_feats))
    b1 = 0.1 * jax.random.normal(k_b1, (1, h_feats), jnp.float32)
    w2 = glorot(k_w2, (h_feats, num_classes))
    b2 = 0.1 * jax.random.normal(k_b2, (1, num_classes), jnp.float32)

    # Fused single-kernel path (auto-selected at this size).
    out_fused = jax.block_until_ready(gcn_forward(adj, x, w1, b1, w2, b2))
    # Tiled fallback path, exercised explicitly.
    out_tiled = jax.block_until_ready(
        gcn_forward(adj, x, w1, b1, w2, b2, force_tiled=True))

    ref = reference(adj, x, w1, b1, w2, b2)
    for out in (out_fused, out_tiled):
        assert out.shape == (N, num_classes)
        # bf16 MXU operands with f32 accumulation -> relative-to-max tolerance.
        rel_err = jnp.max(jnp.abs(out - ref)) / (jnp.max(jnp.abs(ref)) + 1e-8)
        assert rel_err < 5e-2, float(rel_err)

    print("KERNEL_OK")
</pallas_src>

<mosaic_0001>
module attributes {stable_mosaic.version = 11 : i64} {
  func.func @fused_kernel(%arg0: i32, %arg1: memref<512x512xi8, #tpu.memory_space<vmem>>, %arg2: memref<512x128xf32, #tpu.memory_space<vmem>>, %arg3: memref<128x128xbf16, #tpu.memory_space<vmem>>, %arg4: memref<1x128xf32, #tpu.memory_space<vmem>>, %arg5: memref<128x128xbf16, #tpu.memory_space<vmem>>, %arg6: memref<1x128xf32, #tpu.memory_space<vmem>>, %arg7: memref<512x128xf32, #tpu.memory_space<vmem>>) attributes {dimension_semantics = [#tpu.dimension_semantics<arbitrary>], iteration_bounds = array<i64: 1>, scalar_prefetch = 0 : i64, scratch_operands = 0 : i64, tpu.core_type = #tpu.core_type<tc>, window_params = [{pipeline_mode = #tpu.pipeline_mode<synchronous>, transform_indices = @transform_0, window_bounds = array<i64: 512, 512>}, {pipeline_mode = #tpu.pipeline_mode<synchronous>, transform_indices = @transform_1, window_bounds = array<i64: 512, 128>}, {pipeline_mode = #tpu.pipeline_mode<synchronous>, transform_indices = @transform_2, window_bounds = array<i64: 128, 128>}, {pipeline_mode = #tpu.pipeline_mode<synchronous>, transform_indices = @transform_3, window_bounds = array<i64: 1, 128>}, {pipeline_mode = #tpu.pipeline_mode<synchronous>, transform_indices = @transform_4, window_bounds = array<i64: 128, 128>}, {pipeline_mode = #tpu.pipeline_mode<synchronous>, transform_indices = @transform_5, window_bounds = array<i64: 1, 128>}, {pipeline_mode = #tpu.pipeline_mode<synchronous>, transform_indices = @transform_6, window_bounds = array<i64: 512, 128>}]} {
    %c0 = arith.constant 0 : index
    %c0_0 = arith.constant 0 : index
    %0 = vector.load %arg1[%c0, %c0_0] : memref<512x512xi8, #tpu.memory_space<vmem>>, vector<512x512xi8>
    %1 = arith.sitofp %0 : vector<512x512xi8> to vector<512x512xbf16>
    %cst = arith.constant 1.000000e+00 : bf16
    %2 = vector.broadcast %cst : bf16 to vector<512x1xbf16>
    %cst_1 = arith.constant dense<0.000000e+00> : vector<512x1xf32>
    %3 = tpu.matmul %1, %2, %cst_1 {dimension_numbers = #tpu.dot_dimension_numbers<[1], [0], [0], [1], [0, 0, 1, 1], [], []>} : vector<512x512xbf16>, vector<512x1xbf16>, vector<512x1xf32> -> vector<512x1xf32>
    %cst_2 = arith.constant 1.000000e+00 : f32
    %4 = vector.broadcast %cst_2 : f32 to vector<512x1xf32>
    %5 = arith.maximumf %3, %4 : vector<512x1xf32>
    %6 = math.rsqrt %5 : vector<512x1xf32>
    %c0_3 = arith.constant 0 : index
    %c0_4 = arith.constant 0 : index
    %7 = vector.load %arg2[%c0_3, %c0_4] : memref<512x128xf32, #tpu.memory_space<vmem>>, vector<512x128xf32>
    %8 = arith.truncf %7 : vector<512x128xf32> to vector<512x128xbf16>
    %c0_5 = arith.constant 0 : index
    %c0_6 = arith.constant 0 : index
    %9 = vector.load %arg3[%c0_5, %c0_6] : memref<128x128xbf16, #tpu.memory_space<vmem>>, vector<128x128xbf16>
    %cst_7 = arith.constant dense<0.000000e+00> : vector<512x128xf32>
    %10 = tpu.matmul %8, %9, %cst_7 {dimension_numbers = #tpu.dot_dimension_numbers<[1], [0], [0], [1], [0, 0, 1, 1], [], []>} : vector<512x128xbf16>, vector<128x128xbf16>, vector<512x128xf32> -> vector<512x128xf32>
    %11 = vector.broadcast %6 : vector<512x1xf32> to vector<512x128xf32>
    %12 = arith.mulf %11, %10 : vector<512x128xf32>
    %13 = arith.truncf %12 : vector<512x128xf32> to vector<512x128xbf16>
    %cst_8 = arith.constant dense<0.000000e+00> : vector<512x128xf32>
    %14 = tpu.matmul %1, %13, %cst_8 {dimension_numbers = #tpu.dot_dimension_numbers<[1], [0], [0], [1], [0, 0, 1, 1], [], []>} : vector<512x512xbf16>, vector<512x128xbf16>, vector<512x128xf32> -> vector<512x128xf32>
    %15 = vector.broadcast %6 : vector<512x1xf32> to vector<512x128xf32>
    %16 = arith.mulf %15, %14 : vector<512x128xf32>
    %c0_9 = arith.constant 0 : index
    %c0_10 = arith.constant 0 : index
    %17 = vector.load %arg4[%c0_9, %c0_10] : memref<1x128xf32, #tpu.memory_space<vmem>>, vector<1x128xf32>
    %18 = vector.broadcast %17 : vector<1x128xf32> to vector<512x128xf32>
    %19 = arith.addf %16, %18 : vector<512x128xf32>
    %cst_11 = arith.constant 0.000000e+00 : f32
    %20 = vector.broadcast %cst_11 : f32 to vector<512x128xf32>
    %21 = arith.maximumf %19, %20 : vector<512x128xf32>
    %22 = arith.truncf %21 : vector<512x128xf32> to vector<512x128xbf16>
    %c0_12 = arith.constant 0 : index
    %c0_13 = arith.constant 0 : index
    %23 = vector.load %arg5[%c0_12, %c0_13] : memref<128x128xbf16, #tpu.memory_space<vmem>>, vector<128x128xbf16>
    %cst_14 = arith.constant dense<0.000000e+00> : vector<512x128xf32>
    %24 = tpu.matmul %22, %23, %cst_14 {dimension_numbers = #tpu.dot_dimension_numbers<[1], [0], [0], [1], [0, 0, 1, 1], [], []>} : vector<512x128xbf16>, vector<128x128xbf16>, vector<512x128xf32> -> vector<512x128xf32>
    %25 = vector.broadcast %6 : vector<512x1xf32> to vector<512x128xf32>
    %26 = arith.mulf %25, %24 : vector<512x128xf32>
    %27 = arith.truncf %26 : vector<512x128xf32> to vector<512x128xbf16>
    %cst_15 = arith.constant dense<0.000000e+00> : vector<512x128xf32>
    %28 = tpu.matmul %1, %27, %cst_15 {dimension_numbers = #tpu.dot_dimension_numbers<[1], [0], [0], [1], [0, 0, 1, 1], [], []>} : vector<512x512xbf16>, vector<512x128xbf16>, vector<512x128xf32> -> vector<512x128xf32>
    %29 = vector.broadcast %6 : vector<512x1xf32> to vector<512x128xf32>
    %30 = arith.mulf %29, %28 : vector<512x128xf32>
    %c0_16 = arith.constant 0 : index
    %c0_17 = arith.constant 0 : index
    %31 = vector.load %arg6[%c0_16, %c0_17] : memref<1x128xf32, #tpu.memory_space<vmem>>, vector<1x128xf32>
    %32 = vector.broadcast %31 : vector<1x128xf32> to vector<512x128xf32>
    %33 = arith.addf %30, %32 : vector<512x128xf32>
    %c0_18 = arith.constant 0 : index
    %c0_19 = arith.constant 0 : index
    %34 = vector.load %arg7[%c0_18, %c0_19] : memref<512x128xf32, #tpu.memory_space<vmem>>, vector<512x128xf32>
    tpu.vector_store %arg7[%c0_18, %c0_19], %33 {strides = array<i32>} : memref<512x128xf32, #tpu.memory_space<vmem>>, vector<512x128xf32>,
    return
  }
  func.func @transform_0(%arg0: i32) -> (i32, i32) {
    %c0_i32 = arith.constant 0 : i32
    %c0_i32_0 = arith.constant 0 : i32
    %c0_i32_1 = arith.constant 0 : i32
    return %c0_i32, %c0_i32_0 : i32, i32
  }
  func.func @transform_1(%arg0: i32) -> (i32, i32) {
    %c0_i32 = arith.constant 0 : i32
    %c0_i32_0 = arith.constant 0 : i32
    %c0_i32_1 = arith.constant 0 : i32
    return %c0_i32, %c0_i32_0 : i32, i32
  }
  func.func @transform_2(%arg0: i32) -> (i32, i32) {
    %c0_i32 = arith.constant 0 : i32
    %c0_i32_0 = arith.constant 0 : i32
    %c0_i32_1 = arith.constant 0 : i32
    return %c0_i32, %c0_i32_0 : i32, i32
  }
  func.func @transform_3(%arg0: i32) -> (i32, i32) {
    %c0_i32 = arith.constant 0 : i32
    %c0_i32_0 = arith.constant 0 : i32
    %c0_i32_1 = arith.constant 0 : i32
    return %c0_i32, %c0_i32_0 : i32, i32
  }
  func.func @transform_4(%arg0: i32) -> (i32, i32) {
    %c0_i32 = arith.constant 0 : i32
    %c0_i32_0 = arith.constant 0 : i32
    %c0_i32_1 = arith.constant 0 : i32
    return %c0_i32, %c0_i32_0 : i32, i32
  }
  func.func @transform_5(%arg0: i32) -> (i32, i32) {
    %c0_i32 = arith.constant 0 : i32
    %c0_i32_0 = arith.constant 0 : i32
    %c0_i32_1 = arith.constant 0 : i32
    return %c0_i32, %c0_i32_0 : i32, i32
  }
  func.func @transform_6(%arg0: i32) -> (i32, i32) {
    %c0_i32 = arith.constant 0 : i32
    %c0_i32_0 = arith.constant 0 : i32
    %c0_i32_1 = arith.constant 0 : i32
    return %c0_i32, %c0_i32_0 : i32, i32
  }
}

</mosaic_0001>

<llo_original>
// kernel: tpu_custom_call.1
$region0: #{tpu_custom_call.1}
  #allocation0 [shape = 'u32[]', space=smem, size = 0x4, offset = 0x4, fixed_abs, tag = 'smem constant byte address 0x4 - core index']
  #allocation1 [shape = 'u32[144,128]{1,0:T(1,128)}', space=vmem, size = 0x12000, scoped, tag = 'internal scratch']
  %s0 = inlined_call_operand.hbm [shape: s8[512,512], index: 0, kind: input, shape index: {}]
  %s1 = inlined_call_operand.hbm [shape: f32[512,128], index: 1, kind: input, shape index: {}]
  %s2 = inlined_call_operand.hbm [shape: bf16[128,128], index: 2, kind: input, shape index: {}]
  %s3 = inlined_call_operand.vmem [shape: f32[1,128], index: 3, kind: input, shape index: {}]
  %s4 = inlined_call_operand.hbm [shape: bf16[128,128], index: 4, kind: input, shape index: {}]
  %s5 = inlined_call_operand.vmem [shape: f32[1,128], index: 5, kind: input, shape index: {}]
  %s6 = inlined_call_operand.hbm [shape: f32[512,128], index: 6, kind: output, shape index: {}]
  %s7 = sld [smem:[#allocation0]]
  $region50: #{tpu_custom_call.1} parent=0
    _
  %s9 = ssub.s32 1, %s7
  %s10 = scalar_select 0, %s9, %s7
  $region1: #{tpu_custom_call.1} parent=0
    #allocation2 [shape = 'u8[262144]{0}', space=vmem, size = 0x40000, scoped, tag = 'input window, operand 0, single buffered']
    #allocation3 [shape = 's32[1]{0}', space=sflag, size = 0x4, scoped, tag = 'scoped memory for tpu_custom_call.1']
    #allocation4 [shape = 's32[1]{0}', space=sflag, size = 0x4, scoped, tag = 'scoped memory for tpu_custom_call.1']
    #allocation5 [shape = 'u8[262144]{0}', space=vmem, size = 0x40000, scoped, tag = 'input window, operand 1, single buffered']
    #allocation6 [shape = 's32[1]{0}', space=sflag, size = 0x4, scoped, tag = 'scoped memory for tpu_custom_call.1']
    #allocation7 [shape = 'u8[32768]{0}', space=vmem, size = 0x8000, scoped, tag = 'input window, operand 2, single buffered']
    #allocation8 [shape = 'u8[32768]{0}', space=vmem, size = 0x8000, scoped, tag = 'input window, operand 4, single buffered']
    #allocation9 [shape = 's32[1]{0}', space=sflag, size = 0x4, scoped, tag = 'scoped memory for tpu_custom_call.1']
    #allocation10 [shape = 'u8[262144]{0}', space=vmem, size = 0x40000, scoped, tag = 'output window, operand 0, single buffered']
    %11 = vsyncpa [#allocation3], 0
    %12 = vsyncpa [#allocation6], 0
    %13 = vsyncpa [#allocation9], 0
    %14 = vsyncpa [#allocation4], 0
    // Predicated region
    $region2: #{tpu_custom_call.1} parent=1 // pred_check
      _
    $region3: #{tpu_custom_call.1} parent=1 // pred_check_branch
      %16 = sbr.rel (0) target = $region5
    $region4: #{tpu_custom_call.1} parent=1 // pred_region
      %s18 = ssub.s32 8192, 8192
      %19 = vsyncadd [#allocation3], %s18
      %s20 = sshll.u32 [#allocation2], 4
      %s21 = int_to_ptr.vmem [resolvable:$true] %s20
      %26 = dma.hbm_to_vmem [thread:$0]  %s0, 8192, %s21, [#allocation3], 512, 512, 32
    $region5: #{tpu_custom_call.1} parent=1 // pred_fallthru
      _
    // Predicated region
    $region6: #{tpu_custom_call.1} parent=1 // pred_check
      _
    $region7: #{tpu_custom_call.1} parent=1 // pred_check_branch
      %28 = sbr.rel (0) target = $region9
    $region8: #{tpu_custom_call.1} parent=1 // pred_region
      %s30 = ssub.s32 8192, 8192
      %31 = vsyncadd [#allocation6], %s30
      %s32 = sshll.u32 [#allocation5], 4
      %s33 = int_to_ptr.vmem [resolvable:$true] %s32
      %38 = dma.hbm_to_vmem [thread:$0]  %s1, 8192, %s33, [#allocation6], 128, 128, 8
    $region9: #{tpu_custom_call.1} parent=1 // pred_fallthru
      _
    // Predicated region
    $region10: #{tpu_custom_call.1} parent=1 // pred_check
      _
    $region11: #{tpu_custom_call.1} parent=1 // pred_check_branch
      %40 = sbr.rel (0) target = $region13
    $region12: #{tpu_custom_call.1} parent=1 // pred_region
      %s42 = ssub.s32 1024, 1024
      %43 = vsyncadd [#allocation6], %s42
      %s44 = sshll.u32 [#allocation7], 4
      %s45 = int_to_ptr.vmem [resolvable:$true] %s44
      %50 = dma.hbm_to_vmem [thread:$0]  %s2, 1024, %s45, [#allocation6], 64, 64, 4
    $region13: #{tpu_custom_call.1} parent=1 // pred_fallthru
      _
    // Predicated region
    $region14: #{tpu_custom_call.1} parent=1 // pred_check
      _
    $region15: #{tpu_custom_call.1} parent=1 // pred_check_branch
      %52 = sbr.rel (0) target = $region17
    $region16: #{tpu_custom_call.1} parent=1 // pred_region
      _
    $region17: #{tpu_custom_call.1} parent=1 // pred_fallthru
      _
    // Predicated region
    $region18: #{tpu_custom_call.1} parent=1 // pred_check
      _
    $region19: #{tpu_custom_call.1} parent=1 // pred_check_branch
      %54 = sbr.rel (0) target = $region21
    $region20: #{tpu_custom_call.1} parent=1 // pred_region
      %s56 = ssub.s32 1024, 1024
      %57 = vsyncadd [#allocation9], %s56
      %s58 = sshll.u32 [#allocation8], 4
      %s59 = int_to_ptr.vmem [resolvable:$true] %s58
      %64 = dma.hbm_to_vmem [thread:$0]  %s4, 1024, %s59, [#allocation9], 64, 64, 4
    $region21: #{tpu_custom_call.1} parent=1 // pred_fallthru
      _
    // Predicated region
    $region22: #{tpu_custom_call.1} parent=1 // pred_check
      _
    $region23: #{tpu_custom_call.1} parent=1 // pred_check_branch
      %66 = sbr.rel (0) target = $region25
    $region24: #{tpu_custom_call.1} parent=1 // pred_region
      _
    $region25: #{tpu_custom_call.1} parent=1 // pred_fallthru
      _
    // Predicated region
    $region26: #{tpu_custom_call.1} parent=1 // pred_check
      _
    $region27: #{tpu_custom_call.1} parent=1 // pred_check_branch
      %68 = sbr.rel (0) target = $region29
    $region28: #{tpu_custom_call.1} parent=1 // pred_region
      %69 = dma.done [#allocation3], 8192
    $region29: #{tpu_custom_call.1} parent=1 // pred_fallthru
      _
    // Predicated region
    $region30: #{tpu_custom_call.1} parent=1 // pred_check
      _
    $region31: #{tpu_custom_call.1} parent=1 // pred_check_branch
      %71 = sbr.rel (0) target = $region33
    $region32: #{tpu_custom_call.1} parent=1 // pred_region
      %72 = dma.done [#allocation6], 8192
    $region33: #{tpu_custom_call.1} parent=1 // pred_fallthru
      _
    // Predicated region
    $region34: #{tpu_custom_call.1} parent=1 // pred_check
      _
    $region35: #{tpu_custom_call.1} parent=1 // pred_check_branch
      %74 = sbr.rel (0) target = $region37
    $region36: #{tpu_custom_call.1} parent=1 // pred_region
      %75 = dma.done [#allocation6], 1024
    $region37: #{tpu_custom_call.1} parent=1 // pred_fallthru
      _
    // Predicated region
    $region38: #{tpu_custom_call.1} parent=1 // pred_check
      _
    $region39: #{tpu_custom_call.1} parent=1 // pred_check_branch
      %77 = sbr.rel (0) target = $region41
    $region40: #{tpu_custom_call.1} parent=1 // pred_region
      %78 = dma.done [#allocation9], 1024
    $region41: #{tpu_custom_call.1} parent=1 // pred_fallthru
      _
    %v81 = vld [vmem:[#allocation2] sm:$0xff]
    %v82 = vld [vmem:[#allocation2 + $0x8] sm:$0xff]
    %v83 = vld [vmem:[#allocation2 + $0x10] sm:$0xff]
    %v84 = vld [vmem:[#allocation2 + $0x18] sm:$0xff]
    %v85 = vld [vmem:[#allocation2 + $0x20] sm:$0xff]
    %v86 = vld [vmem:[#allocation2 + $0x28] sm:$0xff]
    %v87 = vld [vmem:[#allocation2 + $0x30] sm:$0xff]
    %v88 = vld [vmem:[#allocation2 + $0x38] sm:$0xff]
    %v89 = vld [vmem:[#allocation2 + $0x40] sm:$0xff]
    %v90 = vld [vmem:[#allocation2 + $0x48] sm:$0xff]
    %v91 = vld [vmem:[#allocation2 + $0x50] sm:$0xff]
    %v92 = vld [vmem:[#allocation2 + $0x58] sm:$0xff]
    %v93 = vld [vmem:[#allocation2 + $0x60] sm:$0xff]
    %v94 = vld [vmem:[#allocation2 + $0x68] sm:$0xff]
    %v95 = vld [vmem:[#allocation2 + $0x70] sm:$0xff]
    %v96 = vld [vmem:[#allocation2 + $0x78] sm:$0xff]
    %v97 = vld [vmem:[#allocation2 + $0x80] sm:$0xff]
    %v98 = vld [vmem:[#allocation2 + $0x88] sm:$0xff]
    %v99 = vld [vmem:[#allocation2 + $0x90] sm:$0xff]
    %v100 = vld [vmem:[#allocation2 + $0x98] sm:$0xff]
    %v101 = vld [vmem:[#allocation2 + $0xa0] sm:$0xff]
    %v102 = vld [vmem:[#allocation2 + $0xa8] sm:$0xff]
    %v103 = vld [vmem:[#allocation2 + $0xb0] sm:$0xff]
    %v104 = vld [vmem:[#allocation2 + $0xb8] sm:$0xff]
    %v105 = vld [vmem:[#allocation2 + $0xc0] sm:$0xff]
    %v106 = vld [vmem:[#allocation2 + $0xc8] sm:$0xff]
    %v107 = vld [vmem:[#allocation2 + $0xd0] sm:$0xff]
    %v108 = vld [vmem:[#allocation2 + $0xd8] sm:$0xff]
    %v109 = vld [vmem:[#allocation2 + $0xe0] sm:$0xff]
    %v110 = vld [vmem:[#allocation2 + $0xe8] sm:$0xff]
    %v111 = vld [vmem:[#allocation2 + $0xf0] sm:$0xff]
    %v112 = vld [vmem:[#allocation2 + $0xf8] sm:$0xff]
    %v113 = vld [vmem:[#allocation2 + $0x100] sm:$0xff]
    %v114 = vld [vmem:[#allocation2 + $0x108] sm:$0xff]
    %v115 = vld [vmem:[#allocation2 + $0x110] sm:$0xff]
    %v116 = vld [vmem:[#allocation2 + $0x118] sm:$0xff]
    %v117 = vld [vmem:[#allocation2 + $0x120] sm:$0xff]
    %v118 = vld [vmem:[#allocation2 + $0x128] sm:$0xff]
    %v119 = vld [vmem:[#allocation2 + $0x130] sm:$0xff]
    %v120 = vld [vmem:[#allocation2 + $0x138] sm:$0xff]
    %v121 = vld [vmem:[#allocation2 + $0x140] sm:$0xff]
    %v122 = vld [vmem:[#allocation2 + $0x148] sm:$0xff]
    %v123 = vld [vmem:[#allocation2 + $0x150] sm:$0xff]
    %v124 = vld [vmem:[#allocation2 + $0x158] sm:$0xff]
    %v125 = vld [vmem:[#allocation2 + $0x160] sm:$0xff]
    %v126 = vld [vmem:[#allocation2 + $0x168] sm:$0xff]
    %v127 = vld [vmem:[#allocation2 + $0x170] sm:$0xff]
    %v128 = vld [vmem:[#allocation2 + $0x178] sm:$0xff]
    %v129 = vld [vmem:[#allocation2 + $0x180] sm:$0xff]
    %v130 = vld [vmem:[#allocation2 + $0x188] sm:$0xff]
    %v131 = vld [vmem:[#allocation2 + $0x190] sm:$0xff]
    %v132 = vld [vmem:[#allocation2 + $0x198] sm:$0xff]
    %v133 = vld [vmem:[#allocation2 + $0x1a0] sm:$0xff]
    %v134 = vld [vmem:[#allocation2 + $0x1a8] sm:$0xff]
    %v135 = vld [vmem:[#allocation2 + $0x1b0] sm:$0xff]
    %v136 = vld [vmem:[#allocation2 + $0x1b8] sm:$0xff]
    %v137 = vld [vmem:[#allocation2 + $0x1c0] sm:$0xff]
    %v138 = vld [vmem:[#allocation2 + $0x1c8] sm:$0xff]
    %v139 = vld [vmem:[#allocation2 + $0x1d0] sm:$0xff]
    %v140 = vld [vmem:[#allocation2 + $0x1d8] sm:$0xff]
    %v141 = vld [vmem:[#allocation2 + $0x1e0] sm:$0xff]
    %v142 = vld [vmem:[#allocation2 + $0x1e8] sm:$0xff]
    %v143 = vld [vmem:[#allocation2 + $0x1f0] sm:$0xff]
    %v144 = vld [vmem:[#allocation2 + $0x1f8] sm:$0xff]
    %v145 = vunpack.c.l.s8.bf16 %v81
    %v146 = vunpack.c.l.s8.bf16 %v82
    %v147 = vunpack.c.l.s8.bf16 %v83
    %v148 = vunpack.c.l.s8.bf16 %v84
    %v149 = vunpack.c.h.s8.bf16 %v81
    %v150 = vunpack.c.h.s8.bf16 %v82
    %v151 = vunpack.c.h.s8.bf16 %v83
    %v152 = vunpack.c.h.s8.bf16 %v84
    %v153 = vunpack.c.l.s8.bf16 %v85
    %v154 = vunpack.c.l.s8.bf16 %v86
    %v155 = vunpack.c.l.s8.bf16 %v87
    %v156 = vunpack.c.l.s8.bf16 %v88
    %v157 = vunpack.c.h.s8.bf16 %v85
    %v158 = vunpack.c.h.s8.bf16 %v86
    %v159 = vunpack.c.h.s8.bf16 %v87
    %v160 = vunpack.c.h.s8.bf16 %v88
    %v161 = vunpack.c.l.s8.bf16 %v89
    %v162 = vunpack.c.l.s8.bf16 %v90
    %v163 = vunpack.c.l.s8.bf16 %v91
    %v164 = vunpack.c.l.s8.bf16 %v92
    %v165 = vunpack.c.h.s8.bf16 %v89
    %v166 = vunpack.c.h.s8.bf16 %v90
    %v167 = vunpack.c.h.s8.bf16 %v91
    %v168 = vunpack.c.h.s8.bf16 %v92
    %v169 = vunpack.c.l.s8.bf16 %v93
    %v170 = vunpack.c.l.s8.bf16 %v94
    %v171 = vunpack.c.l.s8.bf16 %v95
    %v172 = vunpack.c.l.s8.bf16 %v96
    %v173 = vunpack.c.h.s8.bf16 %v93
    %v174 = vunpack.c.h.s8.bf16 %v94
    %v175 = vunpack.c.h.s8.bf16 %v95
    %v176 = vunpack.c.h.s8.bf16 %v96
    %v177 = vunpack.c.l.s8.bf16 %v97
    %v178 = vunpack.c.l.s8.bf16 %v98
    %v179 = vunpack.c.l.s8.bf16 %v99
    %v180 = vunpack.c.l.s8.bf16 %v100
    %v181 = vunpack.c.h.s8.bf16 %v97
    %v182 = vunpack.c.h.s8.bf16 %v98
    %v183 = vunpack.c.h.s8.bf16 %v99
    %v184 = vunpack.c.h.s8.bf16 %v100
    %v185 = vunpack.c.l.s8.bf16 %v101
    %v186 = vunpack.c.l.s8.bf16 %v102
    %v187 = vunpack.c.l.s8.bf16 %v103
    %v188 = vunpack.c.l.s8.bf16 %v104
    %v189 = vunpack.c.h.s8.bf16 %v101
    %v190 = vunpack.c.h.s8.bf16 %v102
    %v191 = vunpack.c.h.s8.bf16 %v103
    %v192 = vunpack.c.h.s8.bf16 %v104
    %v193 = vunpack.c.l.s8.bf16 %v105
    %v194 = vunpack.c.l.s8.bf16 %v106
    %v195 = vunpack.c.l.s8.bf16 %v107
    %v196 = vunpack.c.l.s8.bf16 %v108
    %v197 = vunpack.c.h.s8.bf16 %v105
    %v198 = vunpack.c.h.s8.bf16 %v106
    %v199 = vunpack.c.h.s8.bf16 %v107
    %v200 = vunpack.c.h.s8.bf16 %v108
    %v201 = vunpack.c.l.s8.bf16 %v109
    %v202 = vunpack.c.l.s8.bf16 %v110
    %v203 = vunpack.c.l.s8.bf16 %v111
    %v204 = vunpack.c.l.s8.bf16 %v112
    %v205 = vunpack.c.h.s8.bf16 %v109
    %v206 = vunpack.c.h.s8.bf16 %v110
    %v207 = vunpack.c.h.s8.bf16 %v111
    %v208 = vunpack.c.h.s8.bf16 %v112
    %v209 = vunpack.c.l.s8.bf16 %v113
    %v210 = vunpack.c.l.s8.bf16 %v114
    %v211 = vunpack.c.l.s8.bf16 %v115
    %v212 = vunpack.c.l.s8.bf16 %v116
    %v213 = vunpack.c.h.s8.bf16 %v113
    %v214 = vunpack.c.h.s8.bf16 %v114
    %v215 = vunpack.c.h.s8.bf16 %v115
    %v216 = vunpack.c.h.s8.bf16 %v116
    %v217 = vunpack.c.l.s8.bf16 %v117
    %v218 = vunpack.c.l.s8.bf16 %v118
    %v219 = vunpack.c.l.s8.bf16 %v119
    %v220 = vunpack.c.l.s8.bf16 %v120
    %v221 = vunpack.c.h.s8.bf16 %v117
    %v222 = vunpack.c.h.s8.bf16 %v118
    %v223 = vunpack.c.h.s8.bf16 %v119
    %v224 = vunpack.c.h.s8.bf16 %v120
    %v225 = vunpack.c.l.s8.bf16 %v121
    %v226 = vunpack.c.l.s8.bf16 %v122
    %v227 = vunpack.c.l.s8.bf16 %v123
    %v228 = vunpack.c.l.s8.bf16 %v124
    %v229 = vunpack.c.h.s8.bf16 %v121
    %v230 = vunpack.c.h.s8.bf16 %v122
    %v231 = vunpack.c.h.s8.bf16 %v123
    %v232 = vunpack.c.h.s8.bf16 %v124
    %v233 = vunpack.c.l.s8.bf16 %v125
    %v234 = vunpack.c.l.s8.bf16 %v126
    %v235 = vunpack.c.l.s8.bf16 %v127
    %v236 = vunpack.c.l.s8.bf16 %v128
    %v237 = vunpack.c.h.s8.bf16 %v125
    %v238 = vunpack.c.h.s8.bf16 %v126
    %v239 = vunpack.c.h.s8.bf16 %v127
    %v240 = vunpack.c.h.s8.bf16 %v128
    %v241 = vunpack.c.l.s8.bf16 %v129
    %v242 = vunpack.c.l.s8.bf16 %v130
    %v243 = vunpack.c.l.s8.bf16 %v131
    %v244 = vunpack.c.l.s8.bf16 %v132
    %v245 = vunpack.c.h.s8.bf16 %v129
    %v246 = vunpack.c.h.s8.bf16 %v130
    %v247 = vunpack.c.h.s8.bf16 %v131
    %v248 = vunpack.c.h.s8.bf16 %v132
    %v249 = vunpack.c.l.s8.bf16 %v133
    %v250 = vunpack.c.l.s8.bf16 %v134
    %v251 = vunpack.c.l.s8.bf16 %v135
    %v252 = vunpack.c.l.s8.bf16 %v136
    %v253 = vunpack.c.h.s8.bf16 %v133
    %v254 = vunpack.c.h.s8.bf16 %v134
    %v255 = vunpack.c.h.s8.bf16 %v135
    %v256 = vunpack.c.h.s8.bf16 %v136
    %v257 = vunpack.c.l.s8.bf16 %v137
    %v258 = vunpack.c.l.s8.bf16 %v138
    %v259 = vunpack.c.l.s8.bf16 %v139
    %v260 = vunpack.c.l.s8.bf16 %v140
    %v261 = vunpack.c.h.s8.bf16 %v137
    %v262 = vunpack.c.h.s8.bf16 %v138
    %v263 = vunpack.c.h.s8.bf16 %v139
    %v264 = vunpack.c.h.s8.bf16 %v140
    %v265 = vunpack.c.l.s8.bf16 %v141
    %v266 = vunpack.c.l.s8.bf16 %v142
    %v267 = vunpack.c.l.s8.bf16 %v143
    %v268 = vunpack.c.l.s8.bf16 %v144
    %v269 = vunpack.c.h.s8.bf16 %v141
    %v270 = vunpack.c.h.s8.bf16 %v142
    %v271 = vunpack.c.h.s8.bf16 %v143
    %v272 = vunpack.c.h.s8.bf16 %v144
    %273 = vmatprep.subr.bf16.mxu0 0
    %274 = vmatpush1.bf16.msra.mxu0 1065369472
    %275 = vmatprep.subr.bf16.mxu0 0
    %276 = vmatpush1.bf16.msra.mxu0 1065369472
    %277 = vmatprep.subr.bf16.mxu0 0
    %278 = vmatpush1.bf16.msra.mxu0 1065369472
    %279 = vmatprep.subr.bf16.mxu0 0
    %280 = vmatpush1.bf16.msra.mxu0 1065369472
    %281 = vmatprep.subr.bf16.mxu0 0
    %282 = vmatpush1.bf16.msra.mxu0 1065369472
    %283 = vmatprep.subr.bf16.mxu0 0
    %284 = vmatpush1.bf16.msra.mxu0 1065369472
    %285 = vmatprep.subr.bf16.mxu0 0
    %286 = vmatpush1.bf16.msra.mxu0 1065369472
    %287 = vmatprep.subr.bf16.mxu0 0
    %288 = vmatpush1.bf16.msra.mxu0 1065369472
    %289 = vmatprep.subr.bf16.mxu0 0
    %290 = vmatpush1.bf16.msra.mxu0 1065369472
    %291 = vmatprep.subr.bf16.mxu0 0
    %292 = vmatpush1.bf16.msra.mxu0 1065369472
    %293 = vmatprep.subr.bf16.mxu0 0
    %294 = vmatpush1.bf16.msra.mxu0 1065369472
    %295 = vmatprep.subr.bf16.mxu0 0
    %296 = vmatpush1.bf16.msra.mxu0 1065369472
    %297 = vmatprep.subr.bf16.mxu0 0
    %298 = vmatpush1.bf16.msra.mxu0 1065369472
    %299 = vmatprep.subr.bf16.mxu0 0
    %300 = vmatpush1.bf16.msra.mxu0 1065369472
    %301 = vmatprep.subr.bf16.mxu0 0
    %302 = vmatpush1.bf16.msra.mxu0 1065369472
    %303 = vmatprep.subr.bf16.mxu0 0
    %304 = vmatpush1.bf16.msra.mxu0 1065369472
    %305 = vmatprep.mubr.bf16.mxu0 %v146
    %306 = vmatmul.mubr.bf16.gmra.mrb[0].mxu0 %v145
    %v307 = vpop.f32.mrb[0].mxu0
    %v308 = vadd.f32 0.0, %v307
    %v309 = vpop.f32.mrb[0].mxu0
    %v310 = vpop.f32.mrb[0].mxu0
    %v311 = vadd.f32 0.0, %v310
    %v312 = vpop.f32.mrb[0].mxu0
    %313 = vmatprep.mubr.bf16.mxu0 %v150
    %314 = vmatmul.mubr.bf16.gmra.mrb[0].mxu0 %v149
    %v315 = vpop.f32.mrb[0].mxu0
    %v316 = vadd.f32 0.0, %v315
    %v317 = vpop.f32.mrb[0].mxu0
    %v318 = vpop.f32.mrb[0].mxu0
    %v319 = vadd.f32 0.0, %v318
    %v320 = vpop.f32.mrb[0].mxu0
    %321 = vmatprep.mubr.bf16.mxu0 %v154
    %322 = vmatmul.mubr.bf16.gmra.mrb[0].mxu0 %v153
    %v323 = vpop.f32.mrb[0].mxu0
    %v324 = vadd.f32 0.0, %v323
    %v325 = vpop.f32.mrb[0].mxu0
    %v326 = vpop.f32.mrb[0].mxu0
    %v327 = vadd.f32 0.0, %v326
    %v328 = vpop.f32.mrb[0].mxu0
    %329 = vmatprep.mubr.bf16.mxu0 %v158
    %330 = vmatmul.mubr.bf16.gmra.mrb[0].mxu0 %v157
    %v331 = vpop.f32.mrb[0].mxu0
    %v332 = vadd.f32 0.0, %v331
    %v333 = vpop.f32.mrb[0].mxu0
    %v334 = vpop.f32.mrb[0].mxu0
    %v335 = vadd.f32 0.0, %v334
    %v336 = vpop.f32.mrb[0].mxu0
    %337 = vmatprep.mubr.bf16.mxu0 %v162
    %338 = vmatmul.mubr.bf16.gmra.mrb[0].mxu0 %v161
    %v339 = vpop.f32.mrb[0].mxu0
    %v340 = vadd.f32 0.0, %v339
    %v341 = vpop.f32.mrb[0].mxu0
    %v342 = vpop.f32.mrb[0].mxu0
    %v343 = vadd.f32 0.0, %v342
    %v344 = vpop.f32.mrb[0].mxu0
    %345 = vmatprep.mubr.bf16.mxu0 %v166
    %346 = vmatmul.mubr.bf16.gmra.mrb[0].mxu0 %v165
    %v347 = vpop.f32.mrb[0].mxu0
    %v348 = vadd.f32 0.0, %v347
    %v349 = vpop.f32.mrb[0].mxu0
    %v350 = vpop.f32.mrb[0].mxu0
    %v351 = vadd.f32 0.0, %v350
    %v352 = vpop.f32.mrb[0].mxu0
    %353 = vmatprep.mubr.bf16.mxu0 %v170
    %354 = vmatmul.mubr.bf16.gmra.mrb[0].mxu0 %v169
    %v355 = vpop.f32.mrb[0].mxu0
    %v356 = vadd.f32 0.0, %v355
    %v357 = vpop.f32.mrb[0].mxu0
    %v358 = vpop.f32.mrb[0].mxu0
    %v359 = vadd.f32 0.0, %v358
    %v360 = vpop.f32.mrb[0].mxu0
    %361 = vmatprep.mubr.bf16.mxu0 %v174
    %362 = vmatmul.mubr.bf16.gmra.mrb[0].mxu0 %v173
    %v363 = vpop.f32.mrb[0].mxu0
    %v364 = vadd.f32 0.0, %v363
    %v365 = vpop.f32.mrb[0].mxu0
    %v366 = vpop.f32.mrb[0].mxu0
    %v367 = vadd.f32 0.0, %v366
    %v368 = vpop.f32.mrb[0].mxu0
    %369 = vmatprep.mubr.bf16.mxu0 %v178
    %370 = vmatmul.mubr.bf16.gmra.mrb[0].mxu0 %v177
    %v371 = vpop.f32.mrb[0].mxu0
    %v372 = vadd.f32 0.0, %v371
    %v373 = vpop.f32.mrb[0].mxu0
    %v374 = vpop.f32.mrb[0].mxu0
    %v375 = vadd.f32 0.0, %v374
    %v376 = vpop.f32.mrb[0].mxu0
    %377 = vmatprep.mubr.bf16.mxu0 %v182
    %378 = vmatmul.mubr.bf16.gmra.mrb[0].mxu0 %v181
    %v379 = vpop.f32.mrb[0].mxu0
    %v380 = vadd.f32 0.0, %v379
    %v381 = vpop.f32.mrb[0].mxu0
    %v382 = vpop.f32.mrb[0].mxu0
    %v383 = vadd.f32 0.0, %v382
    %v384 = vpop.f32.mrb[0].mxu0
    %385 = vmatprep.mubr.bf16.mxu0 %v186
    %386 = vmatmul.mubr.bf16.gmra.mrb[0].mxu0 %v185
    %v387 = vpop.f32.mrb[0].mxu0
    %v388 = vadd.f32 0.0, %v387
    %v389 = vpop.f32.mrb[0].mxu0
    %v390 = vpop.f32.mrb[0].mxu0
    %v391 = vadd.f32 0.0, %v390
    %v392 = vpop.f32.mrb[0].mxu0
    %393 = vmatprep.mubr.bf16.mxu0 %v190
    %394 = vmatmul.mubr.bf16.gmra.mrb[0].mxu0 %v189
    %v395 = vpop.f32.mrb[0].mxu0
    %v396 = vadd.f32 0.0, %v395
    %v397 = vpop.f32.mrb[0].mxu0
    %v398 = vpop.f32.mrb[0].mxu0
    %v399 = vadd.f32 0.0, %v398
    %v400 = vpop.f32.mrb[0].mxu0
    %401 = vmatprep.mubr.bf16.mxu0 %v194
    %402 = vmatmul.mubr.bf16.gmra.mrb[0].mxu0 %v193
    %v403 = vpop.f32.mrb[0].mxu0
    %v404 = vadd.f32 0.0, %v403
    %v405 = vpop.f32.mrb[0].mxu0
    %v406 = vpop.f32.mrb[0].mxu0
    %v407 = vadd.f32 0.0, %v406
    %v408 = vpop.f32.mrb[0].mxu0
    %409 = vmatprep.mubr.bf16.mxu0 %v198
    %410 = vmatmul.mubr.bf16.gmra.mrb[0].mxu0 %v197
    %v411 = vpop.f32.mrb[0].mxu0
    %v412 = vadd.f32 0.0, %v411
    %v413 = vpop.f32.mrb[0].mxu0
    %v414 = vpop.f32.mrb[0].mxu0
    %v415 = vadd.f32 0.0, %v414
    %v416 = vpop.f32.mrb[0].mxu0
    %417 = vmatprep.mubr.bf16.mxu0 %v202
    %418 = vmatmul.mubr.bf16.gmra.mrb[0].mxu0 %v201
    %v419 = vpop.f32.mrb[0].mxu0
    %v420 = vadd.f32 0.0, %v419
    %v421 = vpop.f32.mrb[0].mxu0
    %v422 = vpop.f32.mrb[0].mxu0
    %v423 = vadd.f32 0.0, %v422
    %v424 = vpop.f32.mrb[0].mxu0
    %425 = vmatprep.mubr.bf16.mxu0 %v206
    %426 = vmatmul.mubr.bf16.gmra.mrb[0].mxu0 %v205
    %v427 = vpop.f32.mrb[0].mxu0
    %v428 = vadd.f32 0.0, %v427
    %v429 = vpop.f32.mrb[0].mxu0
    %v430 = vpop.f32.mrb[0].mxu0
    %v431 = vadd.f32 0.0, %v430
    %v432 = vpop.f32.mrb[0].mxu0
    %433 = vmatprep.mubr.bf16.mxu0 %v210
    %434 = vmatmul.mubr.bf16.gmra.mrb[0].mxu0 %v209
    %v435 = vpop.f32.mrb[0].mxu0
    %v436 = vadd.f32 0.0, %v435
    %v437 = vpop.f32.mrb[0].mxu0
    %v438 = vpop.f32.mrb[0].mxu0
    %v439 = vadd.f32 0.0, %v438
    %v440 = vpop.f32.mrb[0].mxu0
    %441 = vmatprep.mubr.bf16.mxu0 %v214
    %442 = vmatmul.mubr.bf16.gmra.mrb[0].mxu0 %v213
    %v443 = vpop.f32.mrb[0].mxu0
    %v444 = vadd.f32 0.0, %v443
    %v445 = vpop.f32.mrb[0].mxu0
    %v446 = vpop.f32.mrb[0].mxu0
    %v447 = vadd.f32 0.0, %v446
    %v448 = vpop.f32.mrb[0].mxu0
    %449 = vmatprep.mubr.bf16.mxu0 %v218
    %450 = vmatmul.mubr.bf16.gmra.mrb[0].mxu0 %v217
    %v451 = vpop.f32.mrb[0].mxu0
    %v452 = vadd.f32 0.0, %v451
    %v453 = vpop.f32.mrb[0].mxu0
    %v454 = vpop.f32.mrb[0].mxu0
    %v455 = vadd.f32 0.0, %v454
    %v456 = vpop.f32.mrb[0].mxu0
    %457 = vmatprep.mubr.bf16.mxu0 %v222
    %458 = vmatmul.mubr.bf16.gmra.mrb[0].mxu0 %v221
    %v459 = vpop.f32.mrb[0].mxu0
    %v460 = vadd.f32 0.0, %v459
    %v461 = vpop.f32.mrb[0].mxu0
    %v462 = vpop.f32.mrb[0].mxu0
    %v463 = vadd.f32 0.0, %v462
    %v464 = vpop.f32.mrb[0].mxu0
    %465 = vmatprep.mubr.bf16.mxu0 %v226
    %466 = vmatmul.mubr.bf16.gmra.mrb[0].mxu0 %v225
    %v467 = vpop.f32.mrb[0].mxu0
    %v468 = vadd.f32 0.0, %v467
    %v469 = vpop.f32.mrb[0].mxu0
    %v470 = vpop.f32.mrb[0].mxu0
    %v471 = vadd.f32 0.0, %v470
    %v472 = vpop.f32.mrb[0].mxu0
    %473 = vmatprep.mubr.bf16.mxu0 %v230
    %474 = vmatmul.mubr.bf16.gmra.mrb[0].mxu0 %v229
    %v475 = vpop.f32.mrb[0].mxu0
    %v476 = vadd.f32 0.0, %v475
    %v477 = vpop.f32.mrb[0].mxu0
    %v478 = vpop.f32.mrb[0].mxu0
    %v479 = vadd.f32 0.0, %v478
    %v480 = vpop.f32.mrb[0].mxu0
    %481 = vmatprep.mubr.bf16.mxu0 %v234
    %482 = vmatmul.mubr.bf16.gmra.mrb[0].mxu0 %v233
    %v483 = vpop.f32.mrb[0].mxu0
    %v484 = vadd.f32 0.0, %v483
    %v485 = vpop.f32.mrb[0].mxu0
    %v486 = vpop.f32.mrb[0].mxu0
    %v487 = vadd.f32 0.0, %v486
    %v488 = vpop.f32.mrb[0].mxu0
    %489 = vmatprep.mubr.bf16.mxu0 %v238
    %490 = vmatmul.mubr.bf16.gmra.mrb[0].mxu0 %v237
    %v491 = vpop.f32.mrb[0].mxu0
    %v492 = vadd.f32 0.0, %v491
    %v493 = vpop.f32.mrb[0].mxu0
    %v494 = vpop.f32.mrb[0].mxu0
    %v495 = vadd.f32 0.0, %v494
    %v496 = vpop.f32.mrb[0].mxu0
    %497 = vmatprep.mubr.bf16.mxu0 %v242
    %498 = vmatmul.mubr.bf16.gmra.mrb[0].mxu0 %v241
    %v499 = vpop.f32.mrb[0].mxu0
    %v500 = vadd.f32 0.0, %v499
    %v501 = vpop.f32.mrb[0].mxu0
    %v502 = vpop.f32.mrb[0].mxu0
    %v503 = vadd.f32 0.0, %v502
    %v504 = vpop.f32.mrb[0].mxu0
    %505 = vmatprep.mubr.bf16.mxu0 %v246
    %506 = vmatmul.mubr.bf16.gmra.mrb[0].mxu0 %v245
    %v507 = vpop.f32.mrb[0].mxu0
    %v508 = vadd.f32 0.0, %v507
    %v509 = vpop.f32.mrb[0].mxu0
    %v510 = vpop.f32.mrb[0].mxu0
    %v511 = vadd.f32 0.0, %v510
    %v512 = vpop.f32.mrb[0].mxu0
    %513 = vmatprep.mubr.bf16.mxu0 %v250
    %514 = vmatmul.mubr.bf16.gmra.mrb[0].mxu0 %v249
    %v515 = vpop.f32.mrb[0].mxu0
    %v516 = vadd.f32 0.0, %v515
    %v517 = vpop.f32.mrb[0].mxu0
    %v518 = vpop.f32.mrb[0].mxu0
    %v519 = vadd.f32 0.0, %v518
    %v520 = vpop.f32.mrb[0].mxu0
    %521 = vmatprep.mubr.bf16.mxu0 %v254
    %522 = vmatmul.mubr.bf16.gmra.mrb[0].mxu0 %v253
    %v523 = vpop.f32.mrb[0].mxu0
    %v524 = vadd.f32 0.0, %v523
    %v525 = vpop.f32.mrb[0].mxu0
    %v526 = vpop.f32.mrb[0].mxu0
    %v527 = vadd.f32 0.0, %v526
    %v528 = vpop.f32.mrb[0].mxu0
    %529 = vmatprep.mubr.bf16.mxu0 %v258
    %530 = vmatmul.mubr.bf16.gmra.mrb[0].mxu0 %v257
    %v531 = vpop.f32.mrb[0].mxu0
    %v532 = vadd.f32 0.0, %v531
    %v533 = vpop.f32.mrb[0].mxu0
    %v534 = vpop.f32.mrb[0].mxu0
    %v535 = vadd.f32 0.0, %v534
    %v536 = vpop.f32.mrb[0].mxu0
    %537 = vmatprep.mubr.bf16.mxu0 %v262
    %538 = vmatmul.mubr.bf16.gmra.mrb[0].mxu0 %v261
    %v539 = vpop.f32.mrb[0].mxu0
    %v540 = vadd.f32 0.0, %v539
    %v541 = vpop.f32.mrb[0].mxu0
    %v542 = vpop.f32.mrb[0].mxu0
    %v543 = vadd.f32 0.0, %v542
    %v544 = vpop.f32.mrb[0].mxu0
    %545 = vmatprep.mubr.bf16.mxu0 %v266
    %546 = vmatmul.mubr.bf16.gmra.mrb[0].mxu0 %v265
    %v547 = vpop.f32.mrb[0].mxu0
    %v548 = vadd.f32 0.0, %v547
    %v549 = vpop.f32.mrb[0].mxu0
    %v550 = vpop.f32.mrb[0].mxu0
    %v551 = vadd.f32 0.0, %v550
    %v552 = vpop.f32.mrb[0].mxu0
    %553 = vmatprep.mubr.bf16.mxu0 %v270
    %554 = vmatmul.mubr.bf16.gmra.mrb[0].mxu0 %v269
    %v555 = vpop.f32.mrb[0].mxu0
    %v556 = vadd.f32 0.0, %v555
    %v557 = vpop.f32.mrb[0].mxu0
    %v558 = vpop.f32.mrb[0].mxu0
    %v559 = vadd.f32 0.0, %v558
    %v560 = vpop.f32.mrb[0].mxu0
    %561 = vdwg.mxu0
    %562 = vmatprep.subr.bf16.mxu0 0
    %563 = vmatpush1.bf16.msra.mxu0 1065369472
    %564 = vmatprep.subr.bf16.mxu0 0
    %565 = vmatpush1.bf16.msra.mxu0 1065369472
    %566 = vmatprep.subr.bf16.mxu0 0
    %567 = vmatpush1.bf16.msra.mxu0 1065369472
    %568 = vmatprep.subr.bf16.mxu0 0
    %569 = vmatpush1.bf16.msra.mxu0 1065369472
    %570 = vmatprep.subr.bf16.mxu0 0
    %571 = vmatpush1.bf16.msra.mxu0 1065369472
    %572 = vmatprep.subr.bf16.mxu0 0
    %573 = vmatpush1.bf16.msra.mxu0 1065369472
    %574 = vmatprep.subr.bf16.mxu0 0
    %575 = vmatpush1.bf16.msra.mxu0 1065369472
    %576 = vmatprep.subr.bf16.mxu0 0
    %577 = vmatpush1.bf16.msra.mxu0 1065369472
    %578 = vmatprep.subr.bf16.mxu0 0
    %579 = vmatpush1.bf16.msra.mxu0 1065369472
    %580 = vmatprep.subr.bf16.mxu0 0
    %581 = vmatpush1.bf16.msra.mxu0 1065369472
    %582 = vmatprep.subr.bf16.mxu0 0
    %583 = vmatpush1.bf16.msra.mxu0 1065369472
    %584 = vmatprep.subr.bf16.mxu0 0
    %585 = vmatpush1.bf16.msra.mxu0 1065369472
    %586 = vmatprep.subr.bf16.mxu0 0
    %587 = vmatpush1.bf16.msra.mxu0 1065369472
    %588 = vmatprep.subr.bf16.mxu0 0
    %589 = vmatpush1.bf16.msra.mxu0 1065369472
    %590 = vmatprep.subr.bf16.mxu0 0
    %591 = vmatpush1.bf16.msra.mxu0 1065369472
    %592 = vmatprep.subr.bf16.mxu0 0
    %593 = vmatpush1.bf16.msra.mxu0 1065369472
    %594 = vmatprep.mubr.bf16.mxu0 %v148
    %595 = vmatmul.mubr.bf16.gmra.mrb[0].mxu0 %v147
    %v596 = vpop.f32.mrb[0].mxu0
    %v597 = vadd.f32 %v308, %v596
    %v598 = vpop.f32.mrb[0].mxu0
    %v599 = vpop.f32.mrb[0].mxu0
    %v600 = vadd.f32 %v311, %v599
    %v601 = vpop.f32.mrb[0].mxu0
    %602 = vmatprep.mubr.bf16.mxu0 %v152
    %603 = vmatmul.mubr.bf16.gmra.mrb[0].mxu0 %v151
    %v604 = vpop.f32.mrb[0].mxu0
    %v605 = vadd.f32 %v316, %v604
    %v606 = vpop.f32.mrb[0].mxu0
    %v607 = vpop.f32.mrb[0].mxu0
    %v608 = vadd.f32 %v319, %v607
    %v609 = vpop.f32.mrb[0].mxu0
    %610 = vmatprep.mubr.bf16.mxu0 %v156
    %611 = vmatmul.mubr.bf16.gmra.mrb[0].mxu0 %v155
    %v612 = vpop.f32.mrb[0].mxu0
    %v613 = vadd.f32 %v324, %v612
    %v614 = vpop.f32.mrb[0].mxu0
    %v615 = vpop.f32.mrb[0].mxu0
    %v616 = vadd.f32 %v327, %v615
    %v617 = vpop.f32.mrb[0].mxu0
    %618 = vmatprep.mubr.bf16.mxu0 %v160
    %619 = vmatmul.mubr.bf16.gmra.mrb[0].mxu0 %v159
    %v620 = vpop.f32.mrb[0].mxu0
    %v621 = vadd.f32 %v332, %v620
    %v622 = vpop.f32.mrb[0].mxu0
    %v623 = vpop.f32.mrb[0].mxu0
    %v624 = vadd.f32 %v335, %v623
    %v625 = vpop.f32.mrb[0].mxu0
    %626 = vmatprep.mubr.bf16.mxu0 %v164
    %627 = vmatmul.mubr.bf16.gmra.mrb[0].mxu0 %v163
    %v628 = vpop.f32.mrb[0].mxu0
    %v629 = vadd.f32 %v340, %v628
    %v630 = vpop.f32.mrb[0].mxu0
    %v631 = vpop.f32.mrb[0].mxu0
    %v632 = vadd.f32 %v343, %v631
    %v633 = vpop.f32.mrb[0].mxu0
    %634 = vmatprep.mubr.bf16.mxu0 %v168
    %635 = vmatmul.mubr.bf16.gmra.mrb[0].mxu0 %v167
    %v636 = vpop.f32.mrb[0].mxu0
    %v637 = vadd.f32 %v348, %v636
    %v638 = vpop.f32.mrb[0].mxu0
    %v639 = vpop.f32.mrb[0].mxu0
    %v640 = vadd.f32 %v351, %v639
    %v641 = vpop.f32.mrb[0].mxu0
    %642 = vmatprep.mubr.bf16.mxu0 %v172
    %643 = vmatmul.mubr.bf16.gmra.mrb[0].mxu0 %v171
    %v644 = vpop.f32.mrb[0].mxu0
    %v645 = vadd.f32 %v356, %v644
    %v646 = vpop.f32.mrb[0].mxu0
    %v647 = vpop.f32.mrb[0].mxu0
    %v648 = vadd.f32 %v359, %v647
    %v649 = vpop.f32.mrb[0].mxu0
    %650 = vmatprep.mubr.bf16.mxu0 %v176
    %651 = vmatmul.mubr.bf16.gmra.mrb[0].mxu0 %v175
    %v652 = vpop.f32.mrb[0].mxu0
    %v653 = vadd.f32 %v364, %v652
    %v654 = vpop.f32.mrb[0].mxu0
    %v655 = vpop.f32.mrb[0].mxu0
    %v656 = vadd.f32 %v367, %v655
    %v657 = vpop.f32.mrb[0].mxu0
    %658 = vmatprep.mubr.bf16.mxu0 %v180
    %659 = vmatmul.mubr.bf16.gmra.mrb[0].mxu0 %v179
    %v660 = vpop.f32.mrb[0].mxu0
    %v661 = vadd.f32 %v372, %v660
    %v662 = vpop.f32.mrb[0].mxu0
    %v663 = vpop.f32.mrb[0].mxu0
    %v664 = vadd.f32 %v375, %v663
    %v665 = vpop.f32.mrb[0].mxu0
    %666 = vmatprep.mubr.bf16.mxu0 %v184
    %667 = vmatmul.mubr.bf16.gmra.mrb[0].mxu0 %v183
    %v668 = vpop.f32.mrb[0].mxu0
    %v669 = vadd.f32 %v380, %v668
    %v670 = vpop.f32.mrb[0].mxu0
    %v671 = vpop.f32.mrb[0].mxu0
    %v672 = vadd.f32 %v383, %v671
    %v673 = vpop.f32.mrb[0].mxu0
    %674 = vmatprep.mubr.bf16.mxu0 %v188
    %675 = vmatmul.mubr.bf16.gmra.mrb[0].mxu0 %v187
    %v676 = vpop.f32.mrb[0].mxu0
    %v677 = vadd.f32 %v388, %v676
    %v678 = vpop.f32.mrb[0].mxu0
    %v679 = vpop.f32.mrb[0].mxu0
    %v680 = vadd.f32 %v391, %v679
    %v681 = vpop.f32.mrb[0].mxu0
    %682 = vmatprep.mubr.bf16.mxu0 %v192
    %683 = vmatmul.mubr.bf16.gmra.mrb[0].mxu0 %v191
    %v684 = vpop.f32.mrb[0].mxu0
    %v685 = vadd.f32 %v396, %v684
    %v686 = vpop.f32.mrb[0].mxu0
    %v687 = vpop.f32.mrb[0].mxu0
    %v688 = vadd.f32 %v399, %v687
    %v689 = vpop.f32.mrb[0].mxu0
    %690 = vmatprep.mubr.bf16.mxu0 %v196
    %691 = vmatmul.mubr.bf16.gmra.mrb[0].mxu0 %v195
    %v692 = vpop.f32.mrb[0].mxu0
    %v693 = vadd.f32 %v404, %v692
    %v694 = vpop.f32.mrb[0].mxu0
    %v695 = vpop.f32.mrb[0].mxu0
    %v696 = vadd.f32 %v407, %v695
    %v697 = vpop.f32.mrb[0].mxu0
    %698 = vmatprep.mubr.bf16.mxu0 %v200
    %699 = vmatmul.mubr.bf16.gmra.mrb[0].mxu0 %v199
    %v700 = vpop.f32.mrb[0].mxu0
    %v701 = vadd.f32 %v412, %v700
    %v702 = vpop.f32.mrb[0].mxu0
    %v703 = vpop.f32.mrb[0].mxu0
    %v704 = vadd.f32 %v415, %v703
    %v705 = vpop.f32.mrb[0].mxu0
    %706 = vmatprep.mubr.bf16.mxu0 %v204
    %707 = vmatmul.mubr.bf16.gmra.mrb[0].mxu0 %v203
    %v708 = vpop.f32.mrb[0].mxu0
    %v709 = vadd.f32 %v420, %v708
    %v710 = vpop.f32.mrb[0].mxu0
    %v711 = vpop.f32.mrb[0].mxu0
    %v712 = vadd.f32 %v423, %v711
    %v713 = vpop.f32.mrb[0].mxu0
    %714 = vmatprep.mubr.bf16.mxu0 %v208
    %715 = vmatmul.mubr.bf16.gmra.mrb[0].mxu0 %v207
    %v716 = vpop.f32.mrb[0].mxu0
    %v717 = vadd.f32 %v428, %v716
    %v718 = vpop.f32.mrb[0].mxu0
    %v719 = vpop.f32.mrb[0].mxu0
    %v720 = vadd.f32 %v431, %v719
    %v721 = vpop.f32.mrb[0].mxu0
    %722 = vmatprep.mubr.bf16.mxu0 %v212
    %723 = vmatmul.mubr.bf16.gmra.mrb[0].mxu0 %v211
    %v724 = vpop.f32.mrb[0].mxu0
    %v725 = vadd.f32 %v436, %v724
    %v726 = vpop.f32.mrb[0].mxu0
    %v727 = vpop.f32.mrb[0].mxu0
    %v728 = vadd.f32 %v439, %v727
    %v729 = vpop.f32.mrb[0].mxu0
    %730 = vmatprep.mubr.bf16.mxu0 %v216
    %731 = vmatmul.mubr.bf16.gmra.mrb[0].mxu0 %v215
    %v732 = vpop.f32.mrb[0].mxu0
    %v733 = vadd.f32 %v444, %v732
    %v734 = vpop.f32.mrb[0].mxu0
    %v735 = vpop.f32.mrb[0].mxu0
    %v736 = vadd.f32 %v447, %v735
    %v737 = vpop.f32.mrb[0].mxu0
    %738 = vmatprep.mubr.bf16.mxu0 %v220
    %739 = vmatmul.mubr.bf16.gmra.mrb[0].mxu0 %v219
    %v740 = vpop.f32.mrb[0].mxu0
    %v741 = vadd.f32 %v452, %v740
    %v742 = vpop.f32.mrb[0].mxu0
    %v743 = vpop.f32.mrb[0].mxu0
    %v744 = vadd.f32 %v455, %v743
    %v745 = vpop.f32.mrb[0].mxu0
    %746 = vmatprep.mubr.bf16.mxu0 %v224
    %747 = vmatmul.mubr.bf16.gmra.mrb[0].mxu0 %v223
    %v748 = vpop.f32.mrb[0].mxu0
    %v749 = vadd.f32 %v460, %v748
    %v750 = vpop.f32.mrb[0].mxu0
    %v751 = vpop.f32.mrb[0].mxu0
    %v752 = vadd.f32 %v463, %v751
    %v753 = vpop.f32.mrb[0].mxu0
    %754 = vmatprep.mubr.bf16.mxu0 %v228
    %755 = vmatmul.mubr.bf16.gmra.mrb[0].mxu0 %v227
    %v756 = vpop.f32.mrb[0].mxu0
    %v757 = vadd.f32 %v468, %v756
    %v758 = vpop.f32.mrb[0].mxu0
    %v759 = vpop.f32.mrb[0].mxu0
    %v760 = vadd.f32 %v471, %v759
    %v761 = vpop.f32.mrb[0].mxu0
    %762 = vmatprep.mubr.bf16.mxu0 %v232
    %763 = vmatmul.mubr.bf16.gmra.mrb[0].mxu0 %v231
    %v764 = vpop.f32.mrb[0].mxu0
    %v765 = vadd.f32 %v476, %v764
    %v766 = vpop.f32.mrb[0].mxu0
    %v767 = vpop.f32.mrb[0].mxu0
    %v768 = vadd.f32 %v479, %v767
    %v769 = vpop.f32.mrb[0].mxu0
    %770 = vmatprep.mubr.bf16.mxu0 %v236
    %771 = vmatmul.mubr.bf16.gmra.mrb[0].mxu0 %v235
    %v772 = vpop.f32.mrb[0].mxu0
    %v773 = vadd.f32 %v484, %v772
    %v774 = vpop.f32.mrb[0].mxu0
    %v775 = vpop.f32.mrb[0].mxu0
    %v776 = vadd.f32 %v487, %v775
    %v777 = vpop.f32.mrb[0].mxu0
    %778 = vmatprep.mubr.bf16.mxu0 %v240
    %779 = vmatmul.mubr.bf16.gmra.mrb[0].mxu0 %v239
    %v780 = vpop.f32.mrb[0].mxu0
    %v781 = vadd.f32 %v492, %v780
    %v782 = vpop.f32.mrb[0].mxu0
    %v783 = vpop.f32.mrb[0].mxu0
    %v784 = vadd.f32 %v495, %v783
    %v785 = vpop.f32.mrb[0].mxu0
    %786 = vmatprep.mubr.bf16.mxu0 %v244
    %787 = vmatmul.mubr.bf16.gmra.mrb[0].mxu0 %v243
    %v788 = vpop.f32.mrb[0].mxu0
    %v789 = vadd.f32 %v500, %v788
    %v790 = vpop.f32.mrb[0].mxu0
    %v791 = vpop.f32.mrb[0].mxu0
    %v792 = vadd.f32 %v503, %v791
    %v793 = vpop.f32.mrb[0].mxu0
    %794 = vmatprep.mubr.bf16.mxu0 %v248
    %795 = vmatmul.mubr.bf16.gmra.mrb[0].mxu0 %v247
    %v796 = vpop.f32.mrb[0].mxu0
    %v797 = vadd.f32 %v508, %v796
    %v798 = vpop.f32.mrb[0].mxu0
    %v799 = vpop.f32.mrb[0].mxu0
    %v800 = vadd.f32 %v511, %v799
    %v801 = vpop.f32.mrb[0].mxu0
    %802 = vmatprep.mubr.bf16.mxu0 %v252
    %803 = vmatmul.mubr.bf16.gmra.mrb[0].mxu0 %v251
    %v804 = vpop.f32.mrb[0].mxu0
    %v805 = vadd.f32 %v516, %v804
    %v806 = vpop.f32.mrb[0].mxu0
    %v807 = vpop.f32.mrb[0].mxu0
    %v808 = vadd.f32 %v519, %v807
    %v809 = vpop.f32.mrb[0].mxu0
    %810 = vmatprep.mubr.bf16.mxu0 %v256
    %811 = vmatmul.mubr.bf16.gmra.mrb[0].mxu0 %v255
    %v812 = vpop.f32.mrb[0].mxu0
    %v813 = vadd.f32 %v524, %v812
    %v814 = vpop.f32.mrb[0].mxu0
    %v815 = vpop.f32.mrb[0].mxu0
    %v816 = vadd.f32 %v527, %v815
    %v817 = vpop.f32.mrb[0].mxu0
    %818 = vmatprep.mubr.bf16.mxu0 %v260
    %819 = vmatmul.mubr.bf16.gmra.mrb[0].mxu0 %v259
    %v820 = vpop.f32.mrb[0].mxu0
    %v821 = vadd.f32 %v532, %v820
    %v822 = vpop.f32.mrb[0].mxu0
    %v823 = vpop.f32.mrb[0].mxu0
    %v824 = vadd.f32 %v535, %v823
    %v825 = vpop.f32.mrb[0].mxu0
    %826 = vmatprep.mubr.bf16.mxu0 %v264
    %827 = vmatmul.mubr.bf16.gmra.mrb[0].mxu0 %v263
    %v828 = vpop.f32.mrb[0].mxu0
    %v829 = vadd.f32 %v540, %v828
    %v830 = vpop.f32.mrb[0].mxu0
    %v831 = vpop.f32.mrb[0].mxu0
    %v832 = vadd.f32 %v543, %v831
    %v833 = vpop.f32.mrb[0].mxu0
    %834 = vmatprep.mubr.bf16.mxu0 %v268
    %835 = vmatmul.mubr.bf16.gmra.mrb[0].mxu0 %v267
    %v836 = vpop.f32.mrb[0].mxu0
    %v837 = vadd.f32 %v548, %v836
    %v838 = vpop.f32.mrb[0].mxu0
    %v839 = vpop.f32.mrb[0].mxu0
    %v840 = vadd.f32 %v551, %v839
    %v841 = vpop.f32.mrb[0].mxu0
    %842 = vmatprep.mubr.bf16.mxu0 %v272
    %843 = vmatmul.mubr.bf16.gmra.mrb[0].mxu0 %v271
    %v844 = vpop.f32.mrb[0].mxu0
    %v845 = vadd.f32 %v556, %v844
    %v846 = vpop.f32.mrb[0].mxu0
    %v847 = vpop.f32.mrb[0].mxu0
    %v848 = vadd.f32 %v559, %v847
    %v849 = vpop.f32.mrb[0].mxu0
    %850 = vdwg.mxu0
    %v851 = vmax.f32 %v597, 1.0
    %v852 = vmax.f32 %v600, 1.0
    %v853 = vmax.f32 %v605, 1.0
    %v854 = vmax.f32 %v608, 1.0
    %v855 = vmax.f32 %v613, 1.0
    %v856 = vmax.f32 %v616, 1.0
    %v857 = vmax.f32 %v621, 1.0
    %v858 = vmax.f32 %v624, 1.0
    %v859 = vmax.f32 %v629, 1.0
    %v860 = vmax.f32 %v632, 1.0
    %v861 = vmax.f32 %v637, 1.0
    %v862 = vmax.f32 %v640, 1.0
    %v863 = vmax.f32 %v645, 1.0
    %v864 = vmax.f32 %v648, 1.0
    %v865 = vmax.f32 %v653, 1.0
    %v866 = vmax.f32 %v656, 1.0
    %v867 = vmax.f32 %v661, 1.0
    %v868 = vmax.f32 %v664, 1.0
    %v869 = vmax.f32 %v669, 1.0
    %v870 = vmax.f32 %v672, 1.0
    %v871 = vmax.f32 %v677, 1.0
    %v872 = vmax.f32 %v680, 1.0
    %v873 = vmax.f32 %v685, 1.0
    %v874 = vmax.f32 %v688, 1.0
    %v875 = vmax.f32 %v693, 1.0
    %v876 = vmax.f32 %v696, 1.0
    %v877 = vmax.f32 %v701, 1.0
    %v878 = vmax.f32 %v704, 1.0
    %v879 = vmax.f32 %v709, 1.0
    %v880 = vmax.f32 %v712, 1.0
    %v881 = vmax.f32 %v717, 1.0
    %v882 = vmax.f32 %v720, 1.0
    %v883 = vmax.f32 %v725, 1.0
    %v884 = vmax.f32 %v728, 1.0
    %v885 = vmax.f32 %v733, 1.0
    %v886 = vmax.f32 %v736, 1.0
    %v887 = vmax.f32 %v741, 1.0
    %v888 = vmax.f32 %v744, 1.0
    %v889 = vmax.f32 %v749, 1.0
    %v890 = vmax.f32 %v752, 1.0
    %v891 = vmax.f32 %v757, 1.0
    %v892 = vmax.f32 %v760, 1.0
    %v893 = vmax.f32 %v765, 1.0
    %v894 = vmax.f32 %v768, 1.0
    %v895 = vmax.f32 %v773, 1.0
    %v896 = vmax.f32 %v776, 1.0
    %v897 = vmax.f32 %v781, 1.0
    %v898 = vmax.f32 %v784, 1.0
    %v899 = vmax.f32 %v789, 1.0
    %v900 = vmax.f32 %v792, 1.0
    %v901 = vmax.f32 %v797, 1.0
    %v902 = vmax.f32 %v800, 1.0
    %v903 = vmax.f32 %v805, 1.0
    %v904 = vmax.f32 %v808, 1.0
    %v905 = vmax.f32 %v813, 1.0
    %v906 = vmax.f32 %v816, 1.0
    %v907 = vmax.f32 %v821, 1.0
    %v908 = vmax.f32 %v824, 1.0
    %v909 = vmax.f32 %v829, 1.0
    %v910 = vmax.f32 %v832, 1.0
    %v911 = vmax.f32 %v837, 1.0
    %v912 = vmax.f32 %v840, 1.0
    %v913 = vmax.f32 %v845, 1.0
    %v914 = vmax.f32 %v848, 1.0
    %v915 = vrsqrt.pop %v851
    %v916 = vrsqrt.pop %v852
    %v917 = vrsqrt.pop %v853
    %v918 = vrsqrt.pop %v854
    %v919 = vrsqrt.pop %v855
    %v920 = vrsqrt.pop %v856
    %v921 = vrsqrt.pop %v857
    %v922 = vrsqrt.pop %v858
    %v923 = vrsqrt.pop %v859
    %v924 = vrsqrt.pop %v860
    %v925 = vrsqrt.pop %v861
    %v926 = vrsqrt.pop %v862
    %v927 = vrsqrt.pop %v863
    %v928 = vrsqrt.pop %v864
    %v929 = vrsqrt.pop %v865
    %v930 = vrsqrt.pop %v866
    %v931 = vrsqrt.pop %v867
    %v932 = vrsqrt.pop %v868
    %v933 = vrsqrt.pop %v869
    %v934 = vrsqrt.pop %v870
    %v935 = vrsqrt.pop %v871
    %v936 = vrsqrt.pop %v872
    %v937 = vrsqrt.pop %v873
    %v938 = vrsqrt.pop %v874
    %v939 = vrsqrt.pop %v875
    %v940 = vrsqrt.pop %v876
    %v941 = vrsqrt.pop %v877
    %v942 = vrsqrt.pop %v878
    %v943 = vrsqrt.pop %v879
    %v944 = vrsqrt.pop %v880
    %v945 = vrsqrt.pop %v881
    %v946 = vrsqrt.pop %v882
    %v947 = vrsqrt.pop %v883
    %v948 = vrsqrt.pop %v884
    %v949 = vrsqrt.pop %v885
    %v950 = vrsqrt.pop %v886
    %v951 = vrsqrt.pop %v887
    %v952 = vrsqrt.pop %v888
    %v953 = vrsqrt.pop %v889
    %v954 = vrsqrt.pop %v890
    %v955 = vrsqrt.pop %v891
    %v956 = vrsqrt.pop %v892
    %v957 = vrsqrt.pop %v893
    %v958 = vrsqrt.pop %v894
    %v959 = vrsqrt.pop %v895
    %v960 = vrsqrt.pop %v896
    %v961 = vrsqrt.pop %v897
    %v962 = vrsqrt.pop %v898
    %v963 = vrsqrt.pop %v899
    %v964 = vrsqrt.pop %v900
    %v965 = vrsqrt.pop %v901
    %v966 = vrsqrt.pop %v902
    %v967 = vrsqrt.pop %v903
    %v968 = vrsqrt.pop %v904
    %v969 = vrsqrt.pop %v905
    %v970 = vrsqrt.pop %v906
    %v971 = vrsqrt.pop %v907
    %v972 = vrsqrt.pop %v908
    %v973 = vrsqrt.pop %v909
    %v974 = vrsqrt.pop %v910
    %v975 = vrsqrt.pop %v911
    %v976 = vrsqrt.pop %v912
    %v977 = vrsqrt.pop %v913
    %v978 = vrsqrt.pop %v914
    %v979 = vld [vmem:[#allocation5] sm:$0xff]
    %v980 = vld [vmem:[#allocation5 + $0x8] sm:$0xff]
    %v981 = vld [vmem:[#allocation5 + $0x10] sm:$0xff]
    %v982 = vld [vmem:[#allocation5 + $0x18] sm:$0xff]
    %v983 = vld [vmem:[#allocation5 + $0x20] sm:$0xff]
    %v984 = vld [vmem:[#allocation5 + $0x28] sm:$0xff]
    %v985 = vld [vmem:[#allocation5 + $0x30] sm:$0xff]
    %v986 = vld [vmem:[#allocation5 + $0x38] sm:$0xff]
    %v987 = vld [vmem:[#allocation5 + $0x40] sm:$0xff]
    %v988 = vld [vmem:[#allocation5 + $0x48] sm:$0xff]
    %v989 = vld [vmem:[#allocation5 + $0x50] sm:$0xff]
    %v990 = vld [vmem:[#allocation5 + $0x58] sm:$0xff]
    %v991 = vld [vmem:[#allocation5 + $0x60] sm:$0xff]
    %v992 = vld [vmem:[#allocation5 + $0x68] sm:$0xff]
    %v993 = vld [vmem:[#allocation5 + $0x70] sm:$0xff]
    %v994 = vld [vmem:[#allocation5 + $0x78] sm:$0xff]
    %v995 = vld [vmem:[#allocation5 + $0x80] sm:$0xff]
    %v996 = vld [vmem:[#allocation5 + $0x88] sm:$0xff]
    %v997 = vld [vmem:[#allocation5 + $0x90] sm:$0xff]
    %v998 = vld [vmem:[#allocation5 + $0x98] sm:$0xff]
    %v999 = vld [vmem:[#allocation5 + $0xa0] sm:$0xff]
    %v1000 = vld [vmem:[#allocation5 + $0xa8] sm:$0xff]
    %v1001 = vld [vmem:[#allocation5 + $0xb0] sm:$0xff]
    %v1002 = vld [vmem:[#allocation5 + $0xb8] sm:$0xff]
    %v1003 = vld [vmem:[#allocation5 + $0xc0] sm:$0xff]
    %v1004 = vld [vmem:[#allocation5 + $0xc8] sm:$0xff]
    %v1005 = vld [vmem:[#allocation5 + $0xd0] sm:$0xff]
    %v1006 = vld [vmem:[#allocation5 + $0xd8] sm:$0xff]
    %v1007 = vld [vmem:[#allocation5 + $0xe0] sm:$0xff]
    %v1008 = vld [vmem:[#allocation5 + $0xe8] sm:$0xff]
    %v1009 = vld [vmem:[#allocation5 + $0xf0] sm:$0xff]
    %v1010 = vld [vmem:[#allocation5 + $0xf8] sm:$0xff]
    %v1011 = vld [vmem:[#allocation5 + $0x100] sm:$0xff]
    %v1012 = vld [vmem:[#allocation5 + $0x108] sm:$0xff]
    %v1013 = vld [vmem:[#allocation5 + $0x110] sm:$0xff]
    %v1014 = vld [vmem:[#allocation5 + $0x118] sm:$0xff]
    %v1015 = vld [vmem:[#allocation5 + $0x120] sm:$0xff]
    %v1016 = vld [vmem:[#allocation5 + $0x128] sm:$0xff]
    %v1017 = vld [vmem:[#allocation5 + $0x130] sm:$0xff]
    %v1018 = vld [vmem:[#allocation5 + $0x138] sm:$0xff]
    %v1019 = vld [vmem:[#allocation5 + $0x140] sm:$0xff]
    %v1020 = vld [vmem:[#allocation5 + $0x148] sm:$0xff]
    %v1021 = vld [vmem:[#allocation5 + $0x150] sm:$0xff]
    %v1022 = vld [vmem:[#allocation5 + $0x158] sm:$0xff]
    %v1023 = vld [vmem:[#allocation5 + $0x160] sm:$0xff]
    %v1024 = vld [vmem:[#allocation5 + $0x168] sm:$0xff]
    %v1025 = vld [vmem:[#allocation5 + $0x170] sm:$0xff]
    %v1026 = vld [vmem:[#allocation5 + $0x178] sm:$0xff]
    %v1027 = vld [vmem:[#allocation5 + $0x180] sm:$0xff]
    %v1028 = vld [vmem:[#allocation5 + $0x188] sm:$0xff]
    %v1029 = vld [vmem:[#allocation5 + $0x190] sm:$0xff]
    %v1030 = vld [vmem:[#allocation5 + $0x198] sm:$0xff]
    %v1031 = vld [vmem:[#allocation5 + $0x1a0] sm:$0xff]
    %v1032 = vld [vmem:[#allocation5 + $0x1a8] sm:$0xff]
    %v1033 = vld [vmem:[#allocation5 + $0x1b0] sm:$0xff]
    %v1034 = vld [vmem:[#allocation5 + $0x1b8] sm:$0xff]
    %v1035 = vld [vmem:[#allocation5 + $0x1c0] sm:$0xff]
    %v1036 = vld [vmem:[#allocation5 + $0x1c8] sm:$0xff]
    %v1037 = vld [vmem:[#allocation5 + $0x1d0] sm:$0xff]
    %v1038 = vld [vmem:[#allocation5 + $0x1d8] sm:$0xff]
    %v1039 = vld [vmem:[#allocation5 + $0x1e0] sm:$0xff]
    %v1040 = vld [vmem:[#allocation5 + $0x1e8] sm:$0xff]
    %v1041 = vld [vmem:[#allocation5 + $0x1f0] sm:$0xff]
    %v1042 = vld [vmem:[#allocation5 + $0x1f8] sm:$0xff]
    %v1043 = vpack.c.bf16 %v980, %v979
    %v1044 = vpack.c.bf16 %v982, %v981
    %v1045 = vpack.c.bf16 %v984, %v983
    %v1046 = vpack.c.bf16 %v986, %v985
    %v1047 = vpack.c.bf16 %v988, %v987
    %v1048 = vpack.c.bf16 %v990, %v989
    %v1049 = vpack.c.bf16 %v992, %v991
    %v1050 = vpack.c.bf16 %v994, %v993
    %v1051 = vpack.c.bf16 %v996, %v995
    %v1052 = vpack.c.bf16 %v998, %v997
    %v1053 = vpack.c.bf16 %v1000, %v999
    %v1054 = vpack.c.bf16 %v1002, %v1001
    %v1055 = vpack.c.bf16 %v1004, %v1003
    %v1056 = vpack.c.bf16 %v1006, %v1005
    %v1057 = vpack.c.bf16 %v1008, %v1007
    %v1058 = vpack.c.bf16 %v1010, %v1009
    %v1059 = vpack.c.bf16 %v1012, %v1011
    %v1060 = vpack.c.bf16 %v1014, %v1013
    %v1061 = vpack.c.bf16 %v1016, %v1015
    %v1062 = vpack.c.bf16 %v1018, %v1017
    %v1063 = vpack.c.bf16 %v1020, %v1019
    %v1064 = vpack.c.bf16 %v1022, %v1021
    %v1065 = vpack.c.bf16 %v1024, %v1023
    %v1066 = vpack.c.bf16 %v1026, %v1025
    %v1067 = vpack.c.bf16 %v1028, %v1027
    %v1068 = vpack.c.bf16 %v1030, %v1029
    %v1069 = vpack.c.bf16 %v1032, %v1031
    %v1070 = vpack.c.bf16 %v1034, %v1033
    %v1071 = vpack.c.bf16 %v1036, %v1035
    %v1072 = vpack.c.bf16 %v1038, %v1037
    %v1073 = vpack.c.bf16 %v1040, %v1039
    %v1074 = vpack.c.bf16 %v1042, %v1041
    %v1075 = vld [vmem:[#allocation7] sm:$0xf]
    %v1076 = vld [vmem:[#allocation7 + $0x4] sm:$0xf]
    %v1077 = vld [vmem:[#allocation7 + $0x8] sm:$0xf]
    %v1078 = vld [vmem:[#allocation7 + $0xc] sm:$0xf]
    %v1079 = vld [vmem:[#allocation7 + $0x10] sm:$0xf]
    %v1080 = vld [vmem:[#allocation7 + $0x14] sm:$0xf]
    %v1081 = vld [vmem:[#allocation7 + $0x18] sm:$0xf]
    %v1082 = vld [vmem:[#allocation7 + $0x1c] sm:$0xf]
    %v1083 = vld [vmem:[#allocation7 + $0x20] sm:$0xf]
    %v1084 = vld [vmem:[#allocation7 + $0x24] sm:$0xf]
    %v1085 = vld [vmem:[#allocation7 + $0x28] sm:$0xf]
    %v1086 = vld [vmem:[#allocation7 + $0x2c] sm:$0xf]
    %v1087 = vld [vmem:[#allocation7 + $0x30] sm:$0xf]
    %v1088 = vld [vmem:[#allocation7 + $0x34] sm:$0xf]
    %v1089 = vld [vmem:[#allocation7 + $0x38] sm:$0xf]
    %v1090 = vld [vmem:[#allocation7 + $0x3c] sm:$0xf]
    %v1107 = vunpack.c.l.b16 %v1075
    %v1108 = vunpack.c.l.b16 %v1076
    %v1109 = vunpack.c.l.b16 %v1077
    %v1110 = vunpack.c.l.b16 %v1078
    %v1111 = vunpack.c.l.b16 %v1079
    %v1112 = vunpack.c.l.b16 %v1080
    %v1113 = vunpack.c.l.b16 %v1081
    %v1114 = vunpack.c.l.b16 %v1082
    %v1115 = vunpack.c.l.b16 %v1083
    %v1116 = vunpack.c.l.b16 %v1084
    %v1117 = vunpack.c.l.b16 %v1085
    %v1118 = vunpack.c.l.b16 %v1086
    %v1119 = vunpack.c.l.b16 %v1087
    %v1120 = vunpack.c.l.b16 %v1088
    %v1121 = vunpack.c.l.b16 %v1089
    %v1122 = vunpack.c.l.b16 %v1090
    %v1123 = vpack.c.b16 %v1108, %v1107
    %v1124 = vpack.c.b16 %v1110, %v1109
    %v1125 = vpack.c.b16 %v1112, %v1111
    %v1126 = vpack.c.b16 %v1114, %v1113
    %v1127 = vpack.c.b16 %v1116, %v1115
    %v1128 = vpack.c.b16 %v1118, %v1117
    %v1129 = vpack.c.b16 %v1120, %v1119
    %v1130 = vpack.c.b16 %v1122, %v1121
    %1139 = vmatprep.subr.bf16.mxu0 0
    %1140 = vmatpush1.bf16.msra.mxu0 %v1123
    %1141 = vmatprep.subr.bf16.mxu0 0
    %1142 = vmatpush1.bf16.msra.mxu0 %v1124
    %1143 = vmatprep.subr.bf16.mxu0 0
    %1144 = vmatpush1.bf16.msra.mxu0 %v1125
    %1145 = vmatprep.subr.bf16.mxu0 0
    %1146 = vmatpush1.bf16.msra.mxu0 %v1126
    %1147 = vmatprep.subr.bf16.mxu0 0
    %1148 = vmatpush1.bf16.msra.mxu0 %v1127
    %1149 = vmatprep.subr.bf16.mxu0 0
    %1150 = vmatpush1.bf16.msra.mxu0 %v1128
    %1151 = vmatprep.subr.bf16.mxu0 0
    %1152 = vmatpush1.bf16.msra.mxu0 %v1129
    %1153 = vmatprep.subr.bf16.mxu0 0
    %1154 = vmatpush1.bf16.msra.mxu0 %v1130
    %1155 = vmatprep.subr.bf16.mxu0 0
    %1156 = vmatpush1.bf16.msra.mxu0 0
    %1157 = vmatprep.subr.bf16.mxu0 0
    %1158 = vmatpush1.bf16.msra.mxu0 0
    %1159 = vmatprep.subr.bf16.mxu0 0
    %1160 = vmatpush1.bf16.msra.mxu0 0
    %1161 = vmatprep.subr.bf16.mxu0 0
    %1162 = vmatpush1.bf16.msra.mxu0 0
    %1163 = vmatprep.subr.bf16.mxu0 0
    %1164 = vmatpush1.bf16.msra.mxu0 0
    %1165 = vmatprep.subr.bf16.mxu0 0
    %1166 = vmatpush1.bf16.msra.mxu0 0
    %1167 = vmatprep.subr.bf16.mxu0 0
    %1168 = vmatpush1.bf16.msra.mxu0 0
    %1169 = vmatprep.subr.bf16.mxu0 0
    %1170 = vmatpush1.bf16.msra.mxu0 0
    %1171 = vmatprep.mubr.bf16.mxu0 0
    %1172 = vmatmul.mubr.bf16.gmra.mrb[0].mxu0 %v1043
    %v1173 = vpop.f32.mrb[0].mxu0
    %v1174 = vadd.f32 0.0, %v1173
    %v1175 = vpop.f32.mrb[0].mxu0
    %v1176 = vpop.f32.mrb[0].mxu0
    %v1177 = vadd.f32 0.0, %v1176
    %v1178 = vpop.f32.mrb[0].mxu0
    %1179 = vmatprep.mubr.bf16.mxu0 0
    %1180 = vmatmul.mubr.bf16.gmra.mrb[0].mxu0 %v1044
    %v1181 = vpop.f32.mrb[0].mxu0
    %v1182 = vadd.f32 0.0, %v1181
    %v1183 = vpop.f32.mrb[0].mxu0
    %v1184 = vpop.f32.mrb[0].mxu0
    %v1185 = vadd.f32 0.0, %v1184
    %v1186 = vpop.f32.mrb[0].mxu0
    %1187 = vmatprep.mubr.bf16.mxu0 0
    %1188 = vmatmul.mubr.bf16.gmra.mrb[0].mxu0 %v1045
    %v1189 = vpop.f32.mrb[0].mxu0
    %v1190 = vadd.f32 0.0, %v1189
    %v1191 = vpop.f32.mrb[0].mxu0
    %v1192 = vpop.f32.mrb[0].mxu0
    %v1193 = vadd.f32 0.0, %v1192
    %v1194 = vpop.f32.mrb[0].mxu0
    %1195 = vmatprep.mubr.bf16.mxu0 0
    %1196 = vmatmul.mubr.bf16.gmra.mrb[0].mxu0 %v1046
    %v1197 = vpop.f32.mrb[0].mxu0
    %v1198 = vadd.f32 0.0, %v1197
    %v1199 = vpop.f32.mrb[0].mxu0
    %v1200 = vpop.f32.mrb[0].mxu0
    %v1201 = vadd.f32 0.0, %v1200
    %v1202 = vpop.f32.mrb[0].mxu0
    %1203 = vmatprep.mubr.bf16.mxu0 0
    %1204 = vmatmul.mubr.bf16.gmra.mrb[0].mxu0 %v1047
    %v1205 = vpop.f32.mrb[0].mxu0
    %v1206 = vadd.f32 0.0, %v1205
    %v1207 = vpop.f32.mrb[0].mxu0
    %v1208 = vpop.f32.mrb[0].mxu0
    %v1209 = vadd.f32 0.0, %v1208
    %v1210 = vpop.f32.mrb[0].mxu0
    %1211 = vmatprep.mubr.bf16.mxu0 0
    %1212 = vmatmul.mubr.bf16.gmra.mrb[0].mxu0 %v1048
    %v1213 = vpop.f32.mrb[0].mxu0
    %v1214 = vadd.f32 0.0, %v1213
    %v1215 = vpop.f32.mrb[0].mxu0
    %v1216 = vpop.f32.mrb[0].mxu0
    %v1217 = vadd.f32 0.0, %v1216
    %v1218 = vpop.f32.mrb[0].mxu0
    %1219 = vmatprep.mubr.bf16.mxu0 0
    %1220 = vmatmul.mubr.bf16.gmra.mrb[0].mxu0 %v1049
    %v1221 = vpop.f32.mrb[0].mxu0
    %v1222 = vadd.f32 0.0, %v1221
    %v1223 = vpop.f32.mrb[0].mxu0
    %v1224 = vpop.f32.mrb[0].mxu0
    %v1225 = vadd.f32 0.0, %v1224
    %v1226 = vpop.f32.mrb[0].mxu0
    %1227 = vmatprep.mubr.bf16.mxu0 0
    %1228 = vmatmul.mubr.bf16.gmra.mrb[0].mxu0 %v1050
    %v1229 = vpop.f32.mrb[0].mxu0
    %v1230 = vadd.f32 0.0, %v1229
    %v1231 = vpop.f32.mrb[0].mxu0
    %v1232 = vpop.f32.mrb[0].mxu0
    %v1233 = vadd.f32 0.0, %v1232
    %v1234 = vpop.f32.mrb[0].mxu0
    %1235 = vmatprep.mubr.bf16.mxu0 0
    %1236 = vmatmul.mubr.bf16.gmra.mrb[0].mxu0 %v1051
    %v1237 = vpop.f32.mrb[0].mxu0
    %v1238 = vadd.f32 0.0, %v1237
    %v1239 = vpop.f32.mrb[0].mxu0
    %v1240 = vpop.f32.mrb[0].mxu0
    %v1241 = vadd.f32 0.0, %v1240
    %v1242 = vpop.f32.mrb[0].mxu0
    %1243 = vmatprep.mubr.bf16.mxu0 0
    %1244 = vmatmul.mubr.bf16.gmra.mrb[0].mxu0 %v1052
    %v1245 = vpop.f32.mrb[0].mxu0
    %v1246 = vadd.f32 0.0, %v1245
    %v1247 = vpop.f32.mrb[0].mxu0
    %v1248 = vpop.f32.mrb[0].mxu0
    %v1249 = vadd.f32 0.0, %v1248
    %v1250 = vpop.f32.mrb[0].mxu0
    %1251 = vmatprep.mubr.bf16.mxu0 0
    %1252 = vmatmul.mubr.bf16.gmra.mrb[0].mxu0 %v1053
    %v1253 = vpop.f32.mrb[0].mxu0
    %v1254 = vadd.f32 0.0, %v1253
    %v1255 = vpop.f32.mrb[0].mxu0
    %v1256 = vpop.f32.mrb[0].mxu0
    %v1257 = vadd.f32 0.0, %v1256
    %v1258 = vpop.f32.mrb[0].mxu0
    %1259 = vmatprep.mubr.bf16.mxu0 0
    %1260 = vmatmul.mubr.bf16.gmra.mrb[0].mxu0 %v1054
    %v1261 = vpop.f32.mrb[0].mxu0
    %v1262 = vadd.f32 0.0, %v1261
    %v1263 = vpop.f32.mrb[0].mxu0
    %v1264 = vpop.f32.mrb[0].mxu0
    %v1265 = vadd.f32 0.0, %v1264
    %v1266 = vpop.f32.mrb[0].mxu0
    %1267 = vmatprep.mubr.bf16.mxu0 0
    %1268 = vmatmul.mubr.bf16.gmra.mrb[0].mxu0 %v1055
    %v1269 = vpop.f32.mrb[0].mxu0
    %v1270 = vadd.f32 0.0, %v1269
    %v1271 = vpop.f32.mrb[0].mxu0
    %v1272 = vpop.f32.mrb[0].mxu0
    %v1273 = vadd.f32 0.0, %v1272
    %v1274 = vpop.f32.mrb[0].mxu0
    %1275 = vmatprep.mubr.bf16.mxu0 0
    %1276 = vmatmul.mubr.bf16.gmra.mrb[0].mxu0 %v1056
    %v1277 = vpop.f32.mrb[0].mxu0
    %v1278 = vadd.f32 0.0, %v1277
    %v1279 = vpop.f32.mrb[0].mxu0
    %v1280 = vpop.f32.mrb[0].mxu0
    %v1281 = vadd.f32 0.0, %v1280
    %v1282 = vpop.f32.mrb[0].mxu0
    %1283 = vmatprep.mubr.bf16.mxu0 0
    %1284 = vmatmul.mubr.bf16.gmra.mrb[0].mxu0 %v1057
    %v1285 = vpop.f32.mrb[0].mxu0
    %v1286 = vadd.f32 0.0, %v1285
    %v1287 = vpop.f32.mrb[0].mxu0
    %v1288 = vpop.f32.mrb[0].mxu0
    %v1289 = vadd.f32 0.0, %v1288
    %v1290 = vpop.f32.mrb[0].mxu0
    %1291 = vmatprep.mubr.bf16.mxu0 0
    %1292 = vmatmul.mubr.bf16.gmra.mrb[0].mxu0 %v1058
    %v1293 = vpop.f32.mrb[0].mxu0
    %v1294 = vadd.f32 0.0, %v1293
    %v1295 = vpop.f32.mrb[0].mxu0
    %v1296 = vpop.f32.mrb[0].mxu0
    %v1297 = vadd.f32 0.0, %v1296
    %v1298 = vpop.f32.mrb[0].mxu0
    %1299 = vmatprep.mubr.bf16.mxu0 0
    %1300 = vmatmul.mubr.bf16.gmra.mrb[0].mxu0 %v1059
    %v1301 = vpop.f32.mrb[0].mxu0
    %v1302 = vadd.f32 0.0, %v1301
    %v1303 = vpop.f32.mrb[0].mxu0
    %v1304 = vpop.f32.mrb[0].mxu0
    %v1305 = vadd.f32 0.0, %v1304
    %v1306 = vpop.f32.mrb[0].mxu0
    %1307 = vmatprep.mubr.bf16.mxu0 0
    %1308 = vmatmul.mubr.bf16.gmra.mrb[0].mxu0 %v1060
    %v1309 = vpop.f32.mrb[0].mxu0
    %v1310 = vadd.f32 0.0, %v1309
    %v1311 = vpop.f32.mrb[0].mxu0
    %v1312 = vpop.f32.mrb[0].mxu0
    %v1313 = vadd.f32 0.0, %v1312
    %v1314 = vpop.f32.mrb[0].mxu0
    %1315 = vmatprep.mubr.bf16.mxu0 0
    %1316 = vmatmul.mubr.bf16.gmra.mrb[0].mxu0 %v1061
    %v1317 = vpop.f32.mrb[0].mxu0
    %v1318 = vadd.f32 0.0, %v1317
    %v1319 = vpop.f32.mrb[0].mxu0
    %v1320 = vpop.f32.mrb[0].mxu0
    %v1321 = vadd.f32 0.0, %v1320
    %v1322 = vpop.f32.mrb[0].mxu0
    %1323 = vmatprep.mubr.bf16.mxu0 0
    %1324 = vmatmul.mubr.bf16.gmra.mrb[0].mxu0 %v1062
    %v1325 = vpop.f32.mrb[0].mxu0
    %v1326 = vadd.f32 0.0, %v1325
    %v1327 = vpop.f32.mrb[0].mxu0
    %v1328 = vpop.f32.mrb[0].mxu0
    %v1329 = vadd.f32 0.0, %v1328
    %v1330 = vpop.f32.mrb[0].mxu0
    %1331 = vmatprep.mubr.bf16.mxu0 0
    %1332 = vmatmul.mubr.bf16.gmra.mrb[0].mxu0 %v1063
    %v1333 = vpop.f32.mrb[0].mxu0
    %v1334 = vadd.f32 0.0, %v1333
    %v1335 = vpop.f32.mrb[0].mxu0
    %v1336 = vpop.f32.mrb[0].mxu0
    %v1337 = vadd.f32 0.0, %v1336
    %v1338 = vpop.f32.mrb[0].mxu0
    %1339 = vmatprep.mubr.bf16.mxu0 0
    %1340 = vmatmul.mubr.bf16.gmra.mrb[0].mxu0 %v1064
    %v1341 = vpop.f32.mrb[0].mxu0
    %v1342 = vadd.f32 0.0, %v1341
    %v1343 = vpop.f32.mrb[0].mxu0
    %v1344 = vpop.f32.mrb[0].mxu0
    %v1345 = vadd.f32 0.0, %v1344
    %v1346 = vpop.f32.mrb[0].mxu0
    %1347 = vmatprep.mubr.bf16.mxu0 0
    %1348 = vmatmul.mubr.bf16.gmra.mrb[0].mxu0 %v1065
    %v1349 = vpop.f32.mrb[0].mxu0
    %v1350 = vadd.f32 0.0, %v1349
    %v1351 = vpop.f32.mrb[0].mxu0
    %v1352 = vpop.f32.mrb[0].mxu0
    %v1353 = vadd.f32 0.0, %v1352
    %v1354 = vpop.f32.mrb[0].mxu0
    %1355 = vmatprep.mubr.bf16.mxu0 0
    %1356 = vmatmul.mubr.bf16.gmra.mrb[0].mxu0 %v1066
    %v1357 = vpop.f32.mrb[0].mxu0
    %v1358 = vadd.f32 0.0, %v1357
    %v1359 = vpop.f32.mrb[0].mxu0
    %v1360 = vpop.f32.mrb[0].mxu0
    %v1361 = vadd.f32 0.0, %v1360
    %v1362 = vpop.f32.mrb[0].mxu0
    %1363 = vmatprep.mubr.bf16.mxu0 0
    %1364 = vmatmul.mubr.bf16.gmra.mrb[0].mxu0 %v1067
    %v1365 = vpop.f32.mrb[0].mxu0
    %v1366 = vadd.f32 0.0, %v1365
    %v1367 = vpop.f32.mrb[0].mxu0
    %v1368 = vpop.f32.mrb[0].mxu0
    %v1369 = vadd.f32 0.0, %v1368
    %v1370 = vpop.f32.mrb[0].mxu0
    %1371 = vmatprep.mubr.bf16.mxu0 0
    %1372 = vmatmul.mubr.bf16.gmra.mrb[0].mxu0 %v1068
    %v1373 = vpop.f32.mrb[0].mxu0
    %v1374 = vadd.f32 0.0, %v1373
    %v1375 = vpop.f32.mrb[0].mxu0
    %v1376 = vpop.f32.mrb[0].mxu0
    %v1377 = vadd.f32 0.0, %v1376
    %v1378 = vpop.f32.mrb[0].mxu0
    %1379 = vmatprep.mubr.bf16.mxu0 0
    %1380 = vmatmul.mubr.bf16.gmra.mrb[0].mxu0 %v1069
    %v1381 = vpop.f32.mrb[0].mxu0
    %v1382 = vadd.f32 0.0, %v1381
    %v1383 = vpop.f32.mrb[0].mxu0
    %v1384 = vpop.f32.mrb[0].mxu0
    %v1385 = vadd.f32 0.0, %v1384
    %v1386 = vpop.f32.mrb[0].mxu0
    %1387 = vmatprep.mubr.bf16.mxu0 0
    %1388 = vmatmul.mubr.bf16.gmra.mrb[0].mxu0 %v1070
    %v1389 = vpop.f32.mrb[0].mxu0
    %v1390 = vadd.f32 0.0, %v1389
    %v1391 = vpop.f32.mrb[0].mxu0
    %v1392 = vpop.f32.mrb[0].mxu0
    %v1393 = vadd.f32 0.0, %v1392
    %v1394 = vpop.f32.mrb[0].mxu0
    %1395 = vmatprep.mubr.bf16.mxu0 0
    %1396 = vmatmul.mubr.bf16.gmra.mrb[0].mxu0 %v1071
    %v1397 = vpop.f32.mrb[0].mxu0
    %v1398 = vadd.f32 0.0, %v1397
    %v1399 = vpop.f32.mrb[0].mxu0
    %v1400 = vpop.f32.mrb[0].mxu0
    %v1401 = vadd.f32 0.0, %v1400
    %v1402 = vpop.f32.mrb[0].mxu0
    %1403 = vmatprep.mubr.bf16.mxu0 0
    %1404 = vmatmul.mubr.bf16.gmra.mrb[0].mxu0 %v1072
    %v1405 = vpop.f32.mrb[0].mxu0
    %v1406 = vadd.f32 0.0, %v1405
    %v1407 = vpop.f32.mrb[0].mxu0
    %v1408 = vpop.f32.mrb[0].mxu0
    %v1409 = vadd.f32 0.0, %v1408
    %v1410 = vpop.f32.mrb[0].mxu0
    %1411 = vmatprep.mubr.bf16.mxu0 0
    %1412 = vmatmul.mubr.bf16.gmra.mrb[0].mxu0 %v1073
    %v1413 = vpop.f32.mrb[0].mxu0
    %v1414 = vadd.f32 0.0, %v1413
    %v1415 = vpop.f32.mrb[0].mxu0
    %v1416 = vpop.f32.mrb[0].mxu0
    %v1417 = vadd.f32 0.0, %v1416
    %v1418 = vpop.f32.mrb[0].mxu0
    %1419 = vmatprep.mubr.bf16.mxu0 0
    %1420 = vmatmul.mubr.bf16.gmra.mrb[0].mxu0 %v1074
    %v1421 = vpop.f32.mrb[0].mxu0
    %v1422 = vadd.f32 0.0, %v1421
    %v1423 = vpop.f32.mrb[0].mxu0
    %v1424 = vpop.f32.mrb[0].mxu0
    %v1425 = vadd.f32 0.0, %v1424
    %v1426 = vpop.f32.mrb[0].mxu0
    %1427 = vdwg.mxu0
    %1429 = vset.pattern.permute.xlu0 0
    %1430 = vperm.xlu0 %1429, %v915
    %v1431 = vpop.permute.xlu0 %1430
    %1434 = vset.pattern.permute.xlu0 0
    %1435 = vperm.xlu0 %1434, %v916
    %v1436 = vpop.permute.xlu0 %1435
    %1439 = vset.pattern.permute.xlu0 0
    %1440 = vperm.xlu0 %1439, %v917
    %v1441 = vpop.permute.xlu0 %1440
    %1444 = vset.pattern.permute.xlu0 0
    %1445 = vperm.xlu0 %1444, %v918
    %v1446 = vpop.permute.xlu0 %1445
    %1449 = vset.pattern.permute.xlu0 0
    %1450 = vperm.xlu0 %1449, %v919
    %v1451 = vpop.permute.xlu0 %1450
    %1454 = vset.pattern.permute.xlu0 0
    %1455 = vperm.xlu0 %1454, %v920
    %v1456 = vpop.permute.xlu0 %1455
    %1459 = vset.pattern.permute.xlu0 0
    %1460 = vperm.xlu0 %1459, %v921
    %v1461 = vpop.permute.xlu0 %1460
    %1464 = vset.pattern.permute.xlu0 0
    %1465 = vperm.xlu0 %1464, %v922
    %v1466 = vpop.permute.xlu0 %1465
    %1469 = vset.pattern.permute.xlu0 0
    %1470 = vperm.xlu0 %1469, %v923
    %v1471 = vpop.permute.xlu0 %1470
    %1474 = vset.pattern.permute.xlu0 0
    %1475 = vperm.xlu0 %1474, %v924
    %v1476 = vpop.permute.xlu0 %1475
    %1479 = vset.pattern.permute.xlu0 0
    %1480 = vperm.xlu0 %1479, %v925
    %v1481 = vpop.permute.xlu0 %1480
    %1484 = vset.pattern.permute.xlu0 0
    %1485 = vperm.xlu0 %1484, %v926
    %v1486 = vpop.permute.xlu0 %1485
    %1489 = vset.pattern.permute.xlu0 0
    %1490 = vperm.xlu0 %1489, %v927
    %v1491 = vpop.permute.xlu0 %1490
    %1494 = vset.pattern.permute.xlu0 0
    %1495 = vperm.xlu0 %1494, %v928
    %v1496 = vpop.permute.xlu0 %1495
    %1499 = vset.pattern.permute.xlu0 0
    %1500 = vperm.xlu0 %1499, %v929
    %v1501 = vpop.permute.xlu0 %1500
    %1504 = vset.pattern.permute.xlu0 0
    %1505 = vperm.xlu0 %1504, %v930
    %v1506 = vpop.permute.xlu0 %1505
    %1509 = vset.pattern.permute.xlu0 0
    %1510 = vperm.xlu0 %1509, %v931
    %v1511 = vpop.permute.xlu0 %1510
    %1514 = vset.pattern.permute.xlu0 0
    %1515 = vperm.xlu0 %1514, %v932
    %v1516 = vpop.permute.xlu0 %1515
    %1519 = vset.pattern.permute.xlu0 0
    %1520 = vperm.xlu0 %1519, %v933
    %v1521 = vpop.permute.xlu0 %1520
    %1524 = vset.pattern.permute.xlu0 0
    %1525 = vperm.xlu0 %1524, %v934
    %v1526 = vpop.permute.xlu0 %1525
    %1529 = vset.pattern.permute.xlu0 0
    %1530 = vperm.xlu0 %1529, %v935
    %v1531 = vpop.permute.xlu0 %1530
    %1534 = vset.pattern.permute.xlu0 0
    %1535 = vperm.xlu0 %1534, %v936
    %v1536 = vpop.permute.xlu0 %1535
    %1539 = vset.pattern.permute.xlu0 0
    %1540 = vperm.xlu0 %1539, %v937
    %v1541 = vpop.permute.xlu0 %1540
    %1544 = vset.pattern.permute.xlu0 0
    %1545 = vperm.xlu0 %1544, %v938
    %v1546 = vpop.permute.xlu0 %1545
    %1549 = vset.pattern.permute.xlu0 0
    %1550 = vperm.xlu0 %1549, %v939
    %v1551 = vpop.permute.xlu0 %1550
    %1554 = vset.pattern.permute.xlu0 0
    %1555 = vperm.xlu0 %1554, %v940
    %v1556 = vpop.permute.xlu0 %1555
    %1559 = vset.pattern.permute.xlu0 0
    %1560 = vperm.xlu0 %1559, %v941
    %v1561 = vpop.permute.xlu0 %1560
    %1564 = vset.pattern.permute.xlu0 0
    %1565 = vperm.xlu0 %1564, %v942
    %v1566 = vpop.permute.xlu0 %1565
    %1569 = vset.pattern.permute.xlu0 0
    %1570 = vperm.xlu0 %1569, %v943
    %v1571 = vpop.permute.xlu0 %1570
    %1574 = vset.pattern.permute.xlu0 0
    %1575 = vperm.xlu0 %1574, %v944
    %v1576 = vpop.permute.xlu0 %1575
    %1579 = vset.pattern.permute.xlu0 0
    %1580 = vperm.xlu0 %1579, %v945
    %v1581 = vpop.permute.xlu0 %1580
    %1584 = vset.pattern.permute.xlu0 0
    %1585 = vperm.xlu0 %1584, %v946
    %v1586 = vpop.permute.xlu0 %1585
    %1589 = vset.pattern.permute.xlu0 0
    %1590 = vperm.xlu0 %1589, %v947
    %v1591 = vpop.permute.xlu0 %1590
    %1594 = vset.pattern.permute.xlu0 0
    %1595 = vperm.xlu0 %1594, %v948
    %v1596 = vpop.permute.xlu0 %1595
    %1599 = vset.pattern.permute.xlu0 0
    %1600 = vperm.xlu0 %1599, %v949
    %v1601 = vpop.permute.xlu0 %1600
    %1604 = vset.pattern.permute.xlu0 0
    %1605 = vperm.xlu0 %1604, %v950
    %v1606 = vpop.permute.xlu0 %1605
    %1609 = vset.pattern.permute.xlu0 0
    %1610 = vperm.xlu0 %1609, %v951
    %v1611 = vpop.permute.xlu0 %1610
    %1614 = vset.pattern.permute.xlu0 0
    %1615 = vperm.xlu0 %1614, %v952
    %v1616 = vpop.permute.xlu0 %1615
    %1619 = vset.pattern.permute.xlu0 0
    %1620 = vperm.xlu0 %1619, %v953
    %v1621 = vpop.permute.xlu0 %1620
    %1624 = vset.pattern.permute.xlu0 0
    %1625 = vperm.xlu0 %1624, %v954
    %v1626 = vpop.permute.xlu0 %1625
    %1629 = vset.pattern.permute.xlu0 0
    %1630 = vperm.xlu0 %1629, %v955
    %v1631 = vpop.permute.xlu0 %1630
    %1634 = vset.pattern.permute.xlu0 0
    %1635 = vperm.xlu0 %1634, %v956
    %v1636 = vpop.permute.xlu0 %1635
    %1639 = vset.pattern.permute.xlu0 0
    %1640 = vperm.xlu0 %1639, %v957
    %v1641 = vpop.permute.xlu0 %1640
    %1644 = vset.pattern.permute.xlu0 0
    %1645 = vperm.xlu0 %1644, %v958
    %v1646 = vpop.permute.xlu0 %1645
    %1649 = vset.pattern.permute.xlu0 0
    %1650 = vperm.xlu0 %1649, %v959
    %v1651 = vpop.permute.xlu0 %1650
    %1654 = vset.pattern.permute.xlu0 0
    %1655 = vperm.xlu0 %1654, %v960
    %v1656 = vpop.permute.xlu0 %1655
    %1659 = vset.pattern.permute.xlu0 0
    %1660 = vperm.xlu0 %1659, %v961
    %v1661 = vpop.permute.xlu0 %1660
    %1664 = vset.pattern.permute.xlu0 0
    %1665 = vperm.xlu0 %1664, %v962
    %v1666 = vpop.permute.xlu0 %1665
    %1669 = vset.pattern.permute.xlu0 0
    %1670 = vperm.xlu0 %1669, %v963
    %v1671 = vpop.permute.xlu0 %1670
    %1674 = vset.pattern.permute.xlu0 0
    %1675 = vperm.xlu0 %1674, %v964
    %v1676 = vpop.permute.xlu0 %1675
    %1679 = vset.pattern.permute.xlu0 0
    %1680 = vperm.xlu0 %1679, %v965
    %v1681 = vpop.permute.xlu0 %1680
    %1684 = vset.pattern.permute.xlu0 0
    %1685 = vperm.xlu0 %1684, %v966
    %v1686 = vpop.permute.xlu0 %1685
    %1689 = vset.pattern.permute.xlu0 0
    %1690 = vperm.xlu0 %1689, %v967
    %v1691 = vpop.permute.xlu0 %1690
    %1694 = vset.pattern.permute.xlu0 0
    %1695 = vperm.xlu0 %1694, %v968
    %v1696 = vpop.permute.xlu0 %1695
    %1699 = vset.pattern.permute.xlu0 0
    %1700 = vperm.xlu0 %1699, %v969
    %v1701 = vpop.permute.xlu0 %1700
    %1704 = vset.pattern.permute.xlu0 0
    %1705 = vperm.xlu0 %1704, %v970
    %v1706 = vpop.permute.xlu0 %1705
    %1709 = vset.pattern.permute.xlu0 0
    %1710 = vperm.xlu0 %1709, %v971
    %v1711 = vpop.permute.xlu0 %1710
    %1714 = vset.pattern.permute.xlu0 0
    %1715 = vperm.xlu0 %1714, %v972
    %v1716 = vpop.permute.xlu0 %1715
    %1719 = vset.pattern.permute.xlu0 0
    %1720 = vperm.xlu0 %1719, %v973
    %v1721 = vpop.permute.xlu0 %1720
    %1724 = vset.pattern.permute.xlu0 0
    %1725 = vperm.xlu0 %1724, %v974
    %v1726 = vpop.permute.xlu0 %1725
    %1729 = vset.pattern.permute.xlu0 0
    %1730 = vperm.xlu0 %1729, %v975
    %v1731 = vpop.permute.xlu0 %1730
    %1734 = vset.pattern.permute.xlu0 0
    %1735 = vperm.xlu0 %1734, %v976
    %v1736 = vpop.permute.xlu0 %1735
    %1739 = vset.pattern.permute.xlu0 0
    %1740 = vperm.xlu0 %1739, %v977
    %v1741 = vpop.permute.xlu0 %1740
    %1744 = vset.pattern.permute.xlu0 0
    %1745 = vperm.xlu0 %1744, %v978
    %v1746 = vpop.permute.xlu0 %1745
    %v1748 = vmul.f32 %v1431, %v1174
    %v1749 = vmul.f32 %v1436, %v1177
    %v1750 = vmul.f32 %v1441, %v1182
    %v1751 = vmul.f32 %v1446, %v1185
    %v1752 = vmul.f32 %v1451, %v1190
    %v1753 = vmul.f32 %v1456, %v1193
    %v1754 = vmul.f32 %v1461, %v1198
    %v1755 = vmul.f32 %v1466, %v1201
    %v1756 = vmul.f32 %v1471, %v1206
    %v1757 = vmul.f32 %v1476, %v1209
    %v1758 = vmul.f32 %v1481, %v1214
    %v1759 = vmul.f32 %v1486, %v1217
    %v1760 = vmul.f32 %v1491, %v1222
    %v1761 = vmul.f32 %v1496, %v1225
    %v1762 = vmul.f32 %v1501, %v1230
    %v1763 = vmul.f32 %v1506, %v1233
    %v1764 = vmul.f32 %v1511, %v1238
    %v1765 = vmul.f32 %v1516, %v1241
    %v1766 = vmul.f32 %v1521, %v1246
    %v1767 = vmul.f32 %v1526, %v1249
    %v1768 = vmul.f32 %v1531, %v1254
    %v1769 = vmul.f32 %v1536, %v1257
    %v1770 = vmul.f32 %v1541, %v1262
    %v1771 = vmul.f32 %v1546, %v1265
    %v1772 = vmul.f32 %v1551, %v1270
    %v1773 = vmul.f32 %v1556, %v1273
    %v1774 = vmul.f32 %v1561, %v1278
    %v1775 = vmul.f32 %v1566, %v1281
    %v1776 = vmul.f32 %v1571, %v1286
    %v1777 = vmul.f32 %v1576, %v1289
    %v1778 = vmul.f32 %v1581, %v1294
    %v1779 = vmul.f32 %v1586, %v1297
    %v1780 = vmul.f32 %v1591, %v1302
    %v1781 = vmul.f32 %v1596, %v1305
    %v1782 = vmul.f32 %v1601, %v1310
    %v1783 = vmul.f32 %v1606, %v1313
    %v1784 = vmul.f32 %v1611, %v1318
    %v1785 = vmul.f32 %v1616, %v1321
    %v1786 = vmul.f32 %v1621, %v1326
    %v1787 = vmul.f32 %v1626, %v1329
    %v1788 = vmul.f32 %v1631, %v1334
    %v1789 = vmul.f32 %v1636, %v1337
    %v1790 = vmul.f32 %v1641, %v1342
    %v1791 = vmul.f32 %v1646, %v1345
    %v1792 = vmul.f32 %v1651, %v1350
    %v1793 = vmul.f32 %v1656, %v1353
    %v1794 = vmul.f32 %v1661, %v1358
    %v1795 = vmul.f32 %v1666, %v1361
    %v1796 = vmul.f32 %v1671, %v1366
    %v1797 = vmul.f32 %v1676, %v1369
    %v1798 = vmul.f32 %v1681, %v1374
    %v1799 = vmul.f32 %v1686, %v1377
    %v1800 = vmul.f32 %v1691, %v1382
    %v1801 = vmul.f32 %v1696, %v1385
    %v1802 = vmul.f32 %v1701, %v1390
    %v1803 = vmul.f32 %v1706, %v1393
    %v1804 = vmul.f32 %v1711, %v1398
    %v1805 = vmul.f32 %v1716, %v1401
    %v1806 = vmul.f32 %v1721, %v1406
    %v1807 = vmul.f32 %v1726, %v1409
    %v1808 = vmul.f32 %v1731, %v1414
    %v1809 = vmul.f32 %v1736, %v1417
    %v1810 = vmul.f32 %v1741, %v1422
    %v1811 = vmul.f32 %v1746, %v1425
    %v1812 = vpack.c.bf16 %v1749, %v1748
    %v1813 = vpack.c.bf16 %v1751, %v1750
    %v1814 = vpack.c.bf16 %v1753, %v1752
    %v1815 = vpack.c.bf16 %v1755, %v1754
    %v1816 = vpack.c.bf16 %v1757, %v1756
    %v1817 = vpack.c.bf16 %v1759, %v1758
    %v1818 = vpack.c.bf16 %v1761, %v1760
    %v1819 = vpack.c.bf16 %v1763, %v1762
    %v1820 = vpack.c.bf16 %v1765, %v1764
    %v1821 = vpack.c.bf16 %v1767, %v1766
    %v1822 = vpack.c.bf16 %v1769, %v1768
    %v1823 = vpack.c.bf16 %v1771, %v1770
    %v1824 = vpack.c.bf16 %v1773, %v1772
    %v1825 = vpack.c.bf16 %v1775, %v1774
    %v1826 = vpack.c.bf16 %v1777, %v1776
    %v1827 = vpack.c.bf16 %v1779, %v1778
    %v1828 = vpack.c.bf16 %v1781, %v1780
    %v1829 = vpack.c.bf16 %v1783, %v1782
    %v1830 = vpack.c.bf16 %v1785, %v1784
    %v1831 = vpack.c.bf16 %v1787, %v1786
    %v1832 = vpack.c.bf16 %v1789, %v1788
    %v1833 = vpack.c.bf16 %v1791, %v1790
    %v1834 = vpack.c.bf16 %v1793, %v1792
    %v1835 = vpack.c.bf16 %v1795, %v1794
    %v1836 = vpack.c.bf16 %v1797, %v1796
    %v1837 = vpack.c.bf16 %v1799, %v1798
    %v1838 = vpack.c.bf16 %v1801, %v1800
    %v1839 = vpack.c.bf16 %v1803, %v1802
    %v1840 = vpack.c.bf16 %v1805, %v1804
    %v1841 = vpack.c.bf16 %v1807, %v1806
    %v1842 = vpack.c.bf16 %v1809, %v1808
    %v1843 = vpack.c.bf16 %v1811, %v1810
    %1844 = vmatprep.subr.bf16.mxu0 0
    %1845 = vmatpush1.bf16.msra.mxu0 %v1812
    %1846 = vmatprep.subr.bf16.mxu0 0
    %1847 = vmatpush1.bf16.msra.mxu0 %v1813
    %1848 = vmatprep.subr.bf16.mxu0 0
    %1849 = vmatpush1.bf16.msra.mxu0 %v1814
    %1850 = vmatprep.subr.bf16.mxu0 0
    %1851 = vmatpush1.bf16.msra.mxu0 %v1815
    %1852 = vmatprep.subr.bf16.mxu0 0
    %1853 = vmatpush1.bf16.msra.mxu0 %v1816
    %1854 = vmatprep.subr.bf16.mxu0 0
    %1855 = vmatpush1.bf16.msra.mxu0 %v1817
    %1856 = vmatprep.subr.bf16.mxu0 0
    %1857 = vmatpush1.bf16.msra.mxu0 %v1818
    %1858 = vmatprep.subr.bf16.mxu0 0
    %1859 = vmatpush1.bf16.msra.mxu0 %v1819
    %1860 = vmatprep.subr.bf16.mxu0 0
    %1861 = vmatpush1.bf16.msra.mxu0 %v1820
    %1862 = vmatprep.subr.bf16.mxu0 0
    %1863 = vmatpush1.bf16.msra.mxu0 %v1821
    %1864 = vmatprep.subr.bf16.mxu0 0
    %1865 = vmatpush1.bf16.msra.mxu0 %v1822
    %1866 = vmatprep.subr.bf16.mxu0 0
    %1867 = vmatpush1.bf16.msra.mxu0 %v1823
    %1868 = vmatprep.subr.bf16.mxu0 0
    %1869 = vmatpush1.bf16.msra.mxu0 %v1824
    %1870 = vmatprep.subr.bf16.mxu0 0
    %1871 = vmatpush1.bf16.msra.mxu0 %v1825
    %1872 = vmatprep.subr.bf16.mxu0 0
    %1873 = vmatpush1.bf16.msra.mxu0 %v1826
    %1874 = vmatprep.subr.bf16.mxu0 0
    %1875 = vmatpush1.bf16.msra.mxu0 %v1827
    %1876 = vmatprep.mubr.bf16.mxu0 %v146
    %1877 = vmatmul.mubr.bf16.gmra.mrb[0].mxu0 %v145
    %v1878 = vpop.f32.mrb[0].mxu0
    %v1879 = vadd.f32 0.0, %v1878
    %v1880 = vpop.f32.mrb[0].mxu0
    %v1881 = vpop.f32.mrb[0].mxu0
    %v1882 = vadd.f32 0.0, %v1881
    %v1883 = vpop.f32.mrb[0].mxu0
    %1884 = vmatprep.mubr.bf16.mxu0 %v150
    %1885 = vmatmul.mubr.bf16.gmra.mrb[0].mxu0 %v149
    %v1886 = vpop.f32.mrb[0].mxu0
    %v1887 = vadd.f32 0.0, %v1886
    %v1888 = vpop.f32.mrb[0].mxu0
    %v1889 = vpop.f32.mrb[0].mxu0
    %v1890 = vadd.f32 0.0, %v1889
    %v1891 = vpop.f32.mrb[0].mxu0
    %1892 = vmatprep.mubr.bf16.mxu0 %v154
    %1893 = vmatmul.mubr.bf16.gmra.mrb[0].mxu0 %v153
    %v1894 = vpop.f32.mrb[0].mxu0
    %v1895 = vadd.f32 0.0, %v1894
    %v1896 = vpop.f32.mrb[0].mxu0
    %v1897 = vpop.f32.mrb[0].mxu0
    %v1898 = vadd.f32 0.0, %v1897
    %v1899 = vpop.f32.mrb[0].mxu0
    %1900 = vmatprep.mubr.bf16.mxu0 %v158
    %1901 = vmatmul.mubr.bf16.gmra.mrb[0].mxu0 %v157
    %v1902 = vpop.f32.mrb[0].mxu0
    %v1903 = vadd.f32 0.0, %v1902
    %v1904 = vpop.f32.mrb[0].mxu0
    %v1905 = vpop.f32.mrb[0].mxu0
    %v1906 = vadd.f32 0.0, %v1905
    %v1907 = vpop.f32.mrb[0].mxu0
    %1908 = vmatprep.mubr.bf16.mxu0 %v162
    %1909 = vmatmul.mubr.bf16.gmra.mrb[0].mxu0 %v161
    %v1910 = vpop.f32.mrb[0].mxu0
    %v1911 = vadd.f32 0.0, %v1910
    %v1912 = vpop.f32.mrb[0].mxu0
    %v1913 = vpop.f32.mrb[0].mxu0
    %v1914 = vadd.f32 0.0, %v1913
    %v1915 = vpop.f32.mrb[0].mxu0
    %1916 = vmatprep.mubr.bf16.mxu0 %v166
    %1917 = vmatmul.mubr.bf16.gmra.mrb[0].mxu0 %v165
    %v1918 = vpop.f32.mrb[0].mxu0
    %v1919 = vadd.f32 0.0, %v1918
    %v1920 = vpop.f32.mrb[0].mxu0
    %v1921 = vpop.f32.mrb[0].mxu0
    %v1922 = vadd.f32 0.0, %v1921
    %v1923 = vpop.f32.mrb[0].mxu0
    %1924 = vmatprep.mubr.bf16.mxu0 %v170
    %1925 = vmatmul.mubr.bf16.gmra.mrb[0].mxu0 %v169
    %v1926 = vpop.f32.mrb[0].mxu0
    %v1927 = vadd.f32 0.0, %v1926
    %v1928 = vpop.f32.mrb[0].mxu0
    %v1929 = vpop.f32.mrb[0].mxu0
    %v1930 = vadd.f32 0.0, %v1929
    %v1931 = vpop.f32.mrb[0].mxu0
    %1932 = vmatprep.mubr.bf16.mxu0 %v174
    %1933 = vmatmul.mubr.bf16.gmra.mrb[0].mxu0 %v173
    %v1934 = vpop.f32.mrb[0].mxu0
    %v1935 = vadd.f32 0.0, %v1934
    %v1936 = vpop.f32.mrb[0].mxu0
    %v1937 = vpop.f32.mrb[0].mxu0
    %v1938 = vadd.f32 0.0, %v1937
    %v1939 = vpop.f32.mrb[0].mxu0
    %1940 = vmatprep.mubr.bf16.mxu0 %v178
    %1941 = vmatmul.mubr.bf16.gmra.mrb[0].mxu0 %v177
    %v1942 = vpop.f32.mrb[0].mxu0
    %v1943 = vadd.f32 0.0, %v1942
    %v1944 = vpop.f32.mrb[0].mxu0
    %v1945 = vpop.f32.mrb[0].mxu0
    %v1946 = vadd.f32 0.0, %v1945
    %v1947 = vpop.f32.mrb[0].mxu0
    %1948 = vmatprep.mubr.bf16.mxu0 %v182
    %1949 = vmatmul.mubr.bf16.gmra.mrb[0].mxu0 %v181
    %v1950 = vpop.f32.mrb[0].mxu0
    %v1951 = vadd.f32 0.0, %v1950
    %v1952 = vpop.f32.mrb[0].mxu0
    %v1953 = vpop.f32.mrb[0].mxu0
    %v1954 = vadd.f32 0.0, %v1953
    %v1955 = vpop.f32.mrb[0].mxu0
    %1956 = vmatprep.mubr.bf16.mxu0 %v186
    %1957 = vmatmul.mubr.bf16.gmra.mrb[0].mxu0 %v185
    %v1958 = vpop.f32.mrb[0].mxu0
    %v1959 = vadd.f32 0.0, %v1958
    %v1960 = vpop.f32.mrb[0].mxu0
    %v1961 = vpop.f32.mrb[0].mxu0
    %v1962 = vadd.f32 0.0, %v1961
    %v1963 = vpop.f32.mrb[0].mxu0
    %1964 = vmatprep.mubr.bf16.mxu0 %v190
    %1965 = vmatmul.mubr.bf16.gmra.mrb[0].mxu0 %v189
    %v1966 = vpop.f32.mrb[0].mxu0
    %v1967 = vadd.f32 0.0, %v1966
    %v1968 = vpop.f32.mrb[0].mxu0
    %v1969 = vpop.f32.mrb[0].mxu0
    %v1970 = vadd.f32 0.0, %v1969
    %v1971 = vpop.f32.mrb[0].mxu0
    %1972 = vmatprep.mubr.bf16.mxu0 %v194
    %1973 = vmatmul.mubr.bf16.gmra.mrb[0].mxu0 %v193
    %v1974 = vpop.f32.mrb[0].mxu0
    %v1975 = vadd.f32 0.0, %v1974
    %v1976 = vpop.f32.mrb[0].mxu0
    %v1977 = vpop.f32.mrb[0].mxu0
    %v1978 = vadd.f32 0.0, %v1977
    %v1979 = vpop.f32.mrb[0].mxu0
    %1980 = vmatprep.mubr.bf16.mxu0 %v198
    %1981 = vmatmul.mubr.bf16.gmra.mrb[0].mxu0 %v197
    %v1982 = vpop.f32.mrb[0].mxu0
    %v1983 = vadd.f32 0.0, %v1982
    %v1984 = vpop.f32.mrb[0].mxu0
    %v1985 = vpop.f32.mrb[0].mxu0
    %v1986 = vadd.f32 0.0, %v1985
    %v1987 = vpop.f32.mrb[0].mxu0
    %1988 = vmatprep.mubr.bf16.mxu0 %v202
    %1989 = vmatmul.mubr.bf16.gmra.mrb[0].mxu0 %v201
    %v1990 = vpop.f32.mrb[0].mxu0
    %v1991 = vadd.f32 0.0, %v1990
    %v1992 = vpop.f32.mrb[0].mxu0
    %v1993 = vpop.f32.mrb[0].mxu0
    %v1994 = vadd.f32 0.0, %v1993
    %v1995 = vpop.f32.mrb[0].mxu0
    %1996 = vmatprep.mubr.bf16.mxu0 %v206
    %1997 = vmatmul.mubr.bf16.gmra.mrb[0].mxu0 %v205
    %v1998 = vpop.f32.mrb[0].mxu0
    %v1999 = vadd.f32 0.0, %v1998
    %v2000 = vpop.f32.mrb[0].mxu0
    %v2001 = vpop.f32.mrb[0].mxu0
    %v2002 = vadd.f32 0.0, %v2001
    %v2003 = vpop.f32.mrb[0].mxu0
    %2004 = vmatprep.mubr.bf16.mxu0 %v210
    %2005 = vmatmul.mubr.bf16.gmra.mrb[0].mxu0 %v209
    %v2006 = vpop.f32.mrb[0].mxu0
    %v2007 = vadd.f32 0.0, %v2006
    %v2008 = vpop.f32.mrb[0].mxu0
    %v2009 = vpop.f32.mrb[0].mxu0
    %v2010 = vadd.f32 0.0, %v2009
    %v2011 = vpop.f32.mrb[0].mxu0
    %2012 = vmatprep.mubr.bf16.mxu0 %v214
    %2013 = vmatmul.mubr.bf16.gmra.mrb[0].mxu0 %v213
    %v2014 = vpop.f32.mrb[0].mxu0
    %v2015 = vadd.f32 0.0, %v2014
    %v2016 = vpop.f32.mrb[0].mxu0
    %v2017 = vpop.f32.mrb[0].mxu0
    %v2018 = vadd.f32 0.0, %v2017
    %v2019 = vpop.f32.mrb[0].mxu0
    %2020 = vmatprep.mubr.bf16.mxu0 %v218
    %2021 = vmatmul.mubr.bf16.gmra.mrb[0].mxu0 %v217
    %v2022 = vpop.f32.mrb[0].mxu0
    %v2023 = vadd.f32 0.0, %v2022
    %v2024 = vpop.f32.mrb[0].mxu0
    %v2025 = vpop.f32.mrb[0].mxu0
    %v2026 = vadd.f32 0.0, %v2025
    %v2027 = vpop.f32.mrb[0].mxu0
    %2028 = vmatprep.mubr.bf16.mxu0 %v222
    %2029 = vmatmul.mubr.bf16.gmra.mrb[0].mxu0 %v221
    %v2030 = vpop.f32.mrb[0].mxu0
    %v2031 = vadd.f32 0.0, %v2030
    %v2032 = vpop.f32.mrb[0].mxu0
    %v2033 = vpop.f32.mrb[0].mxu0
    %v2034 = vadd.f32 0.0, %v2033
    %v2035 = vpop.f32.mrb[0].mxu0
    %2036 = vmatprep.mubr.bf16.mxu0 %v226
    %2037 = vmatmul.mubr.bf16.gmra.mrb[0].mxu0 %v225
    %v2038 = vpop.f32.mrb[0].mxu0
    %v2039 = vadd.f32 0.0, %v2038
    %v2040 = vpop.f32.mrb[0].mxu0
    %v2041 = vpop.f32.mrb[0].mxu0
    %v2042 = vadd.f32 0.0, %v2041
    %v2043 = vpop.f32.mrb[0].mxu0
    %2044 = vmatprep.mubr.bf16.mxu0 %v230
    %2045 = vmatmul.mubr.bf16.gmra.mrb[0].mxu0 %v229
    %v2046 = vpop.f32.mrb[0].mxu0
    %v2047 = vadd.f32 0.0, %v2046
    %v2048 = vpop.f32.mrb[0].mxu0
    %v2049 = vpop.f32.mrb[0].mxu0
    %v2050 = vadd.f32 0.0, %v2049
    %v2051 = vpop.f32.mrb[0].mxu0
    %2052 = vmatprep.mubr.bf16.mxu0 %v234
    %2053 = vmatmul.mubr.bf16.gmra.mrb[0].mxu0 %v233
    %v2054 = vpop.f32.mrb[0].mxu0
    %v2055 = vadd.f32 0.0, %v2054
    %v2056 = vpop.f32.mrb[0].mxu0
    %v2057 = vpop.f32.mrb[0].mxu0
    %v2058 = vadd.f32 0.0, %v2057
    %v2059 = vpop.f32.mrb[0].mxu0
    %2060 = vmatprep.mubr.bf16.mxu0 %v238
    %2061 = vmatmul.mubr.bf16.gmra.mrb[0].mxu0 %v237
    %v2062 = vpop.f32.mrb[0].mxu0
    %v2063 = vadd.f32 0.0, %v2062
    %v2064 = vpop.f32.mrb[0].mxu0
    %v2065 = vpop.f32.mrb[0].mxu0
    %v2066 = vadd.f32 0.0, %v2065
    %v2067 = vpop.f32.mrb[0].mxu0
    %2068 = vmatprep.mubr.bf16.mxu0 %v242
    %2069 = vmatmul.mubr.bf16.gmra.mrb[0].mxu0 %v241
    %v2070 = vpop.f32.mrb[0].mxu0
    %v2071 = vadd.f32 0.0, %v2070
    %v2072 = vpop.f32.mrb[0].mxu0
    %v2073 = vpop.f32.mrb[0].mxu0
    %v2074 = vadd.f32 0.0, %v2073
    %v2075 = vpop.f32.mrb[0].mxu0
    %2076 = vmatprep.mubr.bf16.mxu0 %v246
    %2077 = vmatmul.mubr.bf16.gmra.mrb[0].mxu0 %v245
    %v2078 = vpop.f32.mrb[0].mxu0
    %v2079 = vadd.f32 0.0, %v2078
    %v2080 = vpop.f32.mrb[0].mxu0
    %v2081 = vpop.f32.mrb[0].mxu0
    %v2082 = vadd.f32 0.0, %v2081
    %v2083 = vpop.f32.mrb[0].mxu0
    %2084 = vmatprep.mubr.bf16.mxu0 %v250
    %2085 = vmatmul.mubr.bf16.gmra.mrb[0].mxu0 %v249
    %v2086 = vpop.f32.mrb[0].mxu0
    %v2087 = vadd.f32 0.0, %v2086
    %v2088 = vpop.f32.mrb[0].mxu0
    %v2089 = vpop.f32.mrb[0].mxu0
    %v2090 = vadd.f32 0.0, %v2089
    %v2091 = vpop.f32.mrb[0].mxu0
    %2092 = vmatprep.mubr.bf16.mxu0 %v254
    %2093 = vmatmul.mubr.bf16.gmra.mrb[0].mxu0 %v253
    %v2094 = vpop.f32.mrb[0].mxu0
    %v2095 = vadd.f32 0.0, %v2094
    %v2096 = vpop.f32.mrb[0].mxu0
    %v2097 = vpop.f32.mrb[0].mxu0
    %v2098 = vadd.f32 0.0, %v2097
    %v2099 = vpop.f32.mrb[0].mxu0
    %2100 = vmatprep.mubr.bf16.mxu0 %v258
    %2101 = vmatmul.mubr.bf16.gmra.mrb[0].mxu0 %v257
    %v2102 = vpop.f32.mrb[0].mxu0
    %v2103 = vadd.f32 0.0, %v2102
    %v2104 = vpop.f32.mrb[0].mxu0
    %v2105 = vpop.f32.mrb[0].mxu0
    %v2106 = vadd.f32 0.0, %v2105
    %v2107 = vpop.f32.mrb[0].mxu0
    %2108 = vmatprep.mubr.bf16.mxu0 %v262
    %2109 = vmatmul.mubr.bf16.gmra.mrb[0].mxu0 %v261
    %v2110 = vpop.f32.mrb[0].mxu0
    %v2111 = vadd.f32 0.0, %v2110
    %v2112 = vpop.f32.mrb[0].mxu0
    %v2113 = vpop.f32.mrb[0].mxu0
    %v2114 = vadd.f32 0.0, %v2113
    %v2115 = vpop.f32.mrb[0].mxu0
    %2116 = vmatprep.mubr.bf16.mxu0 %v266
    %2117 = vmatmul.mubr.bf16.gmra.mrb[0].mxu0 %v265
    %v2118 = vpop.f32.mrb[0].mxu0
    %v2119 = vadd.f32 0.0, %v2118
    %v2120 = vpop.f32.mrb[0].mxu0
    %v2121 = vpop.f32.mrb[0].mxu0
    %v2122 = vadd.f32 0.0, %v2121
    %v2123 = vpop.f32.mrb[0].mxu0
    %2124 = vmatprep.mubr.bf16.mxu0 %v270
    %2125 = vmatmul.mubr.bf16.gmra.mrb[0].mxu0 %v269
    %v2126 = vpop.f32.mrb[0].mxu0
    %v2127 = vadd.f32 0.0, %v2126
    %v2128 = vpop.f32.mrb[0].mxu0
    %v2129 = vpop.f32.mrb[0].mxu0
    %v2130 = vadd.f32 0.0, %v2129
    %v2131 = vpop.f32.mrb[0].mxu0
    %2132 = vdwg.mxu0
    %2133 = vmatprep.subr.bf16.mxu0 0
    %2134 = vmatpush1.bf16.msra.mxu0 %v1828
    %2135 = vmatprep.subr.bf16.mxu0 0
    %2136 = vmatpush1.bf16.msra.mxu0 %v1829
    %2137 = vmatprep.subr.bf16.mxu0 0
    %2138 = vmatpush1.bf16.msra.mxu0 %v1830
    %2139 = vmatprep.subr.bf16.mxu0 0
    %2140 = vmatpush1.bf16.msra.mxu0 %v1831
    %2141 = vmatprep.subr.bf16.mxu0 0
    %2142 = vmatpush1.bf16.msra.mxu0 %v1832
    %2143 = vmatprep.subr.bf16.mxu0 0
    %2144 = vmatpush1.bf16.msra.mxu0 %v1833
    %2145 = vmatprep.subr.bf16.mxu0 0
    %2146 = vmatpush1.bf16.msra.mxu0 %v1834
    %2147 = vmatprep.subr.bf16.mxu0 0
    %2148 = vmatpush1.bf16.msra.mxu0 %v1835
    %2149 = vmatprep.subr.bf16.mxu0 0
    %2150 = vmatpush1.bf16.msra.mxu0 %v1836
    %2151 = vmatprep.subr.bf16.mxu0 0
    %2152 = vmatpush1.bf16.msra.mxu0 %v1837
    %2153 = vmatprep.subr.bf16.mxu0 0
    %2154 = vmatpush1.bf16.msra.mxu0 %v1838
    %2155 = vmatprep.subr.bf16.mxu0 0
    %2156 = vmatpush1.bf16.msra.mxu0 %v1839
    %2157 = vmatprep.subr.bf16.mxu0 0
    %2158 = vmatpush1.bf16.msra.mxu0 %v1840
    %2159 = vmatprep.subr.bf16.mxu0 0
    %2160 = vmatpush1.bf16.msra.mxu0 %v1841
    %2161 = vmatprep.subr.bf16.mxu0 0
    %2162 = vmatpush1.bf16.msra.mxu0 %v1842
    %2163 = vmatprep.subr.bf16.mxu0 0
    %2164 = vmatpush1.bf16.msra.mxu0 %v1843
    %2165 = vmatprep.mubr.bf16.mxu0 %v148
    %2166 = vmatmul.mubr.bf16.gmra.mrb[0].mxu0 %v147
    %v2167 = vpop.f32.mrb[0].mxu0
    %v2168 = vadd.f32 %v1879, %v2167
    %v2169 = vpop.f32.mrb[0].mxu0
    %v2170 = vpop.f32.mrb[0].mxu0
    %v2171 = vadd.f32 %v1882, %v2170
    %v2172 = vpop.f32.mrb[0].mxu0
    %2173 = vmatprep.mubr.bf16.mxu0 %v152
    %2174 = vmatmul.mubr.bf16.gmra.mrb[0].mxu0 %v151
    %v2175 = vpop.f32.mrb[0].mxu0
    %v2176 = vadd.f32 %v1887, %v2175
    %v2177 = vpop.f32.mrb[0].mxu0
    %v2178 = vpop.f32.mrb[0].mxu0
    %v2179 = vadd.f32 %v1890, %v2178
    %v2180 = vpop.f32.mrb[0].mxu0
    %2181 = vmatprep.mubr.bf16.mxu0 %v156
    %2182 = vmatmul.mubr.bf16.gmra.mrb[0].mxu0 %v155
    %v2183 = vpop.f32.mrb[0].mxu0
    %v2184 = vadd.f32 %v1895, %v2183
    %v2185 = vpop.f32.mrb[0].mxu0
    %v2186 = vpop.f32.mrb[0].mxu0
    %v2187 = vadd.f32 %v1898, %v2186
    %v2188 = vpop.f32.mrb[0].mxu0
    %2189 = vmatprep.mubr.bf16.mxu0 %v160
    %2190 = vmatmul.mubr.bf16.gmra.mrb[0].mxu0 %v159
    %v2191 = vpop.f32.mrb[0].mxu0
    %v2192 = vadd.f32 %v1903, %v2191
    %v2193 = vpop.f32.mrb[0].mxu0
    %v2194 = vpop.f32.mrb[0].mxu0
    %v2195 = vadd.f32 %v1906, %v2194
    %v2196 = vpop.f32.mrb[0].mxu0
    %2197 = vmatprep.mubr.bf16.mxu0 %v164
    %2198 = vmatmul.mubr.bf16.gmra.mrb[0].mxu0 %v163
    %v2199 = vpop.f32.mrb[0].mxu0
    %v2200 = vadd.f32 %v1911, %v2199
    %v2201 = vpop.f32.mrb[0].mxu0
    %v2202 = vpop.f32.mrb[0].mxu0
    %v2203 = vadd.f32 %v1914, %v2202
    %v2204 = vpop.f32.mrb[0].mxu0
    %2205 = vmatprep.mubr.bf16.mxu0 %v168
    %2206 = vmatmul.mubr.bf16.gmra.mrb[0].mxu0 %v167
    %v2207 = vpop.f32.mrb[0].mxu0
    %v2208 = vadd.f32 %v1919, %v2207
    %v2209 = vpop.f32.mrb[0].mxu0
    %v2210 = vpop.f32.mrb[0].mxu0
    %v2211 = vadd.f32 %v1922, %v2210
    %v2212 = vpop.f32.mrb[0].mxu0
    %2213 = vmatprep.mubr.bf16.mxu0 %v172
    %2214 = vmatmul.mubr.bf16.gmra.mrb[0].mxu0 %v171
    %v2215 = vpop.f32.mrb[0].mxu0
    %v2216 = vadd.f32 %v1927, %v2215
    %v2217 = vpop.f32.mrb[0].mxu0
    %v2218 = vpop.f32.mrb[0].mxu0
    %v2219 = vadd.f32 %v1930, %v2218
    %v2220 = vpop.f32.mrb[0].mxu0
    %2221 = vmatprep.mubr.bf16.mxu0 %v176
    %2222 = vmatmul.mubr.bf16.gmra.mrb[0].mxu0 %v175
    %v2223 = vpop.f32.mrb[0].mxu0
    %v2224 = vadd.f32 %v1935, %v2223
    %v2225 = vpop.f32.mrb[0].mxu0
    %v2226 = vpop.f32.mrb[0].mxu0
    %v2227 = vadd.f32 %v1938, %v2226
    %v2228 = vpop.f32.mrb[0].mxu0
    %2229 = vmatprep.mubr.bf16.mxu0 %v180
    %2230 = vmatmul.mubr.bf16.gmra.mrb[0].mxu0 %v179
    %v2231 = vpop.f32.mrb[0].mxu0
    %v2232 = vadd.f32 %v1943, %v2231
    %v2233 = vpop.f32.mrb[0].mxu0
    %v2234 = vpop.f32.mrb[0].mxu0
    %v2235 = vadd.f32 %v1946, %v2234
    %v2236 = vpop.f32.mrb[0].mxu0
    %2237 = vmatprep.mubr.bf16.mxu0 %v184
    %2238 = vmatmul.mubr.bf16.gmra.mrb[0].mxu0 %v183
    %v2239 = vpop.f32.mrb[0].mxu0
    %v2240 = vadd.f32 %v1951, %v2239
    %v2241 = vpop.f32.mrb[0].mxu0
    %v2242 = vpop.f32.mrb[0].mxu0
    %v2243 = vadd.f32 %v1954, %v2242
    %v2244 = vpop.f32.mrb[0].mxu0
    %2245 = vmatprep.mubr.bf16.mxu0 %v188
    %2246 = vmatmul.mubr.bf16.gmra.mrb[0].mxu0 %v187
    %v2247 = vpop.f32.mrb[0].mxu0
    %v2248 = vadd.f32 %v1959, %v2247
    %v2249 = vpop.f32.mrb[0].mxu0
    %v2250 = vpop.f32.mrb[0].mxu0
    %v2251 = vadd.f32 %v1962, %v2250
    %v2252 = vpop.f32.mrb[0].mxu0
    %2253 = vmatprep.mubr.bf16.mxu0 %v192
    %2254 = vmatmul.mubr.bf16.gmra.mrb[0].mxu0 %v191
    %v2255 = vpop.f32.mrb[0].mxu0
    %v2256 = vadd.f32 %v1967, %v2255
    %v2257 = vpop.f32.mrb[0].mxu0
    %v2258 = vpop.f32.mrb[0].mxu0
    %v2259 = vadd.f32 %v1970, %v2258
    %v2260 = vpop.f32.mrb[0].mxu0
    %2261 = vmatprep.mubr.bf16.mxu0 %v196
    %2262 = vmatmul.mubr.bf16.gmra.mrb[0].mxu0 %v195
    %v2263 = vpop.f32.mrb[0].mxu0
    %v2264 = vadd.f32 %v1975, %v2263
    %v2265 = vpop.f32.mrb[0].mxu0
    %v2266 = vpop.f32.mrb[0].mxu0
    %v2267 = vadd.f32 %v1978, %v2266
    %v2268 = vpop.f32.mrb[0].mxu0
    %2269 = vmatprep.mubr.bf16.mxu0 %v200
    %2270 = vmatmul.mubr.bf16.gmra.mrb[0].mxu0 %v199
    %v2271 = vpop.f32.mrb[0].mxu0
    %v2272 = vadd.f32 %v1983, %v2271
    %v2273 = vpop.f32.mrb[0].mxu0
    %v2274 = vpop.f32.mrb[0].mxu0
    %v2275 = vadd.f32 %v1986, %v2274
    %v2276 = vpop.f32.mrb[0].mxu0
    %2277 = vmatprep.mubr.bf16.mxu0 %v204
    %2278 = vmatmul.mubr.bf16.gmra.mrb[0].mxu0 %v203
    %v2279 = vpop.f32.mrb[0].mxu0
    %v2280 = vadd.f32 %v1991, %v2279
    %v2281 = vpop.f32.mrb[0].mxu0
    %v2282 = vpop.f32.mrb[0].mxu0
    %v2283 = vadd.f32 %v1994, %v2282
    %v2284 = vpop.f32.mrb[0].mxu0
    %2285 = vmatprep.mubr.bf16.mxu0 %v208
    %2286 = vmatmul.mubr.bf16.gmra.mrb[0].mxu0 %v207
    %v2287 = vpop.f32.mrb[0].mxu0
    %v2288 = vadd.f32 %v1999, %v2287
    %v2289 = vpop.f32.mrb[0].mxu0
    %v2290 = vpop.f32.mrb[0].mxu0
    %v2291 = vadd.f32 %v2002, %v2290
    %v2292 = vpop.f32.mrb[0].mxu0
    %2293 = vmatprep.mubr.bf16.mxu0 %v212
    %2294 = vmatmul.mubr.bf16.gmra.mrb[0].mxu0 %v211
    %v2295 = vpop.f32.mrb[0].mxu0
    %v2296 = vadd.f32 %v2007, %v2295
    %v2297 = vpop.f32.mrb[0].mxu0
    %v2298 = vpop.f32.mrb[0].mxu0
    %v2299 = vadd.f32 %v2010, %v2298
    %v2300 = vpop.f32.mrb[0].mxu0
    %2301 = vmatprep.mubr.bf16.mxu0 %v216
    %2302 = vmatmul.mubr.bf16.gmra.mrb[0].mxu0 %v215
    %v2303 = vpop.f32.mrb[0].mxu0
    %v2304 = vadd.f32 %v2015, %v2303
    %v2305 = vpop.f32.mrb[0].mxu0
    %v2306 = vpop.f32.mrb[0].mxu0
    %v2307 = vadd.f32 %v2018, %v2306
    %v2308 = vpop.f32.mrb[0].mxu0
    %2309 = vmatprep.mubr.bf16.mxu0 %v220
    %2310 = vmatmul.mubr.bf16.gmra.mrb[0].mxu0 %v219
    %v2311 = vpop.f32.mrb[0].mxu0
    %v2312 = vadd.f32 %v2023, %v2311
    %v2313 = vpop.f32.mrb[0].mxu0
    %v2314 = vpop.f32.mrb[0].mxu0
    %v2315 = vadd.f32 %v2026, %v2314
    %v2316 = vpop.f32.mrb[0].mxu0
    %2317 = vmatprep.mubr.bf16.mxu0 %v224
    %2318 = vmatmul.mubr.bf16.gmra.mrb[0].mxu0 %v223
    %v2319 = vpop.f32.mrb[0].mxu0
    %v2320 = vadd.f32 %v2031, %v2319
    %v2321 = vpop.f32.mrb[0].mxu0
    %v2322 = vpop.f32.mrb[0].mxu0
    %v2323 = vadd.f32 %v2034, %v2322
    %v2324 = vpop.f32.mrb[0].mxu0
    %2325 = vmatprep.mubr.bf16.mxu0 %v228
    %2326 = vmatmul.mubr.bf16.gmra.mrb[0].mxu0 %v227
    %v2327 = vpop.f32.mrb[0].mxu0
    %v2328 = vadd.f32 %v2039, %v2327
    %v2329 = vpop.f32.mrb[0].mxu0
    %v2330 = vpop.f32.mrb[0].mxu0
    %v2331 = vadd.f32 %v2042, %v2330
    %v2332 = vpop.f32.mrb[0].mxu0
    %2333 = vmatprep.mubr.bf16.mxu0 %v232
    %2334 = vmatmul.mubr.bf16.gmra.mrb[0].mxu0 %v231
    %v2335 = vpop.f32.mrb[0].mxu0
    %v2336 = vadd.f32 %v2047, %v2335
    %v2337 = vpop.f32.mrb[0].mxu0
    %v2338 = vpop.f32.mrb[0].mxu0
    %v2339 = vadd.f32 %v2050, %v2338
    %v2340 = vpop.f32.mrb[0].mxu0
    %2341 = vmatprep.mubr.bf16.mxu0 %v236
    %2342 = vmatmul.mubr.bf16.gmra.mrb[0].mxu0 %v235
    %v2343 = vpop.f32.mrb[0].mxu0
    %v2344 = vadd.f32 %v2055, %v2343
    %v2345 = vpop.f32.mrb[0].mxu0
    %v2346 = vpop.f32.mrb[0].mxu0
    %v2347 = vadd.f32 %v2058, %v2346
    %v2348 = vpop.f32.mrb[0].mxu0
    %2349 = vmatprep.mubr.bf16.mxu0 %v240
    %2350 = vmatmul.mubr.bf16.gmra.mrb[0].mxu0 %v239
    %v2351 = vpop.f32.mrb[0].mxu0
    %v2352 = vadd.f32 %v2063, %v2351
    %v2353 = vpop.f32.mrb[0].mxu0
    %v2354 = vpop.f32.mrb[0].mxu0
    %v2355 = vadd.f32 %v2066, %v2354
    %v2356 = vpop.f32.mrb[0].mxu0
    %2357 = vmatprep.mubr.bf16.mxu0 %v244
    %2358 = vmatmul.mubr.bf16.gmra.mrb[0].mxu0 %v243
    %v2359 = vpop.f32.mrb[0].mxu0
    %v2360 = vadd.f32 %v2071, %v2359
    %v2361 = vpop.f32.mrb[0].mxu0
    %v2362 = vpop.f32.mrb[0].mxu0
    %v2363 = vadd.f32 %v2074, %v2362
    %v2364 = vpop.f32.mrb[0].mxu0
    %2365 = vmatprep.mubr.bf16.mxu0 %v248
    %2366 = vmatmul.mubr.bf16.gmra.mrb[0].mxu0 %v247
    %v2367 = vpop.f32.mrb[0].mxu0
    %v2368 = vadd.f32 %v2079, %v2367
    %v2369 = vpop.f32.mrb[0].mxu0
    %v2370 = vpop.f32.mrb[0].mxu0
    %v2371 = vadd.f32 %v2082, %v2370
    %v2372 = vpop.f32.mrb[0].mxu0
    %2373 = vmatprep.mubr.bf16.mxu0 %v252
    %2374 = vmatmul.mubr.bf16.gmra.mrb[0].mxu0 %v251
    %v2375 = vpop.f32.mrb[0].mxu0
    %v2376 = vadd.f32 %v2087, %v2375
    %v2377 = vpop.f32.mrb[0].mxu0
    %v2378 = vpop.f32.mrb[0].mxu0
    %v2379 = vadd.f32 %v2090, %v2378
    %v2380 = vpop.f32.mrb[0].mxu0
    %2381 = vmatprep.mubr.bf16.mxu0 %v256
    %2382 = vmatmul.mubr.bf16.gmra.mrb[0].mxu0 %v255
    %v2383 = vpop.f32.mrb[0].mxu0
    %v2384 = vadd.f32 %v2095, %v2383
    %v2385 = vpop.f32.mrb[0].mxu0
    %v2386 = vpop.f32.mrb[0].mxu0
    %v2387 = vadd.f32 %v2098, %v2386
    %v2388 = vpop.f32.mrb[0].mxu0
    %2389 = vmatprep.mubr.bf16.mxu0 %v260
    %2390 = vmatmul.mubr.bf16.gmra.mrb[0].mxu0 %v259
    %v2391 = vpop.f32.mrb[0].mxu0
    %v2392 = vadd.f32 %v2103, %v2391
    %v2393 = vpop.f32.mrb[0].mxu0
    %v2394 = vpop.f32.mrb[0].mxu0
    %v2395 = vadd.f32 %v2106, %v2394
    %v2396 = vpop.f32.mrb[0].mxu0
    %2397 = vmatprep.mubr.bf16.mxu0 %v264
    %2398 = vmatmul.mubr.bf16.gmra.mrb[0].mxu0 %v263
    %v2399 = vpop.f32.mrb[0].mxu0
    %v2400 = vadd.f32 %v2111, %v2399
    %v2401 = vpop.f32.mrb[0].mxu0
    %v2402 = vpop.f32.mrb[0].mxu0
    %v2403 = vadd.f32 %v2114, %v2402
    %v2404 = vpop.f32.mrb[0].mxu0
    %2405 = vmatprep.mubr.bf16.mxu0 %v268
    %2406 = vmatmul.mubr.bf16.gmra.mrb[0].mxu0 %v267
    %v2407 = vpop.f32.mrb[0].mxu0
    %v2408 = vadd.f32 %v2119, %v2407
    %v2409 = vpop.f32.mrb[0].mxu0
    %v2410 = vpop.f32.mrb[0].mxu0
    %v2411 = vadd.f32 %v2122, %v2410
    %v2412 = vpop.f32.mrb[0].mxu0
    %2413 = vmatprep.mubr.bf16.mxu0 %v272
    %2414 = vmatmul.mubr.bf16.gmra.mrb[0].mxu0 %v271
    %v2415 = vpop.f32.mrb[0].mxu0
    %v2416 = vadd.f32 %v2127, %v2415
    %v2417 = vpop.f32.mrb[0].mxu0
    %v2418 = vpop.f32.mrb[0].mxu0
    %v2419 = vadd.f32 %v2130, %v2418
    %v2420 = vpop.f32.mrb[0].mxu0
    %2421 = vdwg.mxu0
    %v2422 = vmul.f32 %v1431, %v2168
    %v2423 = vmul.f32 %v1436, %v2171
    %v2424 = vmul.f32 %v1441, %v2176
    %v2425 = vmul.f32 %v1446, %v2179
    %v2426 = vmul.f32 %v1451, %v2184
    %v2427 = vmul.f32 %v1456, %v2187
    %v2428 = vmul.f32 %v1461, %v2192
    %v2429 = vmul.f32 %v1466, %v2195
    %v2430 = vmul.f32 %v1471, %v2200
    %v2431 = vmul.f32 %v1476, %v2203
    %v2432 = vmul.f32 %v1481, %v2208
    %v2433 = vmul.f32 %v1486, %v2211
    %v2434 = vmul.f32 %v1491, %v2216
    %v2435 = vmul.f32 %v1496, %v2219
    %v2436 = vmul.f32 %v1501, %v2224
    %v2437 = vmul.f32 %v1506, %v2227
    %v2438 = vmul.f32 %v1511, %v2232
    %v2439 = vmul.f32 %v1516, %v2235
    %v2440 = vmul.f32 %v1521, %v2240
    %v2441 = vmul.f32 %v1526, %v2243
    %v2442 = vmul.f32 %v1531, %v2248
    %v2443 = vmul.f32 %v1536, %v2251
    %v2444 = vmul.f32 %v1541, %v2256
    %v2445 = vmul.f32 %v1546, %v2259
    %v2446 = vmul.f32 %v1551, %v2264
    %v2447 = vmul.f32 %v1556, %v2267
    %v2448 = vmul.f32 %v1561, %v2272
    %v2449 = vmul.f32 %v1566, %v2275
    %v2450 = vmul.f32 %v1571, %v2280
    %v2451 = vmul.f32 %v1576, %v2283
    %v2452 = vmul.f32 %v1581, %v2288
    %v2453 = vmul.f32 %v1586, %v2291
    %v2454 = vmul.f32 %v1591, %v2296
    %v2455 = vmul.f32 %v1596, %v2299
    %v2456 = vmul.f32 %v1601, %v2304
    %v2457 = vmul.f32 %v1606, %v2307
    %v2458 = vmul.f32 %v1611, %v2312
    %v2459 = vmul.f32 %v1616, %v2315
    %v2460 = vmul.f32 %v1621, %v2320
    %v2461 = vmul.f32 %v1626, %v2323
    %v2462 = vmul.f32 %v1631, %v2328
    %v2463 = vmul.f32 %v1636, %v2331
    %v2464 = vmul.f32 %v1641, %v2336
    %v2465 = vmul.f32 %v1646, %v2339
    %v2466 = vmul.f32 %v1651, %v2344
    %v2467 = vmul.f32 %v1656, %v2347
    %v2468 = vmul.f32 %v1661, %v2352
    %v2469 = vmul.f32 %v1666, %v2355
    %v2470 = vmul.f32 %v1671, %v2360
    %v2471 = vmul.f32 %v1676, %v2363
    %v2472 = vmul.f32 %v1681, %v2368
    %v2473 = vmul.f32 %v1686, %v2371
    %v2474 = vmul.f32 %v1691, %v2376
    %v2475 = vmul.f32 %v1696, %v2379
    %v2476 = vmul.f32 %v1701, %v2384
    %v2477 = vmul.f32 %v1706, %v2387
    %v2478 = vmul.f32 %v1711, %v2392
    %v2479 = vmul.f32 %v1716, %v2395
    %v2480 = vmul.f32 %v1721, %v2400
    %v2481 = vmul.f32 %v1726, %v2403
    %v2482 = vmul.f32 %v1731, %v2408
    %v2483 = vmul.f32 %v1736, %v2411
    %v2484 = vmul.f32 %v1741, %v2416
    %v2485 = vmul.f32 %v1746, %v2419
    %v2486 = vld [vmem:[%s3] sm:$0x1]
    %v2488 = vlaneseq
    %v2489 = vshrl.u32 %v2488, 7
    %v2490 = vsub.s32 0, %v2489
    %v2491 = vrot.slane %v2486, %v2490
    %v2493 = vadd.f32 %v2422, %v2491
    %v2494 = vadd.f32 %v2423, %v2491
    %v2495 = vadd.f32 %v2424, %v2491
    %v2496 = vadd.f32 %v2425, %v2491
    %v2497 = vadd.f32 %v2426, %v2491
    %v2498 = vadd.f32 %v2427, %v2491
    %v2499 = vadd.f32 %v2428, %v2491
    %v2500 = vadd.f32 %v2429, %v2491
    %v2501 = vadd.f32 %v2430, %v2491
    %v2502 = vadd.f32 %v2431, %v2491
    %v2503 = vadd.f32 %v2432, %v2491
    %v2504 = vadd.f32 %v2433, %v2491
    %v2505 = vadd.f32 %v2434, %v2491
    %v2506 = vadd.f32 %v2435, %v2491
    %v2507 = vadd.f32 %v2436, %v2491
    %v2508 = vadd.f32 %v2437, %v2491
    %v2509 = vadd.f32 %v2438, %v2491
    %v2510 = vadd.f32 %v2439, %v2491
    %v2511 = vadd.f32 %v2440, %v2491
    %v2512 = vadd.f32 %v2441, %v2491
    %v2513 = vadd.f32 %v2442, %v2491
    %v2514 = vadd.f32 %v2443, %v2491
    %v2515 = vadd.f32 %v2444, %v2491
    %v2516 = vadd.f32 %v2445, %v2491
    %v2517 = vadd.f32 %v2446, %v2491
    %v2518 = vadd.f32 %v2447, %v2491
    %v2519 = vadd.f32 %v2448, %v2491
    %v2520 = vadd.f32 %v2449, %v2491
    %v2521 = vadd.f32 %v2450, %v2491
    %v2522 = vadd.f32 %v2451, %v2491
    %v2523 = vadd.f32 %v2452, %v2491
    %v2524 = vadd.f32 %v2453, %v2491
    %v2525 = vadd.f32 %v2454, %v2491
    %v2526 = vadd.f32 %v2455, %v2491
    %v2527 = vadd.f32 %v2456, %v2491
    %v2528 = vadd.f32 %v2457, %v2491
    %v2529 = vadd.f32 %v2458, %v2491
    %v2530 = vadd.f32 %v2459, %v2491
    %v2531 = vadd.f32 %v2460, %v2491
    %v2532 = vadd.f32 %v2461, %v2491
    %v2533 = vadd.f32 %v2462, %v2491
    %v2534 = vadd.f32 %v2463, %v2491
    %v2535 = vadd.f32 %v2464, %v2491
    %v2536 = vadd.f32 %v2465, %v2491
    %v2537 = vadd.f32 %v2466, %v2491
    %v2538 = vadd.f32 %v2467, %v2491
    %v2539 = vadd.f32 %v2468, %v2491
    %v2540 = vadd.f32 %v2469, %v2491
    %v2541 = vadd.f32 %v2470, %v2491
    %v2542 = vadd.f32 %v2471, %v2491
    %v2543 = vadd.f32 %v2472, %v2491
    %v2544 = vadd.f32 %v2473, %v2491
    %v2545 = vadd.f32 %v2474, %v2491
    %v2546 = vadd.f32 %v2475, %v2491
    %v2547 = vadd.f32 %v2476, %v2491
    %v2548 = vadd.f32 %v2477, %v2491
    %v2549 = vadd.f32 %v2478, %v2491
    %v2550 = vadd.f32 %v2479, %v2491
    %v2551 = vadd.f32 %v2480, %v2491
    %v2552 = vadd.f32 %v2481, %v2491
    %v2553 = vadd.f32 %v2482, %v2491
    %v2554 = vadd.f32 %v2483, %v2491
    %v2555 = vadd.f32 %v2484, %v2491
    %v2556 = vadd.f32 %v2485, %v2491
    %v2557 = vmax.f32 %v2493, 0.0
    %v2558 = vmax.f32 %v2494, 0.0
    %v2559 = vmax.f32 %v2495, 0.0
    %v2560 = vmax.f32 %v2496, 0.0
    %v2561 = vmax.f32 %v2497, 0.0
    %v2562 = vmax.f32 %v2498, 0.0
    %v2563 = vmax.f32 %v2499, 0.0
    %v2564 = vmax.f32 %v2500, 0.0
    %v2565 = vmax.f32 %v2501, 0.0
    %v2566 = vmax.f32 %v2502, 0.0
    %v2567 = vmax.f32 %v2503, 0.0
    %v2568 = vmax.f32 %v2504, 0.0
    %v2569 = vmax.f32 %v2505, 0.0
    %v2570 = vmax.f32 %v2506, 0.0
    %v2571 = vmax.f32 %v2507, 0.0
    %v2572 = vmax.f32 %v2508, 0.0
    %v2573 = vmax.f32 %v2509, 0.0
    %v2574 = vmax.f32 %v2510, 0.0
    %v2575 = vmax.f32 %v2511, 0.0
    %v2576 = vmax.f32 %v2512, 0.0
    %v2577 = vmax.f32 %v2513, 0.0
    %v2578 = vmax.f32 %v2514, 0.0
    %v2579 = vmax.f32 %v2515, 0.0
    %v2580 = vmax.f32 %v2516, 0.0
    %v2581 = vmax.f32 %v2517, 0.0
    %v2582 = vmax.f32 %v2518, 0.0
    %v2583 = vmax.f32 %v2519, 0.0
    %v2584 = vmax.f32 %v2520, 0.0
    %v2585 = vmax.f32 %v2521, 0.0
    %v2586 = vmax.f32 %v2522, 0.0
    %v2587 = vmax.f32 %v2523, 0.0
    %v2588 = vmax.f32 %v2524, 0.0
    %v2589 = vmax.f32 %v2525, 0.0
    %v2590 = vmax.f32 %v2526, 0.0
    %v2591 = vmax.f32 %v2527, 0.0
    %v2592 = vmax.f32 %v2528, 0.0
    %v2593 = vmax.f32 %v2529, 0.0
    %v2594 = vmax.f32 %v2530, 0.0
    %v2595 = vmax.f32 %v2531, 0.0
    %v2596 = vmax.f32 %v2532, 0.0
    %v2597 = vmax.f32 %v2533, 0.0
    %v2598 = vmax.f32 %v2534, 0.0
    %v2599 = vmax.f32 %v2535, 0.0
    %v2600 = vmax.f32 %v2536, 0.0
    %v2601 = vmax.f32 %v2537, 0.0
    %v2602 = vmax.f32 %v2538, 0.0
    %v2603 = vmax.f32 %v2539, 0.0
    %v2604 = vmax.f32 %v2540, 0.0
    %v2605 = vmax.f32 %v2541, 0.0
    %v2606 = vmax.f32 %v2542, 0.0
    %v2607 = vmax.f32 %v2543, 0.0
    %v2608 = vmax.f32 %v2544, 0.0
    %v2609 = vmax.f32 %v2545, 0.0
    %v2610 = vmax.f32 %v2546, 0.0
    %v2611 = vmax.f32 %v2547, 0.0
    %v2612 = vmax.f32 %v2548, 0.0
    %v2613 = vmax.f32 %v2549, 0.0
    %v2614 = vmax.f32 %v2550, 0.0
    %v2615 = vmax.f32 %v2551, 0.0
    %v2616 = vmax.f32 %v2552, 0.0
    %v2617 = vmax.f32 %v2553, 0.0
    %v2618 = vmax.f32 %v2554, 0.0
    %v2619 = vmax.f32 %v2555, 0.0
    %v2620 = vmax.f32 %v2556, 0.0
    %v2621 = vpack.c.bf16 %v2558, %v2557
    %v2622 = vpack.c.bf16 %v2560, %v2559
    %v2623 = vpack.c.bf16 %v2562, %v2561
    %v2624 = vpack.c.bf16 %v2564, %v2563
    %v2625 = vpack.c.bf16 %v2566, %v2565
    %v2626 = vpack.c.bf16 %v2568, %v2567
    %v2627 = vpack.c.bf16 %v2570, %v2569
    %v2628 = vpack.c.bf16 %v2572, %v2571
    %v2629 = vpack.c.bf16 %v2574, %v2573
    %v2630 = vpack.c.bf16 %v2576, %v2575
    %v2631 = vpack.c.bf16 %v2578, %v2577
    %v2632 = vpack.c.bf16 %v2580, %v2579
    %v2633 = vpack.c.bf16 %v2582, %v2581
    %v2634 = vpack.c.bf16 %v2584, %v2583
    %v2635 = vpack.c.bf16 %v2586, %v2585
    %v2636 = vpack.c.bf16 %v2588, %v2587
    %v2637 = vpack.c.bf16 %v2590, %v2589
    %v2638 = vpack.c.bf16 %v2592, %v2591
    %v2639 = vpack.c.bf16 %v2594, %v2593
    %v2640 = vpack.c.bf16 %v2596, %v2595
    %v2641 = vpack.c.bf16 %v2598, %v2597
    %v2642 = vpack.c.bf16 %v2600, %v2599
    %v2643 = vpack.c.bf16 %v2602, %v2601
    %v2644 = vpack.c.bf16 %v2604, %v2603
    %v2645 = vpack.c.bf16 %v2606, %v2605
    %v2646 = vpack.c.bf16 %v2608, %v2607
    %v2647 = vpack.c.bf16 %v2610, %v2609
    %v2648 = vpack.c.bf16 %v2612, %v2611
    %v2649 = vpack.c.bf16 %v2614, %v2613
    %v2650 = vpack.c.bf16 %v2616, %v2615
    %v2651 = vpack.c.bf16 %v2618, %v2617
    %v2652 = vpack.c.bf16 %v2620, %v2619
    %v2653 = vld [vmem:[#allocation8] sm:$0xf]
    %v2654 = vld [vmem:[#allocation8 + $0x4] sm:$0xf]
    %v2655 = vld [vmem:[#allocation8 + $0x8] sm:$0xf]
    %v2656 = vld [vmem:[#allocation8 + $0xc] sm:$0xf]
    %v2657 = vld [vmem:[#allocation8 + $0x10] sm:$0xf]
    %v2658 = vld [vmem:[#allocation8 + $0x14] sm:$0xf]
    %v2659 = vld [vmem:[#allocation8 + $0x18] sm:$0xf]
    %v2660 = vld [vmem:[#allocation8 + $0x1c] sm:$0xf]
    %v2661 = vld [vmem:[#allocation8 + $0x20] sm:$0xf]
    %v2662 = vld [vmem:[#allocation8 + $0x24] sm:$0xf]
    %v2663 = vld [vmem:[#allocation8 + $0x28] sm:$0xf]
    %v2664 = vld [vmem:[#allocation8 + $0x2c] sm:$0xf]
    %v2665 = vld [vmem:[#allocation8 + $0x30] sm:$0xf]
    %v2666 = vld [vmem:[#allocation8 + $0x34] sm:$0xf]
    %v2667 = vld [vmem:[#allocation8 + $0x38] sm:$0xf]
    %v2668 = vld [vmem:[#allocation8 + $0x3c] sm:$0xf]
    %v2685 = vunpack.c.l.b16 %v2653
    %v2686 = vunpack.c.l.b16 %v2654
    %v2687 = vunpack.c.l.b16 %v2655
    %v2688 = vunpack.c.l.b16 %v2656
    %v2689 = vunpack.c.l.b16 %v2657
    %v2690 = vunpack.c.l.b16 %v2658
    %v2691 = vunpack.c.l.b16 %v2659
    %v2692 = vunpack.c.l.b16 %v2660
    %v2693 = vunpack.c.l.b16 %v2661
    %v2694 = vunpack.c.l.b16 %v2662
    %v2695 = vunpack.c.l.b16 %v2663
    %v2696 = vunpack.c.l.b16 %v2664
    %v2697 = vunpack.c.l.b16 %v2665
    %v2698 = vunpack.c.l.b16 %v2666
    %v2699 = vunpack.c.l.b16 %v2667
    %v2700 = vunpack.c.l.b16 %v2668
    %v2701 = vpack.c.b16 %v2686, %v2685
    %v2702 = vpack.c.b16 %v2688, %v2687
    %v2703 = vpack.c.b16 %v2690, %v2689
    %v2704 = vpack.c.b16 %v2692, %v2691
    %v2705 = vpack.c.b16 %v2694, %v2693
    %v2706 = vpack.c.b16 %v2696, %v2695
    %v2707 = vpack.c.b16 %v2698, %v2697
    %v2708 = vpack.c.b16 %v2700, %v2699
    %2717 = vmatprep.subr.bf16.mxu0 0
    %2718 = vmatpush1.bf16.msra.mxu0 %v2701
    %2719 = vmatprep.subr.bf16.mxu0 0
    %2720 = vmatpush1.bf16.msra.mxu0 %v2702
    %2721 = vmatprep.subr.bf16.mxu0 0
    %2722 = vmatpush1.bf16.msra.mxu0 %v2703
    %2723 = vmatprep.subr.bf16.mxu0 0
    %2724 = vmatpush1.bf16.msra.mxu0 %v2704
    %2725 = vmatprep.subr.bf16.mxu0 0
    %2726 = vmatpush1.bf16.msra.mxu0 %v2705
    %2727 = vmatprep.subr.bf16.mxu0 0
    %2728 = vmatpush1.bf16.msra.mxu0 %v2706
    %2729 = vmatprep.subr.bf16.mxu0 0
    %2730 = vmatpush1.bf16.msra.mxu0 %v2707
    %2731 = vmatprep.subr.bf16.mxu0 0
    %2732 = vmatpush1.bf16.msra.mxu0 %v2708
    %2733 = vmatprep.subr.bf16.mxu0 0
    %2734 = vmatpush1.bf16.msra.mxu0 0
    %2735 = vmatprep.subr.bf16.mxu0 0
    %2736 = vmatpush1.bf16.msra.mxu0 0
    %2737 = vmatprep.subr.bf16.mxu0 0
    %2738 = vmatpush1.bf16.msra.mxu0 0
    %2739 = vmatprep.subr.bf16.mxu0 0
    %2740 = vmatpush1.bf16.msra.mxu0 0
    %2741 = vmatprep.subr.bf16.mxu0 0
    %2742 = vmatpush1.bf16.msra.mxu0 0
    %2743 = vmatprep.subr.bf16.mxu0 0
    %2744 = vmatpush1.bf16.msra.mxu0 0
    %2745 = vmatprep.subr.bf16.mxu0 0
    %2746 = vmatpush1.bf16.msra.mxu0 0
    %2747 = vmatprep.subr.bf16.mxu0 0
    %2748 = vmatpush1.bf16.msra.mxu0 0
    %2749 = vmatprep.mubr.bf16.mxu0 0
    %2750 = vmatmul.mubr.bf16.gmra.mrb[0].mxu0 %v2621
    %v2751 = vpop.f32.mrb[0].mxu0
    %v2752 = vadd.f32 0.0, %v2751
    %v2753 = vpop.f32.mrb[0].mxu0
    %v2754 = vpop.f32.mrb[0].mxu0
    %v2755 = vadd.f32 0.0, %v2754
    %v2756 = vpop.f32.mrb[0].mxu0
    %2757 = vmatprep.mubr.bf16.mxu0 0
    %2758 = vmatmul.mubr.bf16.gmra.mrb[0].mxu0 %v2622
    %v2759 = vpop.f32.mrb[0].mxu0
    %v2760 = vadd.f32 0.0, %v2759
    %v2761 = vpop.f32.mrb[0].mxu0
    %v2762 = vpop.f32.mrb[0].mxu0
    %v2763 = vadd.f32 0.0, %v2762
    %v2764 = vpop.f32.mrb[0].mxu0
    %2765 = vmatprep.mubr.bf16.mxu0 0
    %2766 = vmatmul.mubr.bf16.gmra.mrb[0].mxu0 %v2623
    %v2767 = vpop.f32.mrb[0].mxu0
    %v2768 = vadd.f32 0.0, %v2767
    %v2769 = vpop.f32.mrb[0].mxu0
    %v2770 = vpop.f32.mrb[0].mxu0
    %v2771 = vadd.f32 0.0, %v2770
    %v2772 = vpop.f32.mrb[0].mxu0
    %2773 = vmatprep.mubr.bf16.mxu0 0
    %2774 = vmatmul.mubr.bf16.gmra.mrb[0].mxu0 %v2624
    %v2775 = vpop.f32.mrb[0].mxu0
    %v2776 = vadd.f32 0.0, %v2775
    %v2777 = vpop.f32.mrb[0].mxu0
    %v2778 = vpop.f32.mrb[0].mxu0
    %v2779 = vadd.f32 0.0, %v2778
    %v2780 = vpop.f32.mrb[0].mxu0
    %2781 = vmatprep.mubr.bf16.mxu0 0
    %2782 = vmatmul.mubr.bf16.gmra.mrb[0].mxu0 %v2625
    %v2783 = vpop.f32.mrb[0].mxu0
    %v2784 = vadd.f32 0.0, %v2783
    %v2785 = vpop.f32.mrb[0].mxu0
    %v2786 = vpop.f32.mrb[0].mxu0
    %v2787 = vadd.f32 0.0, %v2786
    %v2788 = vpop.f32.mrb[0].mxu0
    %2789 = vmatprep.mubr.bf16.mxu0 0
    %2790 = vmatmul.mubr.bf16.gmra.mrb[0].mxu0 %v2626
    %v2791 = vpop.f32.mrb[0].mxu0
    %v2792 = vadd.f32 0.0, %v2791
    %v2793 = vpop.f32.mrb[0].mxu0
    %v2794 = vpop.f32.mrb[0].mxu0
    %v2795 = vadd.f32 0.0, %v2794
    %v2796 = vpop.f32.mrb[0].mxu0
    %2797 = vmatprep.mubr.bf16.mxu0 0
    %2798 = vmatmul.mubr.bf16.gmra.mrb[0].mxu0 %v2627
    %v2799 = vpop.f32.mrb[0].mxu0
    %v2800 = vadd.f32 0.0, %v2799
    %v2801 = vpop.f32.mrb[0].mxu0
    %v2802 = vpop.f32.mrb[0].mxu0
    %v2803 = vadd.f32 0.0, %v2802
    %v2804 = vpop.f32.mrb[0].mxu0
    %2805 = vmatprep.mubr.bf16.mxu0 0
    %2806 = vmatmul.mubr.bf16.gmra.mrb[0].mxu0 %v2628
    %v2807 = vpop.f32.mrb[0].mxu0
    %v2808 = vadd.f32 0.0, %v2807
    %v2809 = vpop.f32.mrb[0].mxu0
    %v2810 = vpop.f32.mrb[0].mxu0
    %v2811 = vadd.f32 0.0, %v2810
    %v2812 = vpop.f32.mrb[0].mxu0
    %2813 = vmatprep.mubr.bf16.mxu0 0
    %2814 = vmatmul.mubr.bf16.gmra.mrb[0].mxu0 %v2629
    %v2815 = vpop.f32.mrb[0].mxu0
    %v2816 = vadd.f32 0.0, %v2815
    %v2817 = vpop.f32.mrb[0].mxu0
    %v2818 = vpop.f32.mrb[0].mxu0
    %v2819 = vadd.f32 0.0, %v2818
    %v2820 = vpop.f32.mrb[0].mxu0
    %2821 = vmatprep.mubr.bf16.mxu0 0
    %2822 = vmatmul.mubr.bf16.gmra.mrb[0].mxu0 %v2630
    %v2823 = vpop.f32.mrb[0].mxu0
    %v2824 = vadd.f32 0.0, %v2823
    %v2825 = vpop.f32.mrb[0].mxu0
    %v2826 = vpop.f32.mrb[0].mxu0
    %v2827 = vadd.f32 0.0, %v2826
    %v2828 = vpop.f32.mrb[0].mxu0
    %2829 = vmatprep.mubr.bf16.mxu0 0
    %2830 = vmatmul.mubr.bf16.gmra.mrb[0].mxu0 %v2631
    %v2831 = vpop.f32.mrb[0].mxu0
    %v2832 = vadd.f32 0.0, %v2831
    %v2833 = vpop.f32.mrb[0].mxu0
    %v2834 = vpop.f32.mrb[0].mxu0
    %v2835 = vadd.f32 0.0, %v2834
    %v2836 = vpop.f32.mrb[0].mxu0
    %2837 = vmatprep.mubr.bf16.mxu0 0
    %2838 = vmatmul.mubr.bf16.gmra.mrb[0].mxu0 %v2632
    %v2839 = vpop.f32.mrb[0].mxu0
    %v2840 = vadd.f32 0.0, %v2839
    %v2841 = vpop.f32.mrb[0].mxu0
    %v2842 = vpop.f32.mrb[0].mxu0
    %v2843 = vadd.f32 0.0, %v2842
    %v2844 = vpop.f32.mrb[0].mxu0
    %2845 = vmatprep.mubr.bf16.mxu0 0
    %2846 = vmatmul.mubr.bf16.gmra.mrb[0].mxu0 %v2633
    %v2847 = vpop.f32.mrb[0].mxu0
    %v2848 = vadd.f32 0.0, %v2847
    %v2849 = vpop.f32.mrb[0].mxu0
    %v2850 = vpop.f32.mrb[0].mxu0
    %v2851 = vadd.f32 0.0, %v2850
    %v2852 = vpop.f32.mrb[0].mxu0
    %2853 = vmatprep.mubr.bf16.mxu0 0
    %2854 = vmatmul.mubr.bf16.gmra.mrb[0].mxu0 %v2634
    %v2855 = vpop.f32.mrb[0].mxu0
    %v2856 = vadd.f32 0.0, %v2855
    %v2857 = vpop.f32.mrb[0].mxu0
    %v2858 = vpop.f32.mrb[0].mxu0
    %v2859 = vadd.f32 0.0, %v2858
    %v2860 = vpop.f32.mrb[0].mxu0
    %2861 = vmatprep.mubr.bf16.mxu0 0
    %2862 = vmatmul.mubr.bf16.gmra.mrb[0].mxu0 %v2635
    %v2863 = vpop.f32.mrb[0].mxu0
    %v2864 = vadd.f32 0.0, %v2863
    %v2865 = vpop.f32.mrb[0].mxu0
    %v2866 = vpop.f32.mrb[0].mxu0
    %v2867 = vadd.f32 0.0, %v2866
    %v2868 = vpop.f32.mrb[0].mxu0
    %2869 = vmatprep.mubr.bf16.mxu0 0
    %2870 = vmatmul.mubr.bf16.gmra.mrb[0].mxu0 %v2636
    %v2871 = vpop.f32.mrb[0].mxu0
    %v2872 = vadd.f32 0.0, %v2871
    %v2873 = vpop.f32.mrb[0].mxu0
    %v2874 = vpop.f32.mrb[0].mxu0
    %v2875 = vadd.f32 0.0, %v2874
    %v2876 = vpop.f32.mrb[0].mxu0
    %2877 = vmatprep.mubr.bf16.mxu0 0
    %2878 = vmatmul.mubr.bf16.gmra.mrb[0].mxu0 %v2637
    %v2879 = vpop.f32.mrb[0].mxu0
    %v2880 = vadd.f32 0.0, %v2879
    %v2881 = vpop.f32.mrb[0].mxu0
    %v2882 = vpop.f32.mrb[0].mxu0
    %v2883 = vadd.f32 0.0, %v2882
    %v2884 = vpop.f32.mrb[0].mxu0
    %2885 = vmatprep.mubr.bf16.mxu0 0
    %2886 = vmatmul.mubr.bf16.gmra.mrb[0].mxu0 %v2638
    %v2887 = vpop.f32.mrb[0].mxu0
    %v2888 = vadd.f32 0.0, %v2887
    %v2889 = vpop.f32.mrb[0].mxu0
    %v2890 = vpop.f32.mrb[0].mxu0
    %v2891 = vadd.f32 0.0, %v2890
    %v2892 = vpop.f32.mrb[0].mxu0
    %2893 = vmatprep.mubr.bf16.mxu0 0
    %2894 = vmatmul.mubr.bf16.gmra.mrb[0].mxu0 %v2639
    %v2895 = vpop.f32.mrb[0].mxu0
    %v2896 = vadd.f32 0.0, %v2895
    %v2897 = vpop.f32.mrb[0].mxu0
    %v2898 = vpop.f32.mrb[0].mxu0
    %v2899 = vadd.f32 0.0, %v2898
    %v2900 = vpop.f32.mrb[0].mxu0
    %2901 = vmatprep.mubr.bf16.mxu0 0
    %2902 = vmatmul.mubr.bf16.gmra.mrb[0].mxu0 %v2640
    %v2903 = vpop.f32.mrb[0].mxu0
    %v2904 = vadd.f32 0.0, %v2903
    %v2905 = vpop.f32.mrb[0].mxu0
    %v2906 = vpop.f32.mrb[0].mxu0
    %v2907 = vadd.f32 0.0, %v2906
    %v2908 = vpop.f32.mrb[0].mxu0
    %2909 = vmatprep.mubr.bf16.mxu0 0
    %2910 = vmatmul.mubr.bf16.gmra.mrb[0].mxu0 %v2641
    %v2911 = vpop.f32.mrb[0].mxu0
    %v2912 = vadd.f32 0.0, %v2911
    %v2913 = vpop.f32.mrb[0].mxu0
    %v2914 = vpop.f32.mrb[0].mxu0
    %v2915 = vadd.f32 0.0, %v2914
    %v2916 = vpop.f32.mrb[0].mxu0
    %2917 = vmatprep.mubr.bf16.mxu0 0
    %2918 = vmatmul.mubr.bf16.gmra.mrb[0].mxu0 %v2642
    %v2919 = vpop.f32.mrb[0].mxu0
    %v2920 = vadd.f32 0.0, %v2919
    %v2921 = vpop.f32.mrb[0].mxu0
    %v2922 = vpop.f32.mrb[0].mxu0
    %v2923 = vadd.f32 0.0, %v2922
    %v2924 = vpop.f32.mrb[0].mxu0
    %2925 = vmatprep.mubr.bf16.mxu0 0
    %2926 = vmatmul.mubr.bf16.gmra.mrb[0].mxu0 %v2643
    %v2927 = vpop.f32.mrb[0].mxu0
    %v2928 = vadd.f32 0.0, %v2927
    %v2929 = vpop.f32.mrb[0].mxu0
    %v2930 = vpop.f32.mrb[0].mxu0
    %v2931 = vadd.f32 0.0, %v2930
    %v2932 = vpop.f32.mrb[0].mxu0
    %2933 = vmatprep.mubr.bf16.mxu0 0
    %2934 = vmatmul.mubr.bf16.gmra.mrb[0].mxu0 %v2644
    %v2935 = vpop.f32.mrb[0].mxu0
    %v2936 = vadd.f32 0.0, %v2935
    %v2937 = vpop.f32.mrb[0].mxu0
    %v2938 = vpop.f32.mrb[0].mxu0
    %v2939 = vadd.f32 0.0, %v2938
    %v2940 = vpop.f32.mrb[0].mxu0
    %2941 = vmatprep.mubr.bf16.mxu0 0
    %2942 = vmatmul.mubr.bf16.gmra.mrb[0].mxu0 %v2645
    %v2943 = vpop.f32.mrb[0].mxu0
    %v2944 = vadd.f32 0.0, %v2943
    %v2945 = vpop.f32.mrb[0].mxu0
    %v2946 = vpop.f32.mrb[0].mxu0
    %v2947 = vadd.f32 0.0, %v2946
    %v2948 = vpop.f32.mrb[0].mxu0
    %2949 = vmatprep.mubr.bf16.mxu0 0
    %2950 = vmatmul.mubr.bf16.gmra.mrb[0].mxu0 %v2646
    %v2951 = vpop.f32.mrb[0].mxu0
    %v2952 = vadd.f32 0.0, %v2951
    %v2953 = vpop.f32.mrb[0].mxu0
    %v2954 = vpop.f32.mrb[0].mxu0
    %v2955 = vadd.f32 0.0, %v2954
    %v2956 = vpop.f32.mrb[0].mxu0
    %2957 = vmatprep.mubr.bf16.mxu0 0
    %2958 = vmatmul.mubr.bf16.gmra.mrb[0].mxu0 %v2647
    %v2959 = vpop.f32.mrb[0].mxu0
    %v2960 = vadd.f32 0.0, %v2959
    %v2961 = vpop.f32.mrb[0].mxu0
    %v2962 = vpop.f32.mrb[0].mxu0
    %v2963 = vadd.f32 0.0, %v2962
    %v2964 = vpop.f32.mrb[0].mxu0
    %2965 = vmatprep.mubr.bf16.mxu0 0
    %2966 = vmatmul.mubr.bf16.gmra.mrb[0].mxu0 %v2648
    %v2967 = vpop.f32.mrb[0].mxu0
    %v2968 = vadd.f32 0.0, %v2967
    %v2969 = vpop.f32.mrb[0].mxu0
    %v2970 = vpop.f32.mrb[0].mxu0
    %v2971 = vadd.f32 0.0, %v2970
    %v2972 = vpop.f32.mrb[0].mxu0
    %2973 = vmatprep.mubr.bf16.mxu0 0
    %2974 = vmatmul.mubr.bf16.gmra.mrb[0].mxu0 %v2649
    %v2975 = vpop.f32.mrb[0].mxu0
    %v2976 = vadd.f32 0.0, %v2975
    %v2977 = vpop.f32.mrb[0].mxu0
    %v2978 = vpop.f32.mrb[0].mxu0
    %v2979 = vadd.f32 0.0, %v2978
    %v2980 = vpop.f32.mrb[0].mxu0
    %2981 = vmatprep.mubr.bf16.mxu0 0
    %2982 = vmatmul.mubr.bf16.gmra.mrb[0].mxu0 %v2650
    %v2983 = vpop.f32.mrb[0].mxu0
    %v2984 = vadd.f32 0.0, %v2983
    %v2985 = vpop.f32.mrb[0].mxu0
    %v2986 = vpop.f32.mrb[0].mxu0
    %v2987 = vadd.f32 0.0, %v2986
    %v2988 = vpop.f32.mrb[0].mxu0
    %2989 = vmatprep.mubr.bf16.mxu0 0
    %2990 = vmatmul.mubr.bf16.gmra.mrb[0].mxu0 %v2651
    %v2991 = vpop.f32.mrb[0].mxu0
    %v2992 = vadd.f32 0.0, %v2991
    %v2993 = vpop.f32.mrb[0].mxu0
    %v2994 = vpop.f32.mrb[0].mxu0
    %v2995 = vadd.f32 0.0, %v2994
    %v2996 = vpop.f32.mrb[0].mxu0
    %2997 = vmatprep.mubr.bf16.mxu0 0
    %2998 = vmatmul.mubr.bf16.gmra.mrb[0].mxu0 %v2652
    %v2999 = vpop.f32.mrb[0].mxu0
    %v3000 = vadd.f32 0.0, %v2999
    %v3001 = vpop.f32.mrb[0].mxu0
    %v3002 = vpop.f32.mrb[0].mxu0
    %v3003 = vadd.f32 0.0, %v3002
    %v3004 = vpop.f32.mrb[0].mxu0
    %3005 = vdwg.mxu0
    %v3006 = vmul.f32 %v1431, %v2752
    %v3007 = vmul.f32 %v1436, %v2755
    %v3008 = vmul.f32 %v1441, %v2760
    %v3009 = vmul.f32 %v1446, %v2763
    %v3010 = vmul.f32 %v1451, %v2768
    %v3011 = vmul.f32 %v1456, %v2771
    %v3012 = vmul.f32 %v1461, %v2776
    %v3013 = vmul.f32 %v1466, %v2779
    %v3014 = vmul.f32 %v1471, %v2784
    %v3015 = vmul.f32 %v1476, %v2787
    %v3016 = vmul.f32 %v1481, %v2792
    %v3017 = vmul.f32 %v1486, %v2795
    %v3018 = vmul.f32 %v1491, %v2800
    %v3019 = vmul.f32 %v1496, %v2803
    %v3020 = vmul.f32 %v1501, %v2808
    %v3021 = vmul.f32 %v1506, %v2811
    %v3022 = vmul.f32 %v1511, %v2816
    %v3023 = vmul.f32 %v1516, %v2819
    %v3024 = vmul.f32 %v1521, %v2824
    %v3025 = vmul.f32 %v1526, %v2827
    %v3026 = vmul.f32 %v1531, %v2832
    %v3027 = vmul.f32 %v1536, %v2835
    %v3028 = vmul.f32 %v1541, %v2840
    %v3029 = vmul.f32 %v1546, %v2843
    %v3030 = vmul.f32 %v1551, %v2848
    %v3031 = vmul.f32 %v1556, %v2851
    %v3032 = vmul.f32 %v1561, %v2856
    %v3033 = vmul.f32 %v1566, %v2859
    %v3034 = vmul.f32 %v1571, %v2864
    %v3035 = vmul.f32 %v1576, %v2867
    %v3036 = vmul.f32 %v1581, %v2872
    %v3037 = vmul.f32 %v1586, %v2875
    %v3038 = vmul.f32 %v1591, %v2880
    %v3039 = vmul.f32 %v1596, %v2883
    %v3040 = vmul.f32 %v1601, %v2888
    %v3041 = vmul.f32 %v1606, %v2891
    %v3042 = vmul.f32 %v1611, %v2896
    %v3043 = vmul.f32 %v1616, %v2899
    %v3044 = vmul.f32 %v1621, %v2904
    %v3045 = vmul.f32 %v1626, %v2907
    %v3046 = vmul.f32 %v1631, %v2912
    %v3047 = vmul.f32 %v1636, %v2915
    %v3048 = vmul.f32 %v1641, %v2920
    %v3049 = vmul.f32 %v1646, %v2923
    %v3050 = vmul.f32 %v1651, %v2928
    %v3051 = vmul.f32 %v1656, %v2931
    %v3052 = vmul.f32 %v1661, %v2936
    %v3053 = vmul.f32 %v1666, %v2939
    %v3054 = vmul.f32 %v1671, %v2944
    %v3055 = vmul.f32 %v1676, %v2947
    %v3056 = vmul.f32 %v1681, %v2952
    %v3057 = vmul.f32 %v1686, %v2955
    %v3058 = vmul.f32 %v1691, %v2960
    %v3059 = vmul.f32 %v1696, %v2963
    %v3060 = vmul.f32 %v1701, %v2968
    %v3061 = vmul.f32 %v1706, %v2971
    %v3062 = vmul.f32 %v1711, %v2976
    %v3063 = vmul.f32 %v1716, %v2979
    %v3064 = vmul.f32 %v1721, %v2984
    %v3065 = vmul.f32 %v1726, %v2987
    %v3066 = vmul.f32 %v1731, %v2992
    %v3067 = vmul.f32 %v1736, %v2995
    %v3068 = vmul.f32 %v1741, %v3000
    %v3069 = vmul.f32 %v1746, %v3003
    %v3070 = vpack.c.bf16 %v3007, %v3006
    %v3071 = vpack.c.bf16 %v3009, %v3008
    %v3072 = vpack.c.bf16 %v3011, %v3010
    %v3073 = vpack.c.bf16 %v3013, %v3012
    %v3074 = vpack.c.bf16 %v3015, %v3014
    %v3075 = vpack.c.bf16 %v3017, %v3016
    %v3076 = vpack.c.bf16 %v3019, %v3018
    %v3077 = vpack.c.bf16 %v3021, %v3020
    %v3078 = vpack.c.bf16 %v3023, %v3022
    %v3079 = vpack.c.bf16 %v3025, %v3024
    %v3080 = vpack.c.bf16 %v3027, %v3026
    %v3081 = vpack.c.bf16 %v3029, %v3028
    %v3082 = vpack.c.bf16 %v3031, %v3030
    %v3083 = vpack.c.bf16 %v3033, %v3032
    %v3084 = vpack.c.bf16 %v3035, %v3034
    %v3085 = vpack.c.bf16 %v3037, %v3036
    %v3086 = vpack.c.bf16 %v3039, %v3038
    %v3087 = vpack.c.bf16 %v3041, %v3040
    %v3088 = vpack.c.bf16 %v3043, %v3042
    %v3089 = vpack.c.bf16 %v3045, %v3044
    %v3090 = vpack.c.bf16 %v3047, %v3046
    %v3091 = vpack.c.bf16 %v3049, %v3048
    %v3092 = vpack.c.bf16 %v3051, %v3050
    %v3093 = vpack.c.bf16 %v3053, %v3052
    %v3094 = vpack.c.bf16 %v3055, %v3054
    %v3095 = vpack.c.bf16 %v3057, %v3056
    %v3096 = vpack.c.bf16 %v3059, %v3058
    %v3097 = vpack.c.bf16 %v3061, %v3060
    %v3098 = vpack.c.bf16 %v3063, %v3062
    %v3099 = vpack.c.bf16 %v3065, %v3064
    %v3100 = vpack.c.bf16 %v3067, %v3066
    %v3101 = vpack.c.bf16 %v3069, %v3068
    %3102 = vmatprep.subr.bf16.mxu0 0
    %3103 = vmatpush1.bf16.msra.mxu0 %v3070
    %3104 = vmatprep.subr.bf16.mxu0 0
    %3105 = vmatpush1.bf16.msra.mxu0 %v3071
    %3106 = vmatprep.subr.bf16.mxu0 0
    %3107 = vmatpush1.bf16.msra.mxu0 %v3072
    %3108 = vmatprep.subr.bf16.mxu0 0
    %3109 = vmatpush1.bf16.msra.mxu0 %v3073
    %3110 = vmatprep.subr.bf16.mxu0 0
    %3111 = vmatpush1.bf16.msra.mxu0 %v3074
    %3112 = vmatprep.subr.bf16.mxu0 0
    %3113 = vmatpush1.bf16.msra.mxu0 %v3075
    %3114 = vmatprep.subr.bf16.mxu0 0
    %3115 = vmatpush1.bf16.msra.mxu0 %v3076
    %3116 = vmatprep.subr.bf16.mxu0 0
    %3117 = vmatpush1.bf16.msra.mxu0 %v3077
    %3118 = vmatprep.subr.bf16.mxu0 0
    %3119 = vmatpush1.bf16.msra.mxu0 %v3078
    %3120 = vmatprep.subr.bf16.mxu0 0
    %3121 = vmatpush1.bf16.msra.mxu0 %v3079
    %3122 = vmatprep.subr.bf16.mxu0 0
    %3123 = vmatpush1.bf16.msra.mxu0 %v3080
    %3124 = vmatprep.subr.bf16.mxu0 0
    %3125 = vmatpush1.bf16.msra.mxu0 %v3081
    %3126 = vmatprep.subr.bf16.mxu0 0
    %3127 = vmatpush1.bf16.msra.mxu0 %v3082
    %3128 = vmatprep.subr.bf16.mxu0 0
    %3129 = vmatpush1.bf16.msra.mxu0 %v3083
    %3130 = vmatprep.subr.bf16.mxu0 0
    %3131 = vmatpush1.bf16.msra.mxu0 %v3084
    %3132 = vmatprep.subr.bf16.mxu0 0
    %3133 = vmatpush1.bf16.msra.mxu0 %v3085
    %3134 = vmatprep.mubr.bf16.mxu0 %v146
    %3135 = vmatmul.mubr.bf16.gmra.mrb[0].mxu0 %v145
    %v3136 = vpop.f32.mrb[0].mxu0
    %v3137 = vadd.f32 0.0, %v3136
    %v3138 = vpop.f32.mrb[0].mxu0
    %v3139 = vpop.f32.mrb[0].mxu0
    %v3140 = vadd.f32 0.0, %v3139
    %v3141 = vpop.f32.mrb[0].mxu0
    %3142 = vmatprep.mubr.bf16.mxu0 %v150
    %3143 = vmatmul.mubr.bf16.gmra.mrb[0].mxu0 %v149
    %v3144 = vpop.f32.mrb[0].mxu0
    %v3145 = vadd.f32 0.0, %v3144
    %v3146 = vpop.f32.mrb[0].mxu0
    %v3147 = vpop.f32.mrb[0].mxu0
    %v3148 = vadd.f32 0.0, %v3147
    %v3149 = vpop.f32.mrb[0].mxu0
    %3150 = vmatprep.mubr.bf16.mxu0 %v154
    %3151 = vmatmul.mubr.bf16.gmra.mrb[0].mxu0 %v153
    %v3152 = vpop.f32.mrb[0].mxu0
    %v3153 = vadd.f32 0.0, %v3152
    %v3154 = vpop.f32.mrb[0].mxu0
    %v3155 = vpop.f32.mrb[0].mxu0
    %v3156 = vadd.f32 0.0, %v3155
    %v3157 = vpop.f32.mrb[0].mxu0
    %3158 = vmatprep.mubr.bf16.mxu0 %v158
    %3159 = vmatmul.mubr.bf16.gmra.mrb[0].mxu0 %v157
    %v3160 = vpop.f32.mrb[0].mxu0
    %v3161 = vadd.f32 0.0, %v3160
    %v3162 = vpop.f32.mrb[0].mxu0
    %v3163 = vpop.f32.mrb[0].mxu0
    %v3164 = vadd.f32 0.0, %v3163
    %v3165 = vpop.f32.mrb[0].mxu0
    %3166 = vmatprep.mubr.bf16.mxu0 %v162
    %3167 = vmatmul.mubr.bf16.gmra.mrb[0].mxu0 %v161
    %v3168 = vpop.f32.mrb[0].mxu0
    %v3169 = vadd.f32 0.0, %v3168
    %v3170 = vpop.f32.mrb[0].mxu0
    %v3171 = vpop.f32.mrb[0].mxu0
    %v3172 = vadd.f32 0.0, %v3171
    %v3173 = vpop.f32.mrb[0].mxu0
    %3174 = vmatprep.mubr.bf16.mxu0 %v166
    %3175 = vmatmul.mubr.bf16.gmra.mrb[0].mxu0 %v165
    %v3176 = vpop.f32.mrb[0].mxu0
    %v3177 = vadd.f32 0.0, %v3176
    %v3178 = vpop.f32.mrb[0].mxu0
    %v3179 = vpop.f32.mrb[0].mxu0
    %v3180 = vadd.f32 0.0, %v3179
    %v3181 = vpop.f32.mrb[0].mxu0
    %3182 = vmatprep.mubr.bf16.mxu0 %v170
    %3183 = vmatmul.mubr.bf16.gmra.mrb[0].mxu0 %v169
    %v3184 = vpop.f32.mrb[0].mxu0
    %v3185 = vadd.f32 0.0, %v3184
    %v3186 = vpop.f32.mrb[0].mxu0
    %v3187 = vpop.f32.mrb[0].mxu0
    %v3188 = vadd.f32 0.0, %v3187
    %v3189 = vpop.f32.mrb[0].mxu0
    %3190 = vmatprep.mubr.bf16.mxu0 %v174
    %3191 = vmatmul.mubr.bf16.gmra.mrb[0].mxu0 %v173
    %v3192 = vpop.f32.mrb[0].mxu0
    %v3193 = vadd.f32 0.0, %v3192
    %v3194 = vpop.f32.mrb[0].mxu0
    %v3195 = vpop.f32.mrb[0].mxu0
    %v3196 = vadd.f32 0.0, %v3195
    %v3197 = vpop.f32.mrb[0].mxu0
    %3198 = vmatprep.mubr.bf16.mxu0 %v178
    %3199 = vmatmul.mubr.bf16.gmra.mrb[0].mxu0 %v177
    %v3200 = vpop.f32.mrb[0].mxu0
    %v3201 = vadd.f32 0.0, %v3200
    %v3202 = vpop.f32.mrb[0].mxu0
    %v3203 = vpop.f32.mrb[0].mxu0
    %v3204 = vadd.f32 0.0, %v3203
    %v3205 = vpop.f32.mrb[0].mxu0
    %3206 = vmatprep.mubr.bf16.mxu0 %v182
    %3207 = vmatmul.mubr.bf16.gmra.mrb[0].mxu0 %v181
    %v3208 = vpop.f32.mrb[0].mxu0
    %v3209 = vadd.f32 0.0, %v3208
    %v3210 = vpop.f32.mrb[0].mxu0
    %v3211 = vpop.f32.mrb[0].mxu0
    %v3212 = vadd.f32 0.0, %v3211
    %v3213 = vpop.f32.mrb[0].mxu0
    %3214 = vmatprep.mubr.bf16.mxu0 %v186
    %3215 = vmatmul.mubr.bf16.gmra.mrb[0].mxu0 %v185
    %v3216 = vpop.f32.mrb[0].mxu0
    %v3217 = vadd.f32 0.0, %v3216
    %v3218 = vpop.f32.mrb[0].mxu0
    %v3219 = vpop.f32.mrb[0].mxu0
    %v3220 = vadd.f32 0.0, %v3219
    %v3221 = vpop.f32.mrb[0].mxu0
    %3222 = vmatprep.mubr.bf16.mxu0 %v190
    %3223 = vmatmul.mubr.bf16.gmra.mrb[0].mxu0 %v189
    %v3224 = vpop.f32.mrb[0].mxu0
    %v3225 = vadd.f32 0.0, %v3224
    %v3226 = vpop.f32.mrb[0].mxu0
    %v3227 = vpop.f32.mrb[0].mxu0
    %v3228 = vadd.f32 0.0, %v3227
    %v3229 = vpop.f32.mrb[0].mxu0
    %3230 = vmatprep.mubr.bf16.mxu0 %v194
    %3231 = vmatmul.mubr.bf16.gmra.mrb[0].mxu0 %v193
    %v3232 = vpop.f32.mrb[0].mxu0
    %v3233 = vadd.f32 0.0, %v3232
    %v3234 = vpop.f32.mrb[0].mxu0
    %v3235 = vpop.f32.mrb[0].mxu0
    %v3236 = vadd.f32 0.0, %v3235
    %v3237 = vpop.f32.mrb[0].mxu0
    %3238 = vmatprep.mubr.bf16.mxu0 %v198
    %3239 = vmatmul.mubr.bf16.gmra.mrb[0].mxu0 %v197
    %v3240 = vpop.f32.mrb[0].mxu0
    %v3241 = vadd.f32 0.0, %v3240
    %v3242 = vpop.f32.mrb[0].mxu0
    %v3243 = vpop.f32.mrb[0].mxu0
    %v3244 = vadd.f32 0.0, %v3243
    %v3245 = vpop.f32.mrb[0].mxu0
    %3246 = vmatprep.mubr.bf16.mxu0 %v202
    %3247 = vmatmul.mubr.bf16.gmra.mrb[0].mxu0 %v201
    %v3248 = vpop.f32.mrb[0].mxu0
    %v3249 = vadd.f32 0.0, %v3248
    %v3250 = vpop.f32.mrb[0].mxu0
    %v3251 = vpop.f32.mrb[0].mxu0
    %v3252 = vadd.f32 0.0, %v3251
    %v3253 = vpop.f32.mrb[0].mxu0
    %3254 = vmatprep.mubr.bf16.mxu0 %v206
    %3255 = vmatmul.mubr.bf16.gmra.mrb[0].mxu0 %v205
    %v3256 = vpop.f32.mrb[0].mxu0
    %v3257 = vadd.f32 0.0, %v3256
    %v3258 = vpop.f32.mrb[0].mxu0
    %v3259 = vpop.f32.mrb[0].mxu0
    %v3260 = vadd.f32 0.0, %v3259
    %v3261 = vpop.f32.mrb[0].mxu0
    %3262 = vmatprep.mubr.bf16.mxu0 %v210
    %3263 = vmatmul.mubr.bf16.gmra.mrb[0].mxu0 %v209
    %v3264 = vpop.f32.mrb[0].mxu0
    %v3265 = vadd.f32 0.0, %v3264
    %v3266 = vpop.f32.mrb[0].mxu0
    %v3267 = vpop.f32.mrb[0].mxu0
    %v3268 = vadd.f32 0.0, %v3267
    %v3269 = vpop.f32.mrb[0].mxu0
    %3270 = vmatprep.mubr.bf16.mxu0 %v214
    %3271 = vmatmul.mubr.bf16.gmra.mrb[0].mxu0 %v213
    %v3272 = vpop.f32.mrb[0].mxu0
    %v3273 = vadd.f32 0.0, %v3272
    %v3274 = vpop.f32.mrb[0].mxu0
    %v3275 = vpop.f32.mrb[0].mxu0
    %v3276 = vadd.f32 0.0, %v3275
    %v3277 = vpop.f32.mrb[0].mxu0
    %3278 = vmatprep.mubr.bf16.mxu0 %v218
    %3279 = vmatmul.mubr.bf16.gmra.mrb[0].mxu0 %v217
    %v3280 = vpop.f32.mrb[0].mxu0
    %v3281 = vadd.f32 0.0, %v3280
    %v3282 = vpop.f32.mrb[0].mxu0
    %v3283 = vpop.f32.mrb[0].mxu0
    %v3284 = vadd.f32 0.0, %v3283
    %v3285 = vpop.f32.mrb[0].mxu0
    %3286 = vmatprep.mubr.bf16.mxu0 %v222
    %3287 = vmatmul.mubr.bf16.gmra.mrb[0].mxu0 %v221
    %v3288 = vpop.f32.mrb[0].mxu0
    %v3289 = vadd.f32 0.0, %v3288
    %v3290 = vpop.f32.mrb[0].mxu0
    %v3291 = vpop.f32.mrb[0].mxu0
    %v3292 = vadd.f32 0.0, %v3291
    %v3293 = vpop.f32.mrb[0].mxu0
    %3294 = vmatprep.mubr.bf16.mxu0 %v226
    %3295 = vmatmul.mubr.bf16.gmra.mrb[0].mxu0 %v225
    %v3296 = vpop.f32.mrb[0].mxu0
    %v3297 = vadd.f32 0.0, %v3296
    %v3298 = vpop.f32.mrb[0].mxu0
    %v3299 = vpop.f32.mrb[0].mxu0
    %v3300 = vadd.f32 0.0, %v3299
    %v3301 = vpop.f32.mrb[0].mxu0
    %3302 = vmatprep.mubr.bf16.mxu0 %v230
    %3303 = vmatmul.mubr.bf16.gmra.mrb[0].mxu0 %v229
    %v3304 = vpop.f32.mrb[0].mxu0
    %v3305 = vadd.f32 0.0, %v3304
    %v3306 = vpop.f32.mrb[0].mxu0
    %v3307 = vpop.f32.mrb[0].mxu0
    %v3308 = vadd.f32 0.0, %v3307
    %v3309 = vpop.f32.mrb[0].mxu0
    %3310 = vmatprep.mubr.bf16.mxu0 %v234
    %3311 = vmatmul.mubr.bf16.gmra.mrb[0].mxu0 %v233
    %v3312 = vpop.f32.mrb[0].mxu0
    %v3313 = vadd.f32 0.0, %v3312
    %v3314 = vpop.f32.mrb[0].mxu0
    %v3315 = vpop.f32.mrb[0].mxu0
    %v3316 = vadd.f32 0.0, %v3315
    %v3317 = vpop.f32.mrb[0].mxu0
    %3318 = vmatprep.mubr.bf16.mxu0 %v238
    %3319 = vmatmul.mubr.bf16.gmra.mrb[0].mxu0 %v237
    %v3320 = vpop.f32.mrb[0].mxu0
    %v3321 = vadd.f32 0.0, %v3320
    %v3322 = vpop.f32.mrb[0].mxu0
    %v3323 = vpop.f32.mrb[0].mxu0
    %v3324 = vadd.f32 0.0, %v3323
    %v3325 = vpop.f32.mrb[0].mxu0
    %3326 = vmatprep.mubr.bf16.mxu0 %v242
    %3327 = vmatmul.mubr.bf16.gmra.mrb[0].mxu0 %v241
    %v3328 = vpop.f32.mrb[0].mxu0
    %v3329 = vadd.f32 0.0, %v3328
    %v3330 = vpop.f32.mrb[0].mxu0
    %v3331 = vpop.f32.mrb[0].mxu0
    %v3332 = vadd.f32 0.0, %v3331
    %v3333 = vpop.f32.mrb[0].mxu0
    %3334 = vmatprep.mubr.bf16.mxu0 %v246
    %3335 = vmatmul.mubr.bf16.gmra.mrb[0].mxu0 %v245
    %v3336 = vpop.f32.mrb[0].mxu0
    %v3337 = vadd.f32 0.0, %v3336
    %v3338 = vpop.f32.mrb[0].mxu0
    %v3339 = vpop.f32.mrb[0].mxu0
    %v3340 = vadd.f32 0.0, %v3339
    %v3341 = vpop.f32.mrb[0].mxu0
    %3342 = vmatprep.mubr.bf16.mxu0 %v250
    %3343 = vmatmul.mubr.bf16.gmra.mrb[0].mxu0 %v249
    %v3344 = vpop.f32.mrb[0].mxu0
    %v3345 = vadd.f32 0.0, %v3344
    %v3346 = vpop.f32.mrb[0].mxu0
    %v3347 = vpop.f32.mrb[0].mxu0
    %v3348 = vadd.f32 0.0, %v3347
    %v3349 = vpop.f32.mrb[0].mxu0
    %3350 = vmatprep.mubr.bf16.mxu0 %v254
    %3351 = vmatmul.mubr.bf16.gmra.mrb[0].mxu0 %v253
    %v3352 = vpop.f32.mrb[0].mxu0
    %v3353 = vadd.f32 0.0, %v3352
    %v3354 = vpop.f32.mrb[0].mxu0
    %v3355 = vpop.f32.mrb[0].mxu0
    %v3356 = vadd.f32 0.0, %v3355
    %v3357 = vpop.f32.mrb[0].mxu0
    %3358 = vmatprep.mubr.bf16.mxu0 %v258
    %3359 = vmatmul.mubr.bf16.gmra.mrb[0].mxu0 %v257
    %v3360 = vpop.f32.mrb[0].mxu0
    %v3361 = vadd.f32 0.0, %v3360
    %v3362 = vpop.f32.mrb[0].mxu0
    %v3363 = vpop.f32.mrb[0].mxu0
    %v3364 = vadd.f32 0.0, %v3363
    %v3365 = vpop.f32.mrb[0].mxu0
    %3366 = vmatprep.mubr.bf16.mxu0 %v262
    %3367 = vmatmul.mubr.bf16.gmra.mrb[0].mxu0 %v261
    %v3368 = vpop.f32.mrb[0].mxu0
    %v3369 = vadd.f32 0.0, %v3368
    %v3370 = vpop.f32.mrb[0].mxu0
    %v3371 = vpop.f32.mrb[0].mxu0
    %v3372 = vadd.f32 0.0, %v3371
    %v3373 = vpop.f32.mrb[0].mxu0
    %3374 = vmatprep.mubr.bf16.mxu0 %v266
    %3375 = vmatmul.mubr.bf16.gmra.mrb[0].mxu0 %v265
    %v3376 = vpop.f32.mrb[0].mxu0
    %v3377 = vadd.f32 0.0, %v3376
    %v3378 = vpop.f32.mrb[0].mxu0
    %v3379 = vpop.f32.mrb[0].mxu0
    %v3380 = vadd.f32 0.0, %v3379
    %v3381 = vpop.f32.mrb[0].mxu0
    %3382 = vmatprep.mubr.bf16.mxu0 %v270
    %3383 = vmatmul.mubr.bf16.gmra.mrb[0].mxu0 %v269
    %v3384 = vpop.f32.mrb[0].mxu0
    %v3385 = vadd.f32 0.0, %v3384
    %v3386 = vpop.f32.mrb[0].mxu0
    %v3387 = vpop.f32.mrb[0].mxu0
    %v3388 = vadd.f32 0.0, %v3387
    %v3389 = vpop.f32.mrb[0].mxu0
    %3390 = vdwg.mxu0
    %3391 = vmatprep.subr.bf16.mxu0 0
    %3392 = vmatpush1.bf16.msra.mxu0 %v3086
    %3393 = vmatprep.subr.bf16.mxu0 0
    %3394 = vmatpush1.bf16.msra.mxu0 %v3087
    %3395 = vmatprep.subr.bf16.mxu0 0
    %3396 = vmatpush1.bf16.msra.mxu0 %v3088
    %3397 = vmatprep.subr.bf16.mxu0 0
    %3398 = vmatpush1.bf16.msra.mxu0 %v3089
    %3399 = vmatprep.subr.bf16.mxu0 0
    %3400 = vmatpush1.bf16.msra.mxu0 %v3090
    %3401 = vmatprep.subr.bf16.mxu0 0
    %3402 = vmatpush1.bf16.msra.mxu0 %v3091
    %3403 = vmatprep.subr.bf16.mxu0 0
    %3404 = vmatpush1.bf16.msra.mxu0 %v3092
    %3405 = vmatprep.subr.bf16.mxu0 0
    %3406 = vmatpush1.bf16.msra.mxu0 %v3093
    %3407 = vmatprep.subr.bf16.mxu0 0
    %3408 = vmatpush1.bf16.msra.mxu0 %v3094
    %3409 = vmatprep.subr.bf16.mxu0 0
    %3410 = vmatpush1.bf16.msra.mxu0 %v3095
    %3411 = vmatprep.subr.bf16.mxu0 0
    %3412 = vmatpush1.bf16.msra.mxu0 %v3096
    %3413 = vmatprep.subr.bf16.mxu0 0
    %3414 = vmatpush1.bf16.msra.mxu0 %v3097
    %3415 = vmatprep.subr.bf16.mxu0 0
    %3416 = vmatpush1.bf16.msra.mxu0 %v3098
    %3417 = vmatprep.subr.bf16.mxu0 0
    %3418 = vmatpush1.bf16.msra.mxu0 %v3099
    %3419 = vmatprep.subr.bf16.mxu0 0
    %3420 = vmatpush1.bf16.msra.mxu0 %v3100
    %3421 = vmatprep.subr.bf16.mxu0 0
    %3422 = vmatpush1.bf16.msra.mxu0 %v3101
    %3423 = vmatprep.mubr.bf16.mxu0 %v148
    %3424 = vmatmul.mubr.bf16.gmra.mrb[0].mxu0 %v147
    %v3425 = vpop.f32.mrb[0].mxu0
    %v3426 = vadd.f32 %v3137, %v3425
    %v3427 = vpop.f32.mrb[0].mxu0
    %v3428 = vpop.f32.mrb[0].mxu0
    %v3429 = vadd.f32 %v3140, %v3428
    %v3430 = vpop.f32.mrb[0].mxu0
    %3431 = vmatprep.mubr.bf16.mxu0 %v152
    %3432 = vmatmul.mubr.bf16.gmra.mrb[0].mxu0 %v151
    %v3433 = vpop.f32.mrb[0].mxu0
    %v3434 = vadd.f32 %v3145, %v3433
    %v3435 = vpop.f32.mrb[0].mxu0
    %v3436 = vpop.f32.mrb[0].mxu0
    %v3437 = vadd.f32 %v3148, %v3436
    %v3438 = vpop.f32.mrb[0].mxu0
    %3439 = vmatprep.mubr.bf16.mxu0 %v156
    %3440 = vmatmul.mubr.bf16.gmra.mrb[0].mxu0 %v155
    %v3441 = vpop.f32.mrb[0].mxu0
    %v3442 = vadd.f32 %v3153, %v3441
    %v3443 = vpop.f32.mrb[0].mxu0
    %v3444 = vpop.f32.mrb[0].mxu0
    %v3445 = vadd.f32 %v3156, %v3444
    %v3446 = vpop.f32.mrb[0].mxu0
    %3447 = vmatprep.mubr.bf16.mxu0 %v160
    %3448 = vmatmul.mubr.bf16.gmra.mrb[0].mxu0 %v159
    %v3449 = vpop.f32.mrb[0].mxu0
    %v3450 = vadd.f32 %v3161, %v3449
    %v3451 = vpop.f32.mrb[0].mxu0
    %v3452 = vpop.f32.mrb[0].mxu0
    %v3453 = vadd.f32 %v3164, %v3452
    %v3454 = vpop.f32.mrb[0].mxu0
    %3455 = vmatprep.mubr.bf16.mxu0 %v164
    %3456 = vmatmul.mubr.bf16.gmra.mrb[0].mxu0 %v163
    %v3457 = vpop.f32.mrb[0].mxu0
    %v3458 = vadd.f32 %v3169, %v3457
    %v3459 = vpop.f32.mrb[0].mxu0
    %v3460 = vpop.f32.mrb[0].mxu0
    %v3461 = vadd.f32 %v3172, %v3460
    %v3462 = vpop.f32.mrb[0].mxu0
    %3463 = vmatprep.mubr.bf16.mxu0 %v168
    %3464 = vmatmul.mubr.bf16.gmra.mrb[0].mxu0 %v167
    %v3465 = vpop.f32.mrb[0].mxu0
    %v3466 = vadd.f32 %v3177, %v3465
    %v3467 = vpop.f32.mrb[0].mxu0
    %v3468 = vpop.f32.mrb[0].mxu0
    %v3469 = vadd.f32 %v3180, %v3468
    %v3470 = vpop.f32.mrb[0].mxu0
    %3471 = vmatprep.mubr.bf16.mxu0 %v172
    %3472 = vmatmul.mubr.bf16.gmra.mrb[0].mxu0 %v171
    %v3473 = vpop.f32.mrb[0].mxu0
    %v3474 = vadd.f32 %v3185, %v3473
    %v3475 = vpop.f32.mrb[0].mxu0
    %v3476 = vpop.f32.mrb[0].mxu0
    %v3477 = vadd.f32 %v3188, %v3476
    %v3478 = vpop.f32.mrb[0].mxu0
    %3479 = vmatprep.mubr.bf16.mxu0 %v176
    %3480 = vmatmul.mubr.bf16.gmra.mrb[0].mxu0 %v175
    %v3481 = vpop.f32.mrb[0].mxu0
    %v3482 = vadd.f32 %v3193, %v3481
    %v3483 = vpop.f32.mrb[0].mxu0
    %v3484 = vpop.f32.mrb[0].mxu0
    %v3485 = vadd.f32 %v3196, %v3484
    %v3486 = vpop.f32.mrb[0].mxu0
    %3487 = vmatprep.mubr.bf16.mxu0 %v180
    %3488 = vmatmul.mubr.bf16.gmra.mrb[0].mxu0 %v179
    %v3489 = vpop.f32.mrb[0].mxu0
    %v3490 = vadd.f32 %v3201, %v3489
    %v3491 = vpop.f32.mrb[0].mxu0
    %v3492 = vpop.f32.mrb[0].mxu0
    %v3493 = vadd.f32 %v3204, %v3492
    %v3494 = vpop.f32.mrb[0].mxu0
    %3495 = vmatprep.mubr.bf16.mxu0 %v184
    %3496 = vmatmul.mubr.bf16.gmra.mrb[0].mxu0 %v183
    %v3497 = vpop.f32.mrb[0].mxu0
    %v3498 = vadd.f32 %v3209, %v3497
    %v3499 = vpop.f32.mrb[0].mxu0
    %v3500 = vpop.f32.mrb[0].mxu0
    %v3501 = vadd.f32 %v3212, %v3500
    %v3502 = vpop.f32.mrb[0].mxu0
    %3503 = vmatprep.mubr.bf16.mxu0 %v188
    %3504 = vmatmul.mubr.bf16.gmra.mrb[0].mxu0 %v187
    %v3505 = vpop.f32.mrb[0].mxu0
    %v3506 = vadd.f32 %v3217, %v3505
    %v3507 = vpop.f32.mrb[0].mxu0
    %v3508 = vpop.f32.mrb[0].mxu0
    %v3509 = vadd.f32 %v3220, %v3508
    %v3510 = vpop.f32.mrb[0].mxu0
    %3511 = vmatprep.mubr.bf16.mxu0 %v192
    %3512 = vmatmul.mubr.bf16.gmra.mrb[0].mxu0 %v191
    %v3513 = vpop.f32.mrb[0].mxu0
    %v3514 = vadd.f32 %v3225, %v3513
    %v3515 = vpop.f32.mrb[0].mxu0
    %v3516 = vpop.f32.mrb[0].mxu0
    %v3517 = vadd.f32 %v3228, %v3516
    %v3518 = vpop.f32.mrb[0].mxu0
    %3519 = vmatprep.mubr.bf16.mxu0 %v196
    %3520 = vmatmul.mubr.bf16.gmra.mrb[0].mxu0 %v195
    %v3521 = vpop.f32.mrb[0].mxu0
    %v3522 = vadd.f32 %v3233, %v3521
    %v3523 = vpop.f32.mrb[0].mxu0
    %v3524 = vpop.f32.mrb[0].mxu0
    %v3525 = vadd.f32 %v3236, %v3524
    %v3526 = vpop.f32.mrb[0].mxu0
    %3527 = vmatprep.mubr.bf16.mxu0 %v200
    %3528 = vmatmul.mubr.bf16.gmra.mrb[0].mxu0 %v199
    %v3529 = vpop.f32.mrb[0].mxu0
    %v3530 = vadd.f32 %v3241, %v3529
    %v3531 = vpop.f32.mrb[0].mxu0
    %v3532 = vpop.f32.mrb[0].mxu0
    %v3533 = vadd.f32 %v3244, %v3532
    %v3534 = vpop.f32.mrb[0].mxu0
    %3535 = vmatprep.mubr.bf16.mxu0 %v204
    %3536 = vmatmul.mubr.bf16.gmra.mrb[0].mxu0 %v203
    %v3537 = vpop.f32.mrb[0].mxu0
    %v3538 = vadd.f32 %v3249, %v3537
    %v3539 = vpop.f32.mrb[0].mxu0
    %v3540 = vpop.f32.mrb[0].mxu0
    %v3541 = vadd.f32 %v3252, %v3540
    %v3542 = vpop.f32.mrb[0].mxu0
    %3543 = vmatprep.mubr.bf16.mxu0 %v208
    %3544 = vmatmul.mubr.bf16.gmra.mrb[0].mxu0 %v207
    %v3545 = vpop.f32.mrb[0].mxu0
    %v3546 = vadd.f32 %v3257, %v3545
    %v3547 = vpop.f32.mrb[0].mxu0
    %v3548 = vpop.f32.mrb[0].mxu0
    %v3549 = vadd.f32 %v3260, %v3548
    %v3550 = vpop.f32.mrb[0].mxu0
    %3551 = vmatprep.mubr.bf16.mxu0 %v212
    %3552 = vmatmul.mubr.bf16.gmra.mrb[0].mxu0 %v211
    %v3553 = vpop.f32.mrb[0].mxu0
    %v3554 = vadd.f32 %v3265, %v3553
    %v3555 = vpop.f32.mrb[0].mxu0
    %v3556 = vpop.f32.mrb[0].mxu0
    %v3557 = vadd.f32 %v3268, %v3556
    %v3558 = vpop.f32.mrb[0].mxu0
    %3559 = vmatprep.mubr.bf16.mxu0 %v216
    %3560 = vmatmul.mubr.bf16.gmra.mrb[0].mxu0 %v215
    %v3561 = vpop.f32.mrb[0].mxu0
    %v3562 = vadd.f32 %v3273, %v3561
    %v3563 = vpop.f32.mrb[0].mxu0
    %v3564 = vpop.f32.mrb[0].mxu0
    %v3565 = vadd.f32 %v3276, %v3564
    %v3566 = vpop.f32.mrb[0].mxu0
    %3567 = vmatprep.mubr.bf16.mxu0 %v220
    %3568 = vmatmul.mubr.bf16.gmra.mrb[0].mxu0 %v219
    %v3569 = vpop.f32.mrb[0].mxu0
    %v3570 = vadd.f32 %v3281, %v3569
    %v3571 = vpop.f32.mrb[0].mxu0
    %v3572 = vpop.f32.mrb[0].mxu0
    %v3573 = vadd.f32 %v3284, %v3572
    %v3574 = vpop.f32.mrb[0].mxu0
    %3575 = vmatprep.mubr.bf16.mxu0 %v224
    %3576 = vmatmul.mubr.bf16.gmra.mrb[0].mxu0 %v223
    %v3577 = vpop.f32.mrb[0].mxu0
    %v3578 = vadd.f32 %v3289, %v3577
    %v3579 = vpop.f32.mrb[0].mxu0
    %v3580 = vpop.f32.mrb[0].mxu0
    %v3581 = vadd.f32 %v3292, %v3580
    %v3582 = vpop.f32.mrb[0].mxu0
    %3583 = vmatprep.mubr.bf16.mxu0 %v228
    %3584 = vmatmul.mubr.bf16.gmra.mrb[0].mxu0 %v227
    %v3585 = vpop.f32.mrb[0].mxu0
    %v3586 = vadd.f32 %v3297, %v3585
    %v3587 = vpop.f32.mrb[0].mxu0
    %v3588 = vpop.f32.mrb[0].mxu0
    %v3589 = vadd.f32 %v3300, %v3588
    %v3590 = vpop.f32.mrb[0].mxu0
    %3591 = vmatprep.mubr.bf16.mxu0 %v232
    %3592 = vmatmul.mubr.bf16.gmra.mrb[0].mxu0 %v231
    %v3593 = vpop.f32.mrb[0].mxu0
    %v3594 = vadd.f32 %v3305, %v3593
    %v3595 = vpop.f32.mrb[0].mxu0
    %v3596 = vpop.f32.mrb[0].mxu0
    %v3597 = vadd.f32 %v3308, %v3596
    %v3598 = vpop.f32.mrb[0].mxu0
    %3599 = vmatprep.mubr.bf16.mxu0 %v236
    %3600 = vmatmul.mubr.bf16.gmra.mrb[0].mxu0 %v235
    %v3601 = vpop.f32.mrb[0].mxu0
    %v3602 = vadd.f32 %v3313, %v3601
    %v3603 = vpop.f32.mrb[0].mxu0
    %v3604 = vpop.f32.mrb[0].mxu0
    %v3605 = vadd.f32 %v3316, %v3604
    %v3606 = vpop.f32.mrb[0].mxu0
    %3607 = vmatprep.mubr.bf16.mxu0 %v240
    %3608 = vmatmul.mubr.bf16.gmra.mrb[0].mxu0 %v239
    %v3609 = vpop.f32.mrb[0].mxu0
    %v3610 = vadd.f32 %v3321, %v3609
    %v3611 = vpop.f32.mrb[0].mxu0
    %v3612 = vpop.f32.mrb[0].mxu0
    %v3613 = vadd.f32 %v3324, %v3612
    %v3614 = vpop.f32.mrb[0].mxu0
    %3615 = vmatprep.mubr.bf16.mxu0 %v244
    %3616 = vmatmul.mubr.bf16.gmra.mrb[0].mxu0 %v243
    %v3617 = vpop.f32.mrb[0].mxu0
    %v3618 = vadd.f32 %v3329, %v3617
    %v3619 = vpop.f32.mrb[0].mxu0
    %v3620 = vpop.f32.mrb[0].mxu0
    %v3621 = vadd.f32 %v3332, %v3620
    %v3622 = vpop.f32.mrb[0].mxu0
    %3623 = vmatprep.mubr.bf16.mxu0 %v248
    %3624 = vmatmul.mubr.bf16.gmra.mrb[0].mxu0 %v247
    %v3625 = vpop.f32.mrb[0].mxu0
    %v3626 = vadd.f32 %v3337, %v3625
    %v3627 = vpop.f32.mrb[0].mxu0
    %v3628 = vpop.f32.mrb[0].mxu0
    %v3629 = vadd.f32 %v3340, %v3628
    %v3630 = vpop.f32.mrb[0].mxu0
    %3631 = vmatprep.mubr.bf16.mxu0 %v252
    %3632 = vmatmul.mubr.bf16.gmra.mrb[0].mxu0 %v251
    %v3633 = vpop.f32.mrb[0].mxu0
    %v3634 = vadd.f32 %v3345, %v3633
    %v3635 = vpop.f32.mrb[0].mxu0
    %v3636 = vpop.f32.mrb[0].mxu0
    %v3637 = vadd.f32 %v3348, %v3636
    %v3638 = vpop.f32.mrb[0].mxu0
    %3639 = vmatprep.mubr.bf16.mxu0 %v256
    %3640 = vmatmul.mubr.bf16.gmra.mrb[0].mxu0 %v255
    %v3641 = vpop.f32.mrb[0].mxu0
    %v3642 = vadd.f32 %v3353, %v3641
    %v3643 = vpop.f32.mrb[0].mxu0
    %v3644 = vpop.f32.mrb[0].mxu0
    %v3645 = vadd.f32 %v3356, %v3644
    %v3646 = vpop.f32.mrb[0].mxu0
    %3647 = vmatprep.mubr.bf16.mxu0 %v260
    %3648 = vmatmul.mubr.bf16.gmra.mrb[0].mxu0 %v259
    %v3649 = vpop.f32.mrb[0].mxu0
    %v3650 = vadd.f32 %v3361, %v3649
    %v3651 = vpop.f32.mrb[0].mxu0
    %v3652 = vpop.f32.mrb[0].mxu0
    %v3653 = vadd.f32 %v3364, %v3652
    %v3654 = vpop.f32.mrb[0].mxu0
    %3655 = vmatprep.mubr.bf16.mxu0 %v264
    %3656 = vmatmul.mubr.bf16.gmra.mrb[0].mxu0 %v263
    %v3657 = vpop.f32.mrb[0].mxu0
    %v3658 = vadd.f32 %v3369, %v3657
    %v3659 = vpop.f32.mrb[0].mxu0
    %v3660 = vpop.f32.mrb[0].mxu0
    %v3661 = vadd.f32 %v3372, %v3660
    %v3662 = vpop.f32.mrb[0].mxu0
    %3663 = vmatprep.mubr.bf16.mxu0 %v268
    %3664 = vmatmul.mubr.bf16.gmra.mrb[0].mxu0 %v267
    %v3665 = vpop.f32.mrb[0].mxu0
    %v3666 = vadd.f32 %v3377, %v3665
    %v3667 = vpop.f32.mrb[0].mxu0
    %v3668 = vpop.f32.mrb[0].mxu0
    %v3669 = vadd.f32 %v3380, %v3668
    %v3670 = vpop.f32.mrb[0].mxu0
    %3671 = vmatprep.mubr.bf16.mxu0 %v272
    %3672 = vmatmul.mubr.bf16.gmra.mrb[0].mxu0 %v271
    %v3673 = vpop.f32.mrb[0].mxu0
    %v3674 = vadd.f32 %v3385, %v3673
    %v3675 = vpop.f32.mrb[0].mxu0
    %v3676 = vpop.f32.mrb[0].mxu0
    %v3677 = vadd.f32 %v3388, %v3676
    %v3678 = vpop.f32.mrb[0].mxu0
    %3679 = vdwg.mxu0
    %v3680 = vmul.f32 %v1431, %v3426
    %v3681 = vmul.f32 %v1436, %v3429
    %v3682 = vmul.f32 %v1441, %v3434
    %v3683 = vmul.f32 %v1446, %v3437
    %v3684 = vmul.f32 %v1451, %v3442
    %v3685 = vmul.f32 %v1456, %v3445
    %v3686 = vmul.f32 %v1461, %v3450
    %v3687 = vmul.f32 %v1466, %v3453
    %v3688 = vmul.f32 %v1471, %v3458
    %v3689 = vmul.f32 %v1476, %v3461
    %v3690 = vmul.f32 %v1481, %v3466
    %v3691 = vmul.f32 %v1486, %v3469
    %v3692 = vmul.f32 %v1491, %v3474
    %v3693 = vmul.f32 %v1496, %v3477
    %v3694 = vmul.f32 %v1501, %v3482
    %v3695 = vmul.f32 %v1506, %v3485
    %v3696 = vmul.f32 %v1511, %v3490
    %v3697 = vmul.f32 %v1516, %v3493
    %v3698 = vmul.f32 %v1521, %v3498
    %v3699 = vmul.f32 %v1526, %v3501
    %v3700 = vmul.f32 %v1531, %v3506
    %v3701 = vmul.f32 %v1536, %v3509
    %v3702 = vmul.f32 %v1541, %v3514
    %v3703 = vmul.f32 %v1546, %v3517
    %v3704 = vmul.f32 %v1551, %v3522
    %v3705 = vmul.f32 %v1556, %v3525
    %v3706 = vmul.f32 %v1561, %v3530
    %v3707 = vmul.f32 %v1566, %v3533
    %v3708 = vmul.f32 %v1571, %v3538
    %v3709 = vmul.f32 %v1576, %v3541
    %v3710 = vmul.f32 %v1581, %v3546
    %v3711 = vmul.f32 %v1586, %v3549
    %v3712 = vmul.f32 %v1591, %v3554
    %v3713 = vmul.f32 %v1596, %v3557
    %v3714 = vmul.f32 %v1601, %v3562
    %v3715 = vmul.f32 %v1606, %v3565
    %v3716 = vmul.f32 %v1611, %v3570
    %v3717 = vmul.f32 %v1616, %v3573
    %v3718 = vmul.f32 %v1621, %v3578
    %v3719 = vmul.f32 %v1626, %v3581
    %v3720 = vmul.f32 %v1631, %v3586
    %v3721 = vmul.f32 %v1636, %v3589
    %v3722 = vmul.f32 %v1641, %v3594
    %v3723 = vmul.f32 %v1646, %v3597
    %v3724 = vmul.f32 %v1651, %v3602
    %v3725 = vmul.f32 %v1656, %v3605
    %v3726 = vmul.f32 %v1661, %v3610
    %v3727 = vmul.f32 %v1666, %v3613
    %v3728 = vmul.f32 %v1671, %v3618
    %v3729 = vmul.f32 %v1676, %v3621
    %v3730 = vmul.f32 %v1681, %v3626
    %v3731 = vmul.f32 %v1686, %v3629
    %v3732 = vmul.f32 %v1691, %v3634
    %v3733 = vmul.f32 %v1696, %v3637
    %v3734 = vmul.f32 %v1701, %v3642
    %v3735 = vmul.f32 %v1706, %v3645
    %v3736 = vmul.f32 %v1711, %v3650
    %v3737 = vmul.f32 %v1716, %v3653
    %v3738 = vmul.f32 %v1721, %v3658
    %v3739 = vmul.f32 %v1726, %v3661
    %v3740 = vmul.f32 %v1731, %v3666
    %v3741 = vmul.f32 %v1736, %v3669
    %v3742 = vmul.f32 %v1741, %v3674
    %v3743 = vmul.f32 %v1746, %v3677
    %v3744 = vld [vmem:[%s5] sm:$0x1]
    %v3746 = vlaneseq
    %v3747 = vshrl.u32 %v3746, 7
    %v3748 = vsub.s32 0, %v3747
    %v3749 = vrot.slane %v3744, %v3748
    %v3751 = vadd.f32 %v3680, %v3749
    %v3752 = vadd.f32 %v3681, %v3749
    %v3753 = vadd.f32 %v3682, %v3749
    %v3754 = vadd.f32 %v3683, %v3749
    %v3755 = vadd.f32 %v3684, %v3749
    %v3756 = vadd.f32 %v3685, %v3749
    %v3757 = vadd.f32 %v3686, %v3749
    %v3758 = vadd.f32 %v3687, %v3749
    %v3759 = vadd.f32 %v3688, %v3749
    %v3760 = vadd.f32 %v3689, %v3749
    %v3761 = vadd.f32 %v3690, %v3749
    %v3762 = vadd.f32 %v3691, %v3749
    %v3763 = vadd.f32 %v3692, %v3749
    %v3764 = vadd.f32 %v3693, %v3749
    %v3765 = vadd.f32 %v3694, %v3749
    %v3766 = vadd.f32 %v3695, %v3749
    %v3767 = vadd.f32 %v3696, %v3749
    %v3768 = vadd.f32 %v3697, %v3749
    %v3769 = vadd.f32 %v3698, %v3749
    %v3770 = vadd.f32 %v3699, %v3749
    %v3771 = vadd.f32 %v3700, %v3749
    %v3772 = vadd.f32 %v3701, %v3749
    %v3773 = vadd.f32 %v3702, %v3749
    %v3774 = vadd.f32 %v3703, %v3749
    %v3775 = vadd.f32 %v3704, %v3749
    %v3776 = vadd.f32 %v3705, %v3749
    %v3777 = vadd.f32 %v3706, %v3749
    %v3778 = vadd.f32 %v3707, %v3749
    %v3779 = vadd.f32 %v3708, %v3749
    %v3780 = vadd.f32 %v3709, %v3749
    %v3781 = vadd.f32 %v3710, %v3749
    %v3782 = vadd.f32 %v3711, %v3749
    %v3783 = vadd.f32 %v3712, %v3749
    %v3784 = vadd.f32 %v3713, %v3749
    %v3785 = vadd.f32 %v3714, %v3749
    %v3786 = vadd.f32 %v3715, %v3749
    %v3787 = vadd.f32 %v3716, %v3749
    %v3788 = vadd.f32 %v3717, %v3749
    %v3789 = vadd.f32 %v3718, %v3749
    %v3790 = vadd.f32 %v3719, %v3749
    %v3791 = vadd.f32 %v3720, %v3749
    %v3792 = vadd.f32 %v3721, %v3749
    %v3793 = vadd.f32 %v3722, %v3749
    %v3794 = vadd.f32 %v3723, %v3749
    %v3795 = vadd.f32 %v3724, %v3749
    %v3796 = vadd.f32 %v3725, %v3749
    %v3797 = vadd.f32 %v3726, %v3749
    %v3798 = vadd.f32 %v3727, %v3749
    %v3799 = vadd.f32 %v3728, %v3749
    %v3800 = vadd.f32 %v3729, %v3749
    %v3801 = vadd.f32 %v3730, %v3749
    %v3802 = vadd.f32 %v3731, %v3749
    %v3803 = vadd.f32 %v3732, %v3749
    %v3804 = vadd.f32 %v3733, %v3749
    %v3805 = vadd.f32 %v3734, %v3749
    %v3806 = vadd.f32 %v3735, %v3749
    %v3807 = vadd.f32 %v3736, %v3749
    %v3808 = vadd.f32 %v3737, %v3749
    %v3809 = vadd.f32 %v3738, %v3749
    %v3810 = vadd.f32 %v3739, %v3749
    %v3811 = vadd.f32 %v3740, %v3749
    %v3812 = vadd.f32 %v3741, %v3749
    %v3813 = vadd.f32 %v3742, %v3749
    %v3814 = vadd.f32 %v3743, %v3749
    %3815 = vst [vmem:[#allocation10] sm:$0xff] %v3751
    %3816 = vst [vmem:[#allocation10 + $0x8] sm:$0xff] %v3752
    %3817 = vst [vmem:[#allocation10 + $0x10] sm:$0xff] %v3753
    %3818 = vst [vmem:[#allocation10 + $0x18] sm:$0xff] %v3754
    %3819 = vst [vmem:[#allocation10 + $0x20] sm:$0xff] %v3755
    %3820 = vst [vmem:[#allocation10 + $0x28] sm:$0xff] %v3756
    %3821 = vst [vmem:[#allocation10 + $0x30] sm:$0xff] %v3757
    %3822 = vst [vmem:[#allocation10 + $0x38] sm:$0xff] %v3758
    %3823 = vst [vmem:[#allocation10 + $0x40] sm:$0xff] %v3759
    %3824 = vst [vmem:[#allocation10 + $0x48] sm:$0xff] %v3760
    %3825 = vst [vmem:[#allocation10 + $0x50] sm:$0xff] %v3761
    %3826 = vst [vmem:[#allocation10 + $0x58] sm:$0xff] %v3762
    %3827 = vst [vmem:[#allocation10 + $0x60] sm:$0xff] %v3763
    %3828 = vst [vmem:[#allocation10 + $0x68] sm:$0xff] %v3764
    %3829 = vst [vmem:[#allocation10 + $0x70] sm:$0xff] %v3765
    %3830 = vst [vmem:[#allocation10 + $0x78] sm:$0xff] %v3766
    %3831 = vst [vmem:[#allocation10 + $0x80] sm:$0xff] %v3767
    %3832 = vst [vmem:[#allocation10 + $0x88] sm:$0xff] %v3768
    %3833 = vst [vmem:[#allocation10 + $0x90] sm:$0xff] %v3769
    %3834 = vst [vmem:[#allocation10 + $0x98] sm:$0xff] %v3770
    %3835 = vst [vmem:[#allocation10 + $0xa0] sm:$0xff] %v3771
    %3836 = vst [vmem:[#allocation10 + $0xa8] sm:$0xff] %v3772
    %3837 = vst [vmem:[#allocation10 + $0xb0] sm:$0xff] %v3773
    %3838 = vst [vmem:[#allocation10 + $0xb8] sm:$0xff] %v3774
    %3839 = vst [vmem:[#allocation10 + $0xc0] sm:$0xff] %v3775
    %3840 = vst [vmem:[#allocation10 + $0xc8] sm:$0xff] %v3776
    %3841 = vst [vmem:[#allocation10 + $0xd0] sm:$0xff] %v3777
    %3842 = vst [vmem:[#allocation10 + $0xd8] sm:$0xff] %v3778
    %3843 = vst [vmem:[#allocation10 + $0xe0] sm:$0xff] %v3779
    %3844 = vst [vmem:[#allocation10 + $0xe8] sm:$0xff] %v3780
    %3845 = vst [vmem:[#allocation10 + $0xf0] sm:$0xff] %v3781
    %3846 = vst [vmem:[#allocation10 + $0xf8] sm:$0xff] %v3782
    %3847 = vst [vmem:[#allocation10 + $0x100] sm:$0xff] %v3783
    %3848 = vst [vmem:[#allocation10 + $0x108] sm:$0xff] %v3784
    %3849 = vst [vmem:[#allocation10 + $0x110] sm:$0xff] %v3785
    %3850 = vst [vmem:[#allocation10 + $0x118] sm:$0xff] %v3786
    %3851 = vst [vmem:[#allocation10 + $0x120] sm:$0xff] %v3787
    %3852 = vst [vmem:[#allocation10 + $0x128] sm:$0xff] %v3788
    %3853 = vst [vmem:[#allocation10 + $0x130] sm:$0xff] %v3789
    %3854 = vst [vmem:[#allocation10 + $0x138] sm:$0xff] %v3790
    %3855 = vst [vmem:[#allocation10 + $0x140] sm:$0xff] %v3791
    %3856 = vst [vmem:[#allocation10 + $0x148] sm:$0xff] %v3792
    %3857 = vst [vmem:[#allocation10 + $0x150] sm:$0xff] %v3793
    %3858 = vst [vmem:[#allocation10 + $0x158] sm:$0xff] %v3794
    %3859 = vst [vmem:[#allocation10 + $0x160] sm:$0xff] %v3795
    %3860 = vst [vmem:[#allocation10 + $0x168] sm:$0xff] %v3796
    %3861 = vst [vmem:[#allocation10 + $0x170] sm:$0xff] %v3797
    %3862 = vst [vmem:[#allocation10 + $0x178] sm:$0xff] %v3798
    %3863 = vst [vmem:[#allocation10 + $0x180] sm:$0xff] %v3799
    %3864 = vst [vmem:[#allocation10 + $0x188] sm:$0xff] %v3800
    %3865 = vst [vmem:[#allocation10 + $0x190] sm:$0xff] %v3801
    %3866 = vst [vmem:[#allocation10 + $0x198] sm:$0xff] %v3802
    %3867 = vst [vmem:[#allocation10 + $0x1a0] sm:$0xff] %v3803
    %3868 = vst [vmem:[#allocation10 + $0x1a8] sm:$0xff] %v3804
    %3869 = vst [vmem:[#allocation10 + $0x1b0] sm:$0xff] %v3805
    %3870 = vst [vmem:[#allocation10 + $0x1b8] sm:$0xff] %v3806
    %3871 = vst [vmem:[#allocation10 + $0x1c0] sm:$0xff] %v3807
    %3872 = vst [vmem:[#allocation10 + $0x1c8] sm:$0xff] %v3808
    %3873 = vst [vmem:[#allocation10 + $0x1d0] sm:$0xff] %v3809
    %3874 = vst [vmem:[#allocation10 + $0x1d8] sm:$0xff] %v3810
    %3875 = vst [vmem:[#allocation10 + $0x1e0] sm:$0xff] %v3811
    %3876 = vst [vmem:[#allocation10 + $0x1e8] sm:$0xff] %v3812
    %3877 = vst [vmem:[#allocation10 + $0x1f0] sm:$0xff] %v3813
    %3878 = vst [vmem:[#allocation10 + $0x1f8] sm:$0xff] %v3814
    // Predicated region
    $region42: #{tpu_custom_call.1} parent=1 // pred_check
      _
    $region43: #{tpu_custom_call.1} parent=1 // pred_check_branch
      %3880 = sbr.rel (0) target = $region45
    $region44: #{tpu_custom_call.1} parent=1 // pred_region
      %s3882 = ssub.s32 8192, 8192
      %3883 = vsyncadd [#allocation4], %s3882
      %s3884 = sshll.u32 [#allocation10], 4
      %s3885 = int_to_ptr.vmem [resolvable:$true] %s3884
      %3890 = dma.vmem_to_hbm [thread:$0]  %s3885, 8192, %s6, [#allocation4], 128, 128, 8
    $region45: #{tpu_custom_call.1} parent=1 // pred_fallthru
      _
    // Predicated region
    $region46: #{tpu_custom_call.1} parent=1 // pred_check
      _
    $region47: #{tpu_custom_call.1} parent=1 // pred_check_branch
      %3892 = sbr.rel (0) target = $region49
    $region48: #{tpu_custom_call.1} parent=1 // pred_region
      %3893 = dma.done [#allocation4], 8192
    $region49: #{tpu_custom_call.1} parent=1 // pred_fallthru
      _
    %3894 = vsyncpa [#allocation3], 1
    %3895 = vsyncpa [#allocation6], 1
    %3896 = vsyncpa [#allocation9], 1
    %3897 = vsyncpa [#allocation4], 1

</llo_original>
